<compile_context>
chip_gen: v7x
topology: tpu7x:2x2x1
jax: 0.10.0
libtpu: 0.0.40
codegen_flags: <defaults>
</compile_context>

<pallas_src>
import jax
import jax.numpy as jnp
from jax.experimental import pallas as pl
from jax.experimental.pallas import tpu as pltpu


def _round_up(x, m):
    return (x + m - 1) // m * m


# --------------------------------------------------------------------------
# Fused kernel: chunked LSTM recurrence + encoder2decoder projections
# --------------------------------------------------------------------------
def lstm_kernel(len_ref, x_ref, wih_ref, whh_ref, b_ref,
                w2dh_ref, b2dh_ref, w2dc_ref, b2dc_ref,
                ctx_ref, h_out_ref, c_out_ref,
                h_sc, c_sc):
    tc = pl.program_id(1)                     # time-chunk index (sequential / "arbitrary")

    @pl.when(tc == 0)
    def _():                                  # re-init state when a new batch block starts
        h_sc[...] = jnp.zeros_like(h_sc)
        c_sc[...] = jnp.zeros_like(c_sc)

    Tc, Bb, E = x_ref.shape
    Hp = whh_ref.shape[0]

    # Hoisted input projection: one MXU matmul for the whole time chunk (bf16 in, f32 acc).
    x = x_ref[...].reshape(Tc * Bb, E)                                       # bf16
    gx = jnp.dot(x, wih_ref[...], preferred_element_type=jnp.float32)        # (Tc*Bb, 4*Hp) f32
    gx = gx + b_ref[...]                      # bias broadcast hoisted out of the time loop

    whh = whh_ref[...]                        # (Hp, 4*Hp) bf16, loaded once per chunk
    lens = len_ref[...]                       # (Bb, 1) int32
    t0 = tc * Tc

    h = h_sc[...]                             # (Bb, Hp) f32 state
    c = c_sc[...]

    # Fully-unrolled time loop: only the small recurrent dot is on the serial path.
    for t in range(Tc):
        g = gx[t * Bb:(t + 1) * Bb, :] + jnp.dot(
            h.astype(jnp.bfloat16), whh, preferred_element_type=jnp.float32)  # (Bb, 4*Hp)
        # PyTorch gate ordering i, f, g, o; each slice is 128-lane aligned (Hp % 128 == 0).
        i_g = jax.nn.sigmoid(g[:, 0 * Hp:1 * Hp])
        f_g = jax.nn.sigmoid(g[:, 1 * Hp:2 * Hp])
        g_g = jnp.tanh(g[:, 2 * Hp:3 * Hp])
        o_g = jax.nn.sigmoid(g[:, 3 * Hp:4 * Hp])

        c_new = f_g * c + i_g * g_g
        h_new = o_g * jnp.tanh(c_new)

        valid = (t0 + t) < lens               # (Bb, 1) bool: packed-sequence mask
        h = jnp.where(valid, h_new, h)
        c = jnp.where(valid, c_new, c)
        # ctx is batch-first inside the block: (Bb, Tc, Hp); padded steps -> 0.
        ctx_ref[:, pl.ds(t, 1), :] = jnp.where(valid, h_new, 0.0)[:, None, :]

    h_sc[...] = h
    c_sc[...] = c

    # Fused encoder2decoder projections (tiny matmuls).  Written every chunk so the resident
    # output block is always initialized; the final chunk's values are the ones written back.
    hb = h.astype(jnp.bfloat16)
    cb = c.astype(jnp.bfloat16)
    h_out_ref[...] = jnp.tanh(
        jnp.dot(hb, w2dh_ref[...], preferred_element_type=jnp.float32) + b2dh_ref[...])
    c_out_ref[...] = (
        jnp.dot(cb, w2dc_ref[...], preferred_element_type=jnp.float32) + b2dc_ref[...])


# --------------------------------------------------------------------------
# Wrapper
# --------------------------------------------------------------------------
def encoder_lstm_forward(inputs, lengths, params, *, time_chunk=8):
    B, T = inputs.shape
    emb = params["embedding"]                    # (V, E) f32
    E = emb.shape[1]
    H = params["w_hh"].shape[0]                  # enc_hidden_size
    Hd = params["w2d_h"].shape[1]                # dec_hidden_size

    Bb = 8                                       # batch rows per grid block (f32 sublanes)
    Bp = _round_up(B, Bb)
    Hp = _round_up(H, 128)                       # lane-dense hidden
    Hdp = _round_up(Hd, 128)
    Tc = time_chunk                              # multiple of 8 (ctx sublane dim)
    Tp = _round_up(T, Tc)

    # ---- pad weights to lane-dense, gate-blocked layouts; bf16 MXU operands ----
    def pad_gate_cols(w):                        # (rows, 4*H) -> (rows, 4*Hp), gate-blocked
        r = w.shape[0]
        return jnp.pad(w.reshape(r, 4, H), ((0, 0), (0, 0), (0, Hp - H))).reshape(r, 4 * Hp)

    wih = pad_gate_cols(params["w_ih"]).astype(jnp.bfloat16)                       # (E, 4*Hp)
    whh = jnp.pad(pad_gate_cols(params["w_hh"]),
                  ((0, Hp - H), (0, 0))).astype(jnp.bfloat16)                      # (Hp, 4*Hp)
    bias = jnp.pad(params["b"].reshape(4, H), ((0, 0), (0, Hp - H))).reshape(1, 4 * Hp)
    w2dh = jnp.pad(params["w2d_h"], ((0, Hp - H), (0, Hdp - Hd))).astype(jnp.bfloat16)
    w2dc = jnp.pad(params["w2d_c"], ((0, Hp - H), (0, Hdp - Hd))).astype(jnp.bfloat16)
    b2dh = jnp.pad(params["b2d_h"].reshape(1, Hd), ((0, 0), (0, Hdp - Hd)))
    b2dc = jnp.pad(params["b2d_c"].reshape(1, Hd), ((0, 0), (0, Hdp - Hd)))

    # ---- embedding gather: time-major directly from the table (no transpose pass) ----
    # Padded batch rows / time steps are harmless: their lengths are 0 so the kernel masks them.
    ids = jnp.pad(inputs.astype(jnp.int32), ((0, Bp - B), (0, Tp - T)))
    x_tm = jnp.take(emb, ids.T, axis=0).astype(jnp.bfloat16)                       # (Tp, Bp, E)
    lens = jnp.pad(lengths.astype(jnp.int32), (0, Bp - B)).reshape(Bp, 1)

    nb, ntc = Bp // Bb, Tp // Tc

    ctx_p, h_p, c_p = pl.pallas_call(
        lstm_kernel,
        out_shape=(
            jax.ShapeDtypeStruct((Bp, Tp, Hp), jnp.float32),   # ctx, batch-first
            jax.ShapeDtypeStruct((Bp, Hdp), jnp.float32),      # h (decoder init)
            jax.ShapeDtypeStruct((Bp, Hdp), jnp.float32),      # c (decoder init)
        ),
        grid_spec=pltpu.PrefetchScalarGridSpec(
            num_scalar_prefetch=0,
            grid=(nb, ntc),
            in_specs=[
                pl.BlockSpec((Bb, 1), lambda b, t: (b, 0)),            # lengths
                pl.BlockSpec((Tc, Bb, E), lambda b, t: (t, b, 0)),     # x chunk (time-major)
                pl.BlockSpec((E, 4 * Hp), lambda b, t: (0, 0)),        # W_ih^T (bf16)
                pl.BlockSpec((Hp, 4 * Hp), lambda b, t: (0, 0)),       # W_hh^T (bf16)
                pl.BlockSpec((1, 4 * Hp), lambda b, t: (0, 0)),        # b_ih + b_hh (f32)
                pl.BlockSpec((Hp, Hdp), lambda b, t: (0, 0)),          # enc2dec_h W
                pl.BlockSpec((1, Hdp), lambda b, t: (0, 0)),           # enc2dec_h b
                pl.BlockSpec((Hp, Hdp), lambda b, t: (0, 0)),          # enc2dec_c W
                pl.BlockSpec((1, Hdp), lambda b, t: (0, 0)),           # enc2dec_c b
            ],
            out_specs=[
                pl.BlockSpec((Bb, Tc, Hp), lambda b, t: (b, t, 0)),    # ctx (batch-first)
                pl.BlockSpec((Bb, Hdp), lambda b, t: (b, 0)),          # h
                pl.BlockSpec((Bb, Hdp), lambda b, t: (b, 0)),          # c
            ],
            scratch_shapes=[pltpu.VMEM((Bb, Hp), jnp.float32),         # running h
                            pltpu.VMEM((Bb, Hp), jnp.float32)],        # running c
        ),
        compiler_params=pltpu.CompilerParams(
            dimension_semantics=("parallel", "arbitrary")),
    )(lens, x_tm, wih, whh, bias, w2dh, b2dh, w2dc, b2dc)

    # Strip padding; ctx stays batch-first like PyTorch (no transpose needed).
    ctx = ctx_p[:B, :T, :H]
    h = h_p[:B, :Hd]
    c = c_p[:B, :Hd]
    return ctx, h, c


# --------------------------------------------------------------------------
# Deterministic parameter initialization (logical shapes, as in the module)
# --------------------------------------------------------------------------
def init_params(key, vocab_size, E, H, Hd, padding_idx):
    ks = jax.random.split(key, 9)
    emb = jax.random.normal(ks[0], (vocab_size, E), jnp.float32) * 0.1
    emb = emb.at[padding_idx].set(0.0)            # nn.Embedding zeroes the padding_idx row
    w_ih = jax.random.normal(ks[1], (E, 4 * H), jnp.float32) * 0.1    # weight_ih_l0^T
    w_hh = jax.random.normal(ks[2], (H, 4 * H), jnp.float32) * 0.1    # weight_hh_l0^T
    b_ih = jax.random.normal(ks[3], (4 * H,), jnp.float32) * 0.1
    b_hh = jax.random.normal(ks[4], (4 * H,), jnp.float32) * 0.1
    w2d_h = jax.random.normal(ks[5], (H, Hd), jnp.float32) * 0.1
    b2d_h = jax.random.normal(ks[6], (Hd,), jnp.float32) * 0.1
    w2d_c = jax.random.normal(ks[7], (H, Hd), jnp.float32) * 0.1
    b2d_c = jax.random.normal(ks[8], (Hd,), jnp.float32) * 0.1
    return dict(embedding=emb, w_ih=w_ih, w_hh=w_hh, b=b_ih + b_hh,
                w2d_h=w2d_h, b2d_h=b2d_h, w2d_c=w2d_c, b2d_c=b2d_c)


# --------------------------------------------------------------------------
# Pure-JAX f32 reference (lax.scan) for correctness verification
# --------------------------------------------------------------------------
def reference(inputs, lengths, params):
    B, T = inputs.shape
    H = params["w_hh"].shape[0]
    embeds = jnp.take(params["embedding"], inputs, axis=0)   # (B, T, E)

    def step(carry, xt_t):
        h, c = carry
        xt, t = xt_t
        gates = xt @ params["w_ih"] + h @ params["w_hh"] + params["b"]
        i = jax.nn.sigmoid(gates[:, :H])
        f = jax.nn.sigmoid(gates[:, H:2 * H])
        g = jnp.tanh(gates[:, 2 * H:3 * H])
        o = jax.nn.sigmoid(gates[:, 3 * H:])
        c_new = f * c + i * g
        h_new = o * jnp.tanh(c_new)
        valid = (t < lengths)[:, None]
        h = jnp.where(valid, h_new, h)
        c = jnp.where(valid, c_new, c)
        return (h, c), jnp.where(valid, h_new, 0.0)

    (hT, cT), ctx_tm = jax.lax.scan(
        step,
        (jnp.zeros((B, H), jnp.float32), jnp.zeros((B, H), jnp.float32)),
        (jnp.transpose(embeds, (1, 0, 2)), jnp.arange(T)))
    h = jnp.tanh(hT @ params["w2d_h"] + params["b2d_h"])
    c = cT @ params["w2d_c"] + params["b2d_c"]
    return jnp.transpose(ctx_tm, (1, 0, 2)), h, c


if __name__ == "__main__":
    # inputs: (batch, max_instr_length) int32 token ids; lengths descending
    # (pack_padded_sequence enforce_sorted semantics).
    B, T = 2, 24
    vocab_size, E, H, Hd = 16, 32, 32, 32
    padding_idx = 0

    key = jax.random.PRNGKey(0)
    k_tok, k_par = jax.random.split(key)
    params = init_params(k_par, vocab_size, E, H, Hd, padding_idx)

    lengths = jnp.array([24, 17], dtype=jnp.int32)            # max(lengths) == T
    tokens = jax.random.randint(k_tok, (B, T), 1, vocab_size, dtype=jnp.int32)
    time_idx = jnp.arange(T)[None, :]
    inputs = jnp.where(time_idx < lengths[:, None], tokens, padding_idx)

    ctx, h, c = encoder_lstm_forward(inputs, lengths, params, time_chunk=8)
    jax.block_until_ready((ctx, h, c))

    ctx_r, h_r, c_r = reference(inputs, lengths, params)
    # Kernel uses bf16 MXU operands (f32 accumulation / f32 gate math); reference is pure f32.
    assert ctx.shape == (B, T, H) and h.shape == (B, Hd) and c.shape == (B, Hd)
    assert jnp.allclose(ctx, ctx_r, atol=2e-2), "ctx mismatch"
    assert jnp.allclose(h, h_r, atol=2e-2), "h mismatch"
    assert jnp.allclose(c, c_r, atol=2e-2), "c mismatch"

    print("KERNEL_OK")
</pallas_src>

<mosaic_0001>
module attributes {stable_mosaic.version = 11 : i64} {
  func.func @lstm_kernel(%arg0: i32, %arg1: i32, %arg2: memref<8x1xi32, #tpu.memory_space<vmem>>, %arg3: memref<8x8x32xbf16, #tpu.memory_space<vmem>>, %arg4: memref<32x512xbf16, #tpu.memory_space<vmem>>, %arg5: memref<128x512xbf16, #tpu.memory_space<vmem>>, %arg6: memref<1x512xf32, #tpu.memory_space<vmem>>, %arg7: memref<128x128xbf16, #tpu.memory_space<vmem>>, %arg8: memref<1x128xf32, #tpu.memory_space<vmem>>, %arg9: memref<128x128xbf16, #tpu.memory_space<vmem>>, %arg10: memref<1x128xf32, #tpu.memory_space<vmem>>, %arg11: memref<8x8x128xf32, #tpu.memory_space<vmem>>, %arg12: memref<8x128xf32, #tpu.memory_space<vmem>>, %arg13: memref<8x128xf32, #tpu.memory_space<vmem>>, %arg14: memref<8x128xf32, #tpu.memory_space<vmem>>, %arg15: memref<8x128xf32, #tpu.memory_space<vmem>>) attributes {dimension_semantics = [#tpu.dimension_semantics<parallel>, #tpu.dimension_semantics<arbitrary>], iteration_bounds = array<i64: 1, 3>, scalar_prefetch = 0 : i64, scratch_operands = 2 : i64, tpu.core_type = #tpu.core_type<tc>, window_params = [{transform_indices = @transform_0, window_bounds = array<i64: 8, 1>}, {transform_indices = @transform_1, window_bounds = array<i64: 8, 8, 32>}, {pipeline_mode = #tpu.pipeline_mode<synchronous>, transform_indices = @transform_2, window_bounds = array<i64: 32, 512>}, {pipeline_mode = #tpu.pipeline_mode<synchronous>, transform_indices = @transform_3, window_bounds = array<i64: 128, 512>}, {pipeline_mode = #tpu.pipeline_mode<synchronous>, transform_indices = @transform_4, window_bounds = array<i64: 1, 512>}, {pipeline_mode = #tpu.pipeline_mode<synchronous>, transform_indices = @transform_5, window_bounds = array<i64: 128, 128>}, {pipeline_mode = #tpu.pipeline_mode<synchronous>, transform_indices = @transform_6, window_bounds = array<i64: 1, 128>}, {pipeline_mode = #tpu.pipeline_mode<synchronous>, transform_indices = @transform_7, window_bounds = array<i64: 128, 128>}, {pipeline_mode = #tpu.pipeline_mode<synchronous>, transform_indices = @transform_8, window_bounds = array<i64: 1, 128>}, {transform_indices = @transform_9, window_bounds = array<i64: 8, 8, 128>}, {transform_indices = @transform_10, window_bounds = array<i64: 8, 128>}, {transform_indices = @transform_11, window_bounds = array<i64: 8, 128>}]} {
    %c0_i32 = arith.constant 0 : i32
    %0 = arith.cmpi eq, %arg1, %c0_i32 : i32
    %1 = arith.extui %0 : i1 to i32
    %c0_i32_0 = arith.constant 0 : i32
    %2 = arith.cmpi ne, %1, %c0_i32_0 : i32
    scf.if %2 {
      %cst_91 = arith.constant 0.000000e+00 : f32
      %384 = vector.broadcast %cst_91 : f32 to vector<8x128xf32>
      %c0_92 = arith.constant 0 : index
      %c0_93 = arith.constant 0 : index
      %385 = vector.load %arg14[%c0_92, %c0_93] : memref<8x128xf32, #tpu.memory_space<vmem>>, vector<8x128xf32>
      tpu.vector_store %arg14[%c0_92, %c0_93], %384 {strides = array<i32>} : memref<8x128xf32, #tpu.memory_space<vmem>>, vector<8x128xf32>,
      %cst_94 = arith.constant 0.000000e+00 : f32
      %386 = vector.broadcast %cst_94 : f32 to vector<8x128xf32>
      %c0_95 = arith.constant 0 : index
      %c0_96 = arith.constant 0 : index
      %387 = vector.load %arg15[%c0_95, %c0_96] : memref<8x128xf32, #tpu.memory_space<vmem>>, vector<8x128xf32>
      tpu.vector_store %arg15[%c0_95, %c0_96], %386 {strides = array<i32>} : memref<8x128xf32, #tpu.memory_space<vmem>>, vector<8x128xf32>,
    } else {
    }
    %c0 = arith.constant 0 : index
    %c0_1 = arith.constant 0 : index
    %c0_2 = arith.constant 0 : index
    %3 = vector.load %arg3[%c0, %c0_1, %c0_2] : memref<8x8x32xbf16, #tpu.memory_space<vmem>>, vector<8x8x32xbf16>
    %4 = vector.shape_cast %3 : vector<8x8x32xbf16> to vector<64x32xbf16>
    %c0_3 = arith.constant 0 : index
    %c0_4 = arith.constant 0 : index
    %5 = vector.load %arg4[%c0_3, %c0_4] : memref<32x512xbf16, #tpu.memory_space<vmem>>, vector<32x512xbf16>
    %cst = arith.constant dense<0.000000e+00> : vector<64x512xf32>
    %6 = tpu.matmul %4, %5, %cst {dimension_numbers = #tpu.dot_dimension_numbers<[1], [0], [0], [1], [0, 0, 1, 1], [], []>} : vector<64x32xbf16>, vector<32x512xbf16>, vector<64x512xf32> -> vector<64x512xf32>
    %c0_5 = arith.constant 0 : index
    %c0_6 = arith.constant 0 : index
    %7 = vector.load %arg6[%c0_5, %c0_6] : memref<1x512xf32, #tpu.memory_space<vmem>>, vector<1x512xf32>
    %8 = vector.broadcast %7 : vector<1x512xf32> to vector<64x512xf32>
    %9 = arith.addf %6, %8 : vector<64x512xf32>
    %c0_7 = arith.constant 0 : index
    %c0_8 = arith.constant 0 : index
    %10 = vector.load %arg5[%c0_7, %c0_8] : memref<128x512xbf16, #tpu.memory_space<vmem>>, vector<128x512xbf16>
    %c0_9 = arith.constant 0 : index
    %c0_10 = arith.constant 0 : index
    %11 = vector.load %arg2[%c0_9, %c0_10] : memref<8x1xi32, #tpu.memory_space<vmem>>, vector<8x1xi32>
    %c8_i32 = arith.constant 8 : i32
    %12 = arith.muli %arg1, %c8_i32 : i32
    %c0_11 = arith.constant 0 : index
    %c0_12 = arith.constant 0 : index
    %13 = vector.load %arg14[%c0_11, %c0_12] : memref<8x128xf32, #tpu.memory_space<vmem>>, vector<8x128xf32>
    %c0_13 = arith.constant 0 : index
    %c0_14 = arith.constant 0 : index
    %14 = vector.load %arg15[%c0_13, %c0_14] : memref<8x128xf32, #tpu.memory_space<vmem>>, vector<8x128xf32>
    %15 = vector.extract_strided_slice %9 {offsets = [0, 0], sizes = [8, 512], strides = [1, 1]} : vector<64x512xf32> to vector<8x512xf32>
    %16 = arith.truncf %13 : vector<8x128xf32> to vector<8x128xbf16>
    %cst_15 = arith.constant dense<0.000000e+00> : vector<8x512xf32>
    %17 = tpu.matmul %16, %10, %cst_15 {dimension_numbers = #tpu.dot_dimension_numbers<[1], [0], [0], [1], [0, 0, 1, 1], [], []>} : vector<8x128xbf16>, vector<128x512xbf16>, vector<8x512xf32> -> vector<8x512xf32>
    %18 = arith.addf %15, %17 : vector<8x512xf32>
    %19 = vector.extract_strided_slice %18 {offsets = [0, 0], sizes = [8, 128], strides = [1, 1]} : vector<8x512xf32> to vector<8x128xf32>
    %20 = arith.negf %19 : vector<8x128xf32>
    %21 = math.exp %20 : vector<8x128xf32>
    %cst_16 = arith.constant 1.000000e+00 : f32
    %22 = vector.broadcast %cst_16 : f32 to vector<8x128xf32>
    %23 = arith.addf %22, %21 : vector<8x128xf32>
    %24 = arith.divf %22, %23 : vector<8x128xf32>
    %25 = vector.extract_strided_slice %18 {offsets = [0, 128], sizes = [8, 128], strides = [1, 1]} : vector<8x512xf32> to vector<8x128xf32>
    %26 = arith.negf %25 : vector<8x128xf32>
    %27 = math.exp %26 : vector<8x128xf32>
    %cst_17 = arith.constant 1.000000e+00 : f32
    %28 = vector.broadcast %cst_17 : f32 to vector<8x128xf32>
    %29 = arith.addf %28, %27 : vector<8x128xf32>
    %30 = arith.divf %28, %29 : vector<8x128xf32>
    %31 = vector.extract_strided_slice %18 {offsets = [0, 256], sizes = [8, 128], strides = [1, 1]} : vector<8x512xf32> to vector<8x128xf32>
    %32 = math.tanh %31 : vector<8x128xf32>
    %33 = vector.extract_strided_slice %18 {offsets = [0, 384], sizes = [8, 128], strides = [1, 1]} : vector<8x512xf32> to vector<8x128xf32>
    %34 = arith.negf %33 : vector<8x128xf32>
    %35 = math.exp %34 : vector<8x128xf32>
    %cst_18 = arith.constant 1.000000e+00 : f32
    %36 = vector.broadcast %cst_18 : f32 to vector<8x128xf32>
    %37 = arith.addf %36, %35 : vector<8x128xf32>
    %38 = arith.divf %36, %37 : vector<8x128xf32>
    %39 = arith.mulf %30, %14 : vector<8x128xf32>
    %40 = arith.mulf %24, %32 : vector<8x128xf32>
    %41 = arith.addf %39, %40 : vector<8x128xf32>
    %42 = math.tanh %41 : vector<8x128xf32>
    %43 = arith.mulf %38, %42 : vector<8x128xf32>
    %c0_i32_19 = arith.constant 0 : i32
    %44 = arith.addi %12, %c0_i32_19 : i32
    %45 = vector.broadcast %44 : i32 to vector<8x1xi32>
    %46 = arith.cmpi slt, %45, %11 : vector<8x1xi32>
    %47 = vector.shape_cast %46 : vector<8x1xi1> to vector<8x1xi1>
    %48 = vector.broadcast %47 : vector<8x1xi1> to vector<8x128xi1>
    %49 = arith.select %48, %43, %13 : vector<8x128xi1>, vector<8x128xf32>
    %50 = vector.shape_cast %46 : vector<8x1xi1> to vector<8x1xi1>
    %51 = vector.broadcast %50 : vector<8x1xi1> to vector<8x128xi1>
    %52 = arith.select %51, %41, %14 : vector<8x128xi1>, vector<8x128xf32>
    %cst_20 = arith.constant 0.000000e+00 : f32
    %53 = vector.shape_cast %46 : vector<8x1xi1> to vector<8x1xi1>
    %54 = vector.broadcast %53 : vector<8x1xi1> to vector<8x128xi1>
    %55 = vector.broadcast %cst_20 : f32 to vector<8x128xf32>
    %56 = arith.select %54, %43, %55 : vector<8x128xi1>, vector<8x128xf32>
    %57 = vector.shape_cast %56 : vector<8x128xf32> to vector<8x1x128xf32>
    %c0_21 = arith.constant 0 : index
    %c0_22 = arith.constant 0 : index
    %c0_23 = arith.constant 0 : index
    %58 = vector.load %arg11[%c0_21, %c0_22, %c0_23] : memref<8x8x128xf32, #tpu.memory_space<vmem>>, vector<8x1x128xf32>
    tpu.vector_store %arg11[%c0_21, %c0_22, %c0_23], %57 {strides = array<i32>} : memref<8x8x128xf32, #tpu.memory_space<vmem>>, vector<8x1x128xf32>,
    %59 = vector.extract_strided_slice %9 {offsets = [8, 0], sizes = [8, 512], strides = [1, 1]} : vector<64x512xf32> to vector<8x512xf32>
    %60 = arith.truncf %49 : vector<8x128xf32> to vector<8x128xbf16>
    %cst_24 = arith.constant dense<0.000000e+00> : vector<8x512xf32>
    %61 = tpu.matmul %60, %10, %cst_24 {dimension_numbers = #tpu.dot_dimension_numbers<[1], [0], [0], [1], [0, 0, 1, 1], [], []>} : vector<8x128xbf16>, vector<128x512xbf16>, vector<8x512xf32> -> vector<8x512xf32>
    %62 = arith.addf %59, %61 : vector<8x512xf32>
    %63 = vector.extract_strided_slice %62 {offsets = [0, 0], sizes = [8, 128], strides = [1, 1]} : vector<8x512xf32> to vector<8x128xf32>
    %64 = arith.negf %63 : vector<8x128xf32>
    %65 = math.exp %64 : vector<8x128xf32>
    %cst_25 = arith.constant 1.000000e+00 : f32
    %66 = vector.broadcast %cst_25 : f32 to vector<8x128xf32>
    %67 = arith.addf %66, %65 : vector<8x128xf32>
    %68 = arith.divf %66, %67 : vector<8x128xf32>
    %69 = vector.extract_strided_slice %62 {offsets = [0, 128], sizes = [8, 128], strides = [1, 1]} : vector<8x512xf32> to vector<8x128xf32>
    %70 = arith.negf %69 : vector<8x128xf32>
    %71 = math.exp %70 : vector<8x128xf32>
    %cst_26 = arith.constant 1.000000e+00 : f32
    %72 = vector.broadcast %cst_26 : f32 to vector<8x128xf32>
    %73 = arith.addf %72, %71 : vector<8x128xf32>
    %74 = arith.divf %72, %73 : vector<8x128xf32>
    %75 = vector.extract_strided_slice %62 {offsets = [0, 256], sizes = [8, 128], strides = [1, 1]} : vector<8x512xf32> to vector<8x128xf32>
    %76 = math.tanh %75 : vector<8x128xf32>
    %77 = vector.extract_strided_slice %62 {offsets = [0, 384], sizes = [8, 128], strides = [1, 1]} : vector<8x512xf32> to vector<8x128xf32>
    %78 = arith.negf %77 : vector<8x128xf32>
    %79 = math.exp %78 : vector<8x128xf32>
    %cst_27 = arith.constant 1.000000e+00 : f32
    %80 = vector.broadcast %cst_27 : f32 to vector<8x128xf32>
    %81 = arith.addf %80, %79 : vector<8x128xf32>
    %82 = arith.divf %80, %81 : vector<8x128xf32>
    %83 = arith.mulf %74, %52 : vector<8x128xf32>
    %84 = arith.mulf %68, %76 : vector<8x128xf32>
    %85 = arith.addf %83, %84 : vector<8x128xf32>
    %86 = math.tanh %85 : vector<8x128xf32>
    %87 = arith.mulf %82, %86 : vector<8x128xf32>
    %c1_i32 = arith.constant 1 : i32
    %88 = arith.addi %12, %c1_i32 : i32
    %89 = vector.broadcast %88 : i32 to vector<8x1xi32>
    %90 = arith.cmpi slt, %89, %11 : vector<8x1xi32>
    %91 = vector.shape_cast %90 : vector<8x1xi1> to vector<8x1xi1>
    %92 = vector.broadcast %91 : vector<8x1xi1> to vector<8x128xi1>
    %93 = arith.select %92, %87, %49 : vector<8x128xi1>, vector<8x128xf32>
    %94 = vector.shape_cast %90 : vector<8x1xi1> to vector<8x1xi1>
    %95 = vector.broadcast %94 : vector<8x1xi1> to vector<8x128xi1>
    %96 = arith.select %95, %85, %52 : vector<8x128xi1>, vector<8x128xf32>
    %cst_28 = arith.constant 0.000000e+00 : f32
    %97 = vector.shape_cast %90 : vector<8x1xi1> to vector<8x1xi1>
    %98 = vector.broadcast %97 : vector<8x1xi1> to vector<8x128xi1>
    %99 = vector.broadcast %cst_28 : f32 to vector<8x128xf32>
    %100 = arith.select %98, %87, %99 : vector<8x128xi1>, vector<8x128xf32>
    %101 = vector.shape_cast %100 : vector<8x128xf32> to vector<8x1x128xf32>
    %c0_29 = arith.constant 0 : index
    %c1 = arith.constant 1 : index
    %c0_30 = arith.constant 0 : index
    %102 = vector.load %arg11[%c0_29, %c1, %c0_30] : memref<8x8x128xf32, #tpu.memory_space<vmem>>, vector<8x1x128xf32>
    tpu.vector_store %arg11[%c0_29, %c1, %c0_30], %101 {strides = array<i32>} : memref<8x8x128xf32, #tpu.memory_space<vmem>>, vector<8x1x128xf32>,
    %103 = vector.extract_strided_slice %9 {offsets = [16, 0], sizes = [8, 512], strides = [1, 1]} : vector<64x512xf32> to vector<8x512xf32>
    %104 = arith.truncf %93 : vector<8x128xf32> to vector<8x128xbf16>
    %cst_31 = arith.constant dense<0.000000e+00> : vector<8x512xf32>
    %105 = tpu.matmul %104, %10, %cst_31 {dimension_numbers = #tpu.dot_dimension_numbers<[1], [0], [0], [1], [0, 0, 1, 1], [], []>} : vector<8x128xbf16>, vector<128x512xbf16>, vector<8x512xf32> -> vector<8x512xf32>
    %106 = arith.addf %103, %105 : vector<8x512xf32>
    %107 = vector.extract_strided_slice %106 {offsets = [0, 0], sizes = [8, 128], strides = [1, 1]} : vector<8x512xf32> to vector<8x128xf32>
    %108 = arith.negf %107 : vector<8x128xf32>
    %109 = math.exp %108 : vector<8x128xf32>
    %cst_32 = arith.constant 1.000000e+00 : f32
    %110 = vector.broadcast %cst_32 : f32 to vector<8x128xf32>
    %111 = arith.addf %110, %109 : vector<8x128xf32>
    %112 = arith.divf %110, %111 : vector<8x128xf32>
    %113 = vector.extract_strided_slice %106 {offsets = [0, 128], sizes = [8, 128], strides = [1, 1]} : vector<8x512xf32> to vector<8x128xf32>
    %114 = arith.negf %113 : vector<8x128xf32>
    %115 = math.exp %114 : vector<8x128xf32>
    %cst_33 = arith.constant 1.000000e+00 : f32
    %116 = vector.broadcast %cst_33 : f32 to vector<8x128xf32>
    %117 = arith.addf %116, %115 : vector<8x128xf32>
    %118 = arith.divf %116, %117 : vector<8x128xf32>
    %119 = vector.extract_strided_slice %106 {offsets = [0, 256], sizes = [8, 128], strides = [1, 1]} : vector<8x512xf32> to vector<8x128xf32>
    %120 = math.tanh %119 : vector<8x128xf32>
    %121 = vector.extract_strided_slice %106 {offsets = [0, 384], sizes = [8, 128], strides = [1, 1]} : vector<8x512xf32> to vector<8x128xf32>
    %122 = arith.negf %121 : vector<8x128xf32>
    %123 = math.exp %122 : vector<8x128xf32>
    %cst_34 = arith.constant 1.000000e+00 : f32
    %124 = vector.broadcast %cst_34 : f32 to vector<8x128xf32>
    %125 = arith.addf %124, %123 : vector<8x128xf32>
    %126 = arith.divf %124, %125 : vector<8x128xf32>
    %127 = arith.mulf %118, %96 : vector<8x128xf32>
    %128 = arith.mulf %112, %120 : vector<8x128xf32>
    %129 = arith.addf %127, %128 : vector<8x128xf32>
    %130 = math.tanh %129 : vector<8x128xf32>
    %131 = arith.mulf %126, %130 : vector<8x128xf32>
    %c2_i32 = arith.constant 2 : i32
    %132 = arith.addi %12, %c2_i32 : i32
    %133 = vector.broadcast %132 : i32 to vector<8x1xi32>
    %134 = arith.cmpi slt, %133, %11 : vector<8x1xi32>
    %135 = vector.shape_cast %134 : vector<8x1xi1> to vector<8x1xi1>
    %136 = vector.broadcast %135 : vector<8x1xi1> to vector<8x128xi1>
    %137 = arith.select %136, %131, %93 : vector<8x128xi1>, vector<8x128xf32>
    %138 = vector.shape_cast %134 : vector<8x1xi1> to vector<8x1xi1>
    %139 = vector.broadcast %138 : vector<8x1xi1> to vector<8x128xi1>
    %140 = arith.select %139, %129, %96 : vector<8x128xi1>, vector<8x128xf32>
    %cst_35 = arith.constant 0.000000e+00 : f32
    %141 = vector.shape_cast %134 : vector<8x1xi1> to vector<8x1xi1>
    %142 = vector.broadcast %141 : vector<8x1xi1> to vector<8x128xi1>
    %143 = vector.broadcast %cst_35 : f32 to vector<8x128xf32>
    %144 = arith.select %142, %131, %143 : vector<8x128xi1>, vector<8x128xf32>
    %145 = vector.shape_cast %144 : vector<8x128xf32> to vector<8x1x128xf32>
    %c0_36 = arith.constant 0 : index
    %c2 = arith.constant 2 : index
    %c0_37 = arith.constant 0 : index
    %146 = vector.load %arg11[%c0_36, %c2, %c0_37] : memref<8x8x128xf32, #tpu.memory_space<vmem>>, vector<8x1x128xf32>
    tpu.vector_store %arg11[%c0_36, %c2, %c0_37], %145 {strides = array<i32>} : memref<8x8x128xf32, #tpu.memory_space<vmem>>, vector<8x1x128xf32>,
    %147 = vector.extract_strided_slice %9 {offsets = [24, 0], sizes = [8, 512], strides = [1, 1]} : vector<64x512xf32> to vector<8x512xf32>
    %148 = arith.truncf %137 : vector<8x128xf32> to vector<8x128xbf16>
    %cst_38 = arith.constant dense<0.000000e+00> : vector<8x512xf32>
    %149 = tpu.matmul %148, %10, %cst_38 {dimension_numbers = #tpu.dot_dimension_numbers<[1], [0], [0], [1], [0, 0, 1, 1], [], []>} : vector<8x128xbf16>, vector<128x512xbf16>, vector<8x512xf32> -> vector<8x512xf32>
    %150 = arith.addf %147, %149 : vector<8x512xf32>
    %151 = vector.extract_strided_slice %150 {offsets = [0, 0], sizes = [8, 128], strides = [1, 1]} : vector<8x512xf32> to vector<8x128xf32>
    %152 = arith.negf %151 : vector<8x128xf32>
    %153 = math.exp %152 : vector<8x128xf32>
    %cst_39 = arith.constant 1.000000e+00 : f32
    %154 = vector.broadcast %cst_39 : f32 to vector<8x128xf32>
    %155 = arith.addf %154, %153 : vector<8x128xf32>
    %156 = arith.divf %154, %155 : vector<8x128xf32>
    %157 = vector.extract_strided_slice %150 {offsets = [0, 128], sizes = [8, 128], strides = [1, 1]} : vector<8x512xf32> to vector<8x128xf32>
    %158 = arith.negf %157 : vector<8x128xf32>
    %159 = math.exp %158 : vector<8x128xf32>
    %cst_40 = arith.constant 1.000000e+00 : f32
    %160 = vector.broadcast %cst_40 : f32 to vector<8x128xf32>
    %161 = arith.addf %160, %159 : vector<8x128xf32>
    %162 = arith.divf %160, %161 : vector<8x128xf32>
    %163 = vector.extract_strided_slice %150 {offsets = [0, 256], sizes = [8, 128], strides = [1, 1]} : vector<8x512xf32> to vector<8x128xf32>
    %164 = math.tanh %163 : vector<8x128xf32>
    %165 = vector.extract_strided_slice %150 {offsets = [0, 384], sizes = [8, 128], strides = [1, 1]} : vector<8x512xf32> to vector<8x128xf32>
    %166 = arith.negf %165 : vector<8x128xf32>
    %167 = math.exp %166 : vector<8x128xf32>
    %cst_41 = arith.constant 1.000000e+00 : f32
    %168 = vector.broadcast %cst_41 : f32 to vector<8x128xf32>
    %169 = arith.addf %168, %167 : vector<8x128xf32>
    %170 = arith.divf %168, %169 : vector<8x128xf32>
    %171 = arith.mulf %162, %140 : vector<8x128xf32>
    %172 = arith.mulf %156, %164 : vector<8x128xf32>
    %173 = arith.addf %171, %172 : vector<8x128xf32>
    %174 = math.tanh %173 : vector<8x128xf32>
    %175 = arith.mulf %170, %174 : vector<8x128xf32>
    %c3_i32 = arith.constant 3 : i32
    %176 = arith.addi %12, %c3_i32 : i32
    %177 = vector.broadcast %176 : i32 to vector<8x1xi32>
    %178 = arith.cmpi slt, %177, %11 : vector<8x1xi32>
    %179 = vector.shape_cast %178 : vector<8x1xi1> to vector<8x1xi1>
    %180 = vector.broadcast %179 : vector<8x1xi1> to vector<8x128xi1>
    %181 = arith.select %180, %175, %137 : vector<8x128xi1>, vector<8x128xf32>
    %182 = vector.shape_cast %178 : vector<8x1xi1> to vector<8x1xi1>
    %183 = vector.broadcast %182 : vector<8x1xi1> to vector<8x128xi1>
    %184 = arith.select %183, %173, %140 : vector<8x128xi1>, vector<8x128xf32>
    %cst_42 = arith.constant 0.000000e+00 : f32
    %185 = vector.shape_cast %178 : vector<8x1xi1> to vector<8x1xi1>
    %186 = vector.broadcast %185 : vector<8x1xi1> to vector<8x128xi1>
    %187 = vector.broadcast %cst_42 : f32 to vector<8x128xf32>
    %188 = arith.select %186, %175, %187 : vector<8x128xi1>, vector<8x128xf32>
    %189 = vector.shape_cast %188 : vector<8x128xf32> to vector<8x1x128xf32>
    %c0_43 = arith.constant 0 : index
    %c3 = arith.constant 3 : index
    %c0_44 = arith.constant 0 : index
    %190 = vector.load %arg11[%c0_43, %c3, %c0_44] : memref<8x8x128xf32, #tpu.memory_space<vmem>>, vector<8x1x128xf32>
    tpu.vector_store %arg11[%c0_43, %c3, %c0_44], %189 {strides = array<i32>} : memref<8x8x128xf32, #tpu.memory_space<vmem>>, vector<8x1x128xf32>,
    %191 = vector.extract_strided_slice %9 {offsets = [32, 0], sizes = [8, 512], strides = [1, 1]} : vector<64x512xf32> to vector<8x512xf32>
    %192 = arith.truncf %181 : vector<8x128xf32> to vector<8x128xbf16>
    %cst_45 = arith.constant dense<0.000000e+00> : vector<8x512xf32>
    %193 = tpu.matmul %192, %10, %cst_45 {dimension_numbers = #tpu.dot_dimension_numbers<[1], [0], [0], [1], [0, 0, 1, 1], [], []>} : vector<8x128xbf16>, vector<128x512xbf16>, vector<8x512xf32> -> vector<8x512xf32>
    %194 = arith.addf %191, %193 : vector<8x512xf32>
    %195 = vector.extract_strided_slice %194 {offsets = [0, 0], sizes = [8, 128], strides = [1, 1]} : vector<8x512xf32> to vector<8x128xf32>
    %196 = arith.negf %195 : vector<8x128xf32>
    %197 = math.exp %196 : vector<8x128xf32>
    %cst_46 = arith.constant 1.000000e+00 : f32
    %198 = vector.broadcast %cst_46 : f32 to vector<8x128xf32>
    %199 = arith.addf %198, %197 : vector<8x128xf32>
    %200 = arith.divf %198, %199 : vector<8x128xf32>
    %201 = vector.extract_strided_slice %194 {offsets = [0, 128], sizes = [8, 128], strides = [1, 1]} : vector<8x512xf32> to vector<8x128xf32>
    %202 = arith.negf %201 : vector<8x128xf32>
    %203 = math.exp %202 : vector<8x128xf32>
    %cst_47 = arith.constant 1.000000e+00 : f32
    %204 = vector.broadcast %cst_47 : f32 to vector<8x128xf32>
    %205 = arith.addf %204, %203 : vector<8x128xf32>
    %206 = arith.divf %204, %205 : vector<8x128xf32>
    %207 = vector.extract_strided_slice %194 {offsets = [0, 256], sizes = [8, 128], strides = [1, 1]} : vector<8x512xf32> to vector<8x128xf32>
    %208 = math.tanh %207 : vector<8x128xf32>
    %209 = vector.extract_strided_slice %194 {offsets = [0, 384], sizes = [8, 128], strides = [1, 1]} : vector<8x512xf32> to vector<8x128xf32>
    %210 = arith.negf %209 : vector<8x128xf32>
    %211 = math.exp %210 : vector<8x128xf32>
    %cst_48 = arith.constant 1.000000e+00 : f32
    %212 = vector.broadcast %cst_48 : f32 to vector<8x128xf32>
    %213 = arith.addf %212, %211 : vector<8x128xf32>
    %214 = arith.divf %212, %213 : vector<8x128xf32>
    %215 = arith.mulf %206, %184 : vector<8x128xf32>
    %216 = arith.mulf %200, %208 : vector<8x128xf32>
    %217 = arith.addf %215, %216 : vector<8x128xf32>
    %218 = math.tanh %217 : vector<8x128xf32>
    %219 = arith.mulf %214, %218 : vector<8x128xf32>
    %c4_i32 = arith.constant 4 : i32
    %220 = arith.addi %12, %c4_i32 : i32
    %221 = vector.broadcast %220 : i32 to vector<8x1xi32>
    %222 = arith.cmpi slt, %221, %11 : vector<8x1xi32>
    %223 = vector.shape_cast %222 : vector<8x1xi1> to vector<8x1xi1>
    %224 = vector.broadcast %223 : vector<8x1xi1> to vector<8x128xi1>
    %225 = arith.select %224, %219, %181 : vector<8x128xi1>, vector<8x128xf32>
    %226 = vector.shape_cast %222 : vector<8x1xi1> to vector<8x1xi1>
    %227 = vector.broadcast %226 : vector<8x1xi1> to vector<8x128xi1>
    %228 = arith.select %227, %217, %184 : vector<8x128xi1>, vector<8x128xf32>
    %cst_49 = arith.constant 0.000000e+00 : f32
    %229 = vector.shape_cast %222 : vector<8x1xi1> to vector<8x1xi1>
    %230 = vector.broadcast %229 : vector<8x1xi1> to vector<8x128xi1>
    %231 = vector.broadcast %cst_49 : f32 to vector<8x128xf32>
    %232 = arith.select %230, %219, %231 : vector<8x128xi1>, vector<8x128xf32>
    %233 = vector.shape_cast %232 : vector<8x128xf32> to vector<8x1x128xf32>
    %c0_50 = arith.constant 0 : index
    %c4 = arith.constant 4 : index
    %c0_51 = arith.constant 0 : index
    %234 = vector.load %arg11[%c0_50, %c4, %c0_51] : memref<8x8x128xf32, #tpu.memory_space<vmem>>, vector<8x1x128xf32>
    tpu.vector_store %arg11[%c0_50, %c4, %c0_51], %233 {strides = array<i32>} : memref<8x8x128xf32, #tpu.memory_space<vmem>>, vector<8x1x128xf32>,
    %235 = vector.extract_strided_slice %9 {offsets = [40, 0], sizes = [8, 512], strides = [1, 1]} : vector<64x512xf32> to vector<8x512xf32>
    %236 = arith.truncf %225 : vector<8x128xf32> to vector<8x128xbf16>
    %cst_52 = arith.constant dense<0.000000e+00> : vector<8x512xf32>
    %237 = tpu.matmul %236, %10, %cst_52 {dimension_numbers = #tpu.dot_dimension_numbers<[1], [0], [0], [1], [0, 0, 1, 1], [], []>} : vector<8x128xbf16>, vector<128x512xbf16>, vector<8x512xf32> -> vector<8x512xf32>
    %238 = arith.addf %235, %237 : vector<8x512xf32>
    %239 = vector.extract_strided_slice %238 {offsets = [0, 0], sizes = [8, 128], strides = [1, 1]} : vector<8x512xf32> to vector<8x128xf32>
    %240 = arith.negf %239 : vector<8x128xf32>
    %241 = math.exp %240 : vector<8x128xf32>
    %cst_53 = arith.constant 1.000000e+00 : f32
    %242 = vector.broadcast %cst_53 : f32 to vector<8x128xf32>
    %243 = arith.addf %242, %241 : vector<8x128xf32>
    %244 = arith.divf %242, %243 : vector<8x128xf32>
    %245 = vector.extract_strided_slice %238 {offsets = [0, 128], sizes = [8, 128], strides = [1, 1]} : vector<8x512xf32> to vector<8x128xf32>
    %246 = arith.negf %245 : vector<8x128xf32>
    %247 = math.exp %246 : vector<8x128xf32>
    %cst_54 = arith.constant 1.000000e+00 : f32
    %248 = vector.broadcast %cst_54 : f32 to vector<8x128xf32>
    %249 = arith.addf %248, %247 : vector<8x128xf32>
    %250 = arith.divf %248, %249 : vector<8x128xf32>
    %251 = vector.extract_strided_slice %238 {offsets = [0, 256], sizes = [8, 128], strides = [1, 1]} : vector<8x512xf32> to vector<8x128xf32>
    %252 = math.tanh %251 : vector<8x128xf32>
    %253 = vector.extract_strided_slice %238 {offsets = [0, 384], sizes = [8, 128], strides = [1, 1]} : vector<8x512xf32> to vector<8x128xf32>
    %254 = arith.negf %253 : vector<8x128xf32>
    %255 = math.exp %254 : vector<8x128xf32>
    %cst_55 = arith.constant 1.000000e+00 : f32
    %256 = vector.broadcast %cst_55 : f32 to vector<8x128xf32>
    %257 = arith.addf %256, %255 : vector<8x128xf32>
    %258 = arith.divf %256, %257 : vector<8x128xf32>
    %259 = arith.mulf %250, %228 : vector<8x128xf32>
    %260 = arith.mulf %244, %252 : vector<8x128xf32>
    %261 = arith.addf %259, %260 : vector<8x128xf32>
    %262 = math.tanh %261 : vector<8x128xf32>
    %263 = arith.mulf %258, %262 : vector<8x128xf32>
    %c5_i32 = arith.constant 5 : i32
    %264 = arith.addi %12, %c5_i32 : i32
    %265 = vector.broadcast %264 : i32 to vector<8x1xi32>
    %266 = arith.cmpi slt, %265, %11 : vector<8x1xi32>
    %267 = vector.shape_cast %266 : vector<8x1xi1> to vector<8x1xi1>
    %268 = vector.broadcast %267 : vector<8x1xi1> to vector<8x128xi1>
    %269 = arith.select %268, %263, %225 : vector<8x128xi1>, vector<8x128xf32>
    %270 = vector.shape_cast %266 : vector<8x1xi1> to vector<8x1xi1>
    %271 = vector.broadcast %270 : vector<8x1xi1> to vector<8x128xi1>
    %272 = arith.select %271, %261, %228 : vector<8x128xi1>, vector<8x128xf32>
    %cst_56 = arith.constant 0.000000e+00 : f32
    %273 = vector.shape_cast %266 : vector<8x1xi1> to vector<8x1xi1>
    %274 = vector.broadcast %273 : vector<8x1xi1> to vector<8x128xi1>
    %275 = vector.broadcast %cst_56 : f32 to vector<8x128xf32>
    %276 = arith.select %274, %263, %275 : vector<8x128xi1>, vector<8x128xf32>
    %277 = vector.shape_cast %276 : vector<8x128xf32> to vector<8x1x128xf32>
    %c0_57 = arith.constant 0 : index
    %c5 = arith.constant 5 : index
    %c0_58 = arith.constant 0 : index
    %278 = vector.load %arg11[%c0_57, %c5, %c0_58] : memref<8x8x128xf32, #tpu.memory_space<vmem>>, vector<8x1x128xf32>
    tpu.vector_store %arg11[%c0_57, %c5, %c0_58], %277 {strides = array<i32>} : memref<8x8x128xf32, #tpu.memory_space<vmem>>, vector<8x1x128xf32>,
    %279 = vector.extract_strided_slice %9 {offsets = [48, 0], sizes = [8, 512], strides = [1, 1]} : vector<64x512xf32> to vector<8x512xf32>
    %280 = arith.truncf %269 : vector<8x128xf32> to vector<8x128xbf16>
    %cst_59 = arith.constant dense<0.000000e+00> : vector<8x512xf32>
    %281 = tpu.matmul %280, %10, %cst_59 {dimension_numbers = #tpu.dot_dimension_numbers<[1], [0], [0], [1], [0, 0, 1, 1], [], []>} : vector<8x128xbf16>, vector<128x512xbf16>, vector<8x512xf32> -> vector<8x512xf32>
    %282 = arith.addf %279, %281 : vector<8x512xf32>
    %283 = vector.extract_strided_slice %282 {offsets = [0, 0], sizes = [8, 128], strides = [1, 1]} : vector<8x512xf32> to vector<8x128xf32>
    %284 = arith.negf %283 : vector<8x128xf32>
    %285 = math.exp %284 : vector<8x128xf32>
    %cst_60 = arith.constant 1.000000e+00 : f32
    %286 = vector.broadcast %cst_60 : f32 to vector<8x128xf32>
    %287 = arith.addf %286, %285 : vector<8x128xf32>
    %288 = arith.divf %286, %287 : vector<8x128xf32>
    %289 = vector.extract_strided_slice %282 {offsets = [0, 128], sizes = [8, 128], strides = [1, 1]} : vector<8x512xf32> to vector<8x128xf32>
    %290 = arith.negf %289 : vector<8x128xf32>
    %291 = math.exp %290 : vector<8x128xf32>
    %cst_61 = arith.constant 1.000000e+00 : f32
    %292 = vector.broadcast %cst_61 : f32 to vector<8x128xf32>
    %293 = arith.addf %292, %291 : vector<8x128xf32>
    %294 = arith.divf %292, %293 : vector<8x128xf32>
    %295 = vector.extract_strided_slice %282 {offsets = [0, 256], sizes = [8, 128], strides = [1, 1]} : vector<8x512xf32> to vector<8x128xf32>
    %296 = math.tanh %295 : vector<8x128xf32>
    %297 = vector.extract_strided_slice %282 {offsets = [0, 384], sizes = [8, 128], strides = [1, 1]} : vector<8x512xf32> to vector<8x128xf32>
    %298 = arith.negf %297 : vector<8x128xf32>
    %299 = math.exp %298 : vector<8x128xf32>
    %cst_62 = arith.constant 1.000000e+00 : f32
    %300 = vector.broadcast %cst_62 : f32 to vector<8x128xf32>
    %301 = arith.addf %300, %299 : vector<8x128xf32>
    %302 = arith.divf %300, %301 : vector<8x128xf32>
    %303 = arith.mulf %294, %272 : vector<8x128xf32>
    %304 = arith.mulf %288, %296 : vector<8x128xf32>
    %305 = arith.addf %303, %304 : vector<8x128xf32>
    %306 = math.tanh %305 : vector<8x128xf32>
    %307 = arith.mulf %302, %306 : vector<8x128xf32>
    %c6_i32 = arith.constant 6 : i32
    %308 = arith.addi %12, %c6_i32 : i32
    %309 = vector.broadcast %308 : i32 to vector<8x1xi32>
    %310 = arith.cmpi slt, %309, %11 : vector<8x1xi32>
    %311 = vector.shape_cast %310 : vector<8x1xi1> to vector<8x1xi1>
    %312 = vector.broadcast %311 : vector<8x1xi1> to vector<8x128xi1>
    %313 = arith.select %312, %307, %269 : vector<8x128xi1>, vector<8x128xf32>
    %314 = vector.shape_cast %310 : vector<8x1xi1> to vector<8x1xi1>
    %315 = vector.broadcast %314 : vector<8x1xi1> to vector<8x128xi1>
    %316 = arith.select %315, %305, %272 : vector<8x128xi1>, vector<8x128xf32>
    %cst_63 = arith.constant 0.000000e+00 : f32
    %317 = vector.shape_cast %310 : vector<8x1xi1> to vector<8x1xi1>
    %318 = vector.broadcast %317 : vector<8x1xi1> to vector<8x128xi1>
    %319 = vector.broadcast %cst_63 : f32 to vector<8x128xf32>
    %320 = arith.select %318, %307, %319 : vector<8x128xi1>, vector<8x128xf32>
    %321 = vector.shape_cast %320 : vector<8x128xf32> to vector<8x1x128xf32>
    %c0_64 = arith.constant 0 : index
    %c6 = arith.constant 6 : index
    %c0_65 = arith.constant 0 : index
    %322 = vector.load %arg11[%c0_64, %c6, %c0_65] : memref<8x8x128xf32, #tpu.memory_space<vmem>>, vector<8x1x128xf32>
    tpu.vector_store %arg11[%c0_64, %c6, %c0_65], %321 {strides = array<i32>} : memref<8x8x128xf32, #tpu.memory_space<vmem>>, vector<8x1x128xf32>,
    %323 = vector.extract_strided_slice %9 {offsets = [56, 0], sizes = [8, 512], strides = [1, 1]} : vector<64x512xf32> to vector<8x512xf32>
    %324 = arith.truncf %313 : vector<8x128xf32> to vector<8x128xbf16>
    %cst_66 = arith.constant dense<0.000000e+00> : vector<8x512xf32>
    %325 = tpu.matmul %324, %10, %cst_66 {dimension_numbers = #tpu.dot_dimension_numbers<[1], [0], [0], [1], [0, 0, 1, 1], [], []>} : vector<8x128xbf16>, vector<128x512xbf16>, vector<8x512xf32> -> vector<8x512xf32>
    %326 = arith.addf %323, %325 : vector<8x512xf32>
    %327 = vector.extract_strided_slice %326 {offsets = [0, 0], sizes = [8, 128], strides = [1, 1]} : vector<8x512xf32> to vector<8x128xf32>
    %328 = arith.negf %327 : vector<8x128xf32>
    %329 = math.exp %328 : vector<8x128xf32>
    %cst_67 = arith.constant 1.000000e+00 : f32
    %330 = vector.broadcast %cst_67 : f32 to vector<8x128xf32>
    %331 = arith.addf %330, %329 : vector<8x128xf32>
    %332 = arith.divf %330, %331 : vector<8x128xf32>
    %333 = vector.extract_strided_slice %326 {offsets = [0, 128], sizes = [8, 128], strides = [1, 1]} : vector<8x512xf32> to vector<8x128xf32>
    %334 = arith.negf %333 : vector<8x128xf32>
    %335 = math.exp %334 : vector<8x128xf32>
    %cst_68 = arith.constant 1.000000e+00 : f32
    %336 = vector.broadcast %cst_68 : f32 to vector<8x128xf32>
    %337 = arith.addf %336, %335 : vector<8x128xf32>
    %338 = arith.divf %336, %337 : vector<8x128xf32>
    %339 = vector.extract_strided_slice %326 {offsets = [0, 256], sizes = [8, 128], strides = [1, 1]} : vector<8x512xf32> to vector<8x128xf32>
    %340 = math.tanh %339 : vector<8x128xf32>
    %341 = vector.extract_strided_slice %326 {offsets = [0, 384], sizes = [8, 128], strides = [1, 1]} : vector<8x512xf32> to vector<8x128xf32>
    %342 = arith.negf %341 : vector<8x128xf32>
    %343 = math.exp %342 : vector<8x128xf32>
    %cst_69 = arith.constant 1.000000e+00 : f32
    %344 = vector.broadcast %cst_69 : f32 to vector<8x128xf32>
    %345 = arith.addf %344, %343 : vector<8x128xf32>
    %346 = arith.divf %344, %345 : vector<8x128xf32>
    %347 = arith.mulf %338, %316 : vector<8x128xf32>
    %348 = arith.mulf %332, %340 : vector<8x128xf32>
    %349 = arith.addf %347, %348 : vector<8x128xf32>
    %350 = math.tanh %349 : vector<8x128xf32>
    %351 = arith.mulf %346, %350 : vector<8x128xf32>
    %c7_i32 = arith.constant 7 : i32
    %352 = arith.addi %12, %c7_i32 : i32
    %353 = vector.broadcast %352 : i32 to vector<8x1xi32>
    %354 = arith.cmpi slt, %353, %11 : vector<8x1xi32>
    %355 = vector.shape_cast %354 : vector<8x1xi1> to vector<8x1xi1>
    %356 = vector.broadcast %355 : vector<8x1xi1> to vector<8x128xi1>
    %357 = arith.select %356, %351, %313 : vector<8x128xi1>, vector<8x128xf32>
    %358 = vector.shape_cast %354 : vector<8x1xi1> to vector<8x1xi1>
    %359 = vector.broadcast %358 : vector<8x1xi1> to vector<8x128xi1>
    %360 = arith.select %359, %349, %316 : vector<8x128xi1>, vector<8x128xf32>
    %cst_70 = arith.constant 0.000000e+00 : f32
    %361 = vector.shape_cast %354 : vector<8x1xi1> to vector<8x1xi1>
    %362 = vector.broadcast %361 : vector<8x1xi1> to vector<8x128xi1>
    %363 = vector.broadcast %cst_70 : f32 to vector<8x128xf32>
    %364 = arith.select %362, %351, %363 : vector<8x128xi1>, vector<8x128xf32>
    %365 = vector.shape_cast %364 : vector<8x128xf32> to vector<8x1x128xf32>
    %c0_71 = arith.constant 0 : index
    %c7 = arith.constant 7 : index
    %c0_72 = arith.constant 0 : index
    %366 = vector.load %arg11[%c0_71, %c7, %c0_72] : memref<8x8x128xf32, #tpu.memory_space<vmem>>, vector<8x1x128xf32>
    tpu.vector_store %arg11[%c0_71, %c7, %c0_72], %365 {strides = array<i32>} : memref<8x8x128xf32, #tpu.memory_space<vmem>>, vector<8x1x128xf32>,
    %c0_73 = arith.constant 0 : index
    %c0_74 = arith.constant 0 : index
    %367 = vector.load %arg14[%c0_73, %c0_74] : memref<8x128xf32, #tpu.memory_space<vmem>>, vector<8x128xf32>
    tpu.vector_store %arg14[%c0_73, %c0_74], %357 {strides = array<i32>} : memref<8x128xf32, #tpu.memory_space<vmem>>, vector<8x128xf32>,
    %c0_75 = arith.constant 0 : index
    %c0_76 = arith.constant 0 : index
    %368 = vector.load %arg15[%c0_75, %c0_76] : memref<8x128xf32, #tpu.memory_space<vmem>>, vector<8x128xf32>
    tpu.vector_store %arg15[%c0_75, %c0_76], %360 {strides = array<i32>} : memref<8x128xf32, #tpu.memory_space<vmem>>, vector<8x128xf32>,
    %369 = arith.truncf %357 : vector<8x128xf32> to vector<8x128xbf16>
    %370 = arith.truncf %360 : vector<8x128xf32> to vector<8x128xbf16>
    %c0_77 = arith.constant 0 : index
    %c0_78 = arith.constant 0 : index
    %371 = vector.load %arg7[%c0_77, %c0_78] : memref<128x128xbf16, #tpu.memory_space<vmem>>, vector<128x128xbf16>
    %cst_79 = arith.constant dense<0.000000e+00> : vector<8x128xf32>
    %372 = tpu.matmul %369, %371, %cst_79 {dimension_numbers = #tpu.dot_dimension_numbers<[1], [0], [0], [1], [0, 0, 1, 1], [], []>} : vector<8x128xbf16>, vector<128x128xbf16>, vector<8x128xf32> -> vector<8x128xf32>
    %c0_80 = arith.constant 0 : index
    %c0_81 = arith.constant 0 : index
    %373 = vector.load %arg8[%c0_80, %c0_81] : memref<1x128xf32, #tpu.memory_space<vmem>>, vector<1x128xf32>
    %374 = vector.broadcast %373 : vector<1x128xf32> to vector<8x128xf32>
    %375 = arith.addf %372, %374 : vector<8x128xf32>
    %376 = math.tanh %375 : vector<8x128xf32>
    %c0_82 = arith.constant 0 : index
    %c0_83 = arith.constant 0 : index
    %377 = vector.load %arg12[%c0_82, %c0_83] : memref<8x128xf32, #tpu.memory_space<vmem>>, vector<8x128xf32>
    tpu.vector_store %arg12[%c0_82, %c0_83], %376 {strides = array<i32>} : memref<8x128xf32, #tpu.memory_space<vmem>>, vector<8x128xf32>,
    %c0_84 = arith.constant 0 : index
    %c0_85 = arith.constant 0 : index
    %378 = vector.load %arg9[%c0_84, %c0_85] : memref<128x128xbf16, #tpu.memory_space<vmem>>, vector<128x128xbf16>
    %cst_86 = arith.constant dense<0.000000e+00> : vector<8x128xf32>
    %379 = tpu.matmul %370, %378, %cst_86 {dimension_numbers = #tpu.dot_dimension_numbers<[1], [0], [0], [1], [0, 0, 1, 1], [], []>} : vector<8x128xbf16>, vector<128x128xbf16>, vector<8x128xf32> -> vector<8x128xf32>
    %c0_87 = arith.constant 0 : index
    %c0_88 = arith.constant 0 : index
    %380 = vector.load %arg10[%c0_87, %c0_88] : memref<1x128xf32, #tpu.memory_space<vmem>>, vector<1x128xf32>
    %381 = vector.broadcast %380 : vector<1x128xf32> to vector<8x128xf32>
    %382 = arith.addf %379, %381 : vector<8x128xf32>
    %c0_89 = arith.constant 0 : index
    %c0_90 = arith.constant 0 : index
    %383 = vector.load %arg13[%c0_89, %c0_90] : memref<8x128xf32, #tpu.memory_space<vmem>>, vector<8x128xf32>
    tpu.vector_store %arg13[%c0_89, %c0_90], %382 {strides = array<i32>} : memref<8x128xf32, #tpu.memory_space<vmem>>, vector<8x128xf32>,
    return
  }
  func.func @transform_0(%arg0: i32, %arg1: i32) -> (i32, i32) {
    %c0_i32 = arith.constant 0 : i32
    %c0_i32_0 = arith.constant 0 : i32
    return %arg0, %c0_i32 : i32, i32
  }
  func.func @transform_1(%arg0: i32, %arg1: i32) -> (i32, i32, i32) {
    %c0_i32 = arith.constant 0 : i32
    %c0_i32_0 = arith.constant 0 : i32
    return %arg1, %arg0, %c0_i32 : i32, i32, i32
  }
  func.func @transform_2(%arg0: i32, %arg1: i32) -> (i32, i32) {
    %c0_i32 = arith.constant 0 : i32
    %c0_i32_0 = arith.constant 0 : i32
    %c0_i32_1 = arith.constant 0 : i32
    return %c0_i32, %c0_i32_0 : i32, i32
  }
  func.func @transform_3(%arg0: i32, %arg1: i32) -> (i32, i32) {
    %c0_i32 = arith.constant 0 : i32
    %c0_i32_0 = arith.constant 0 : i32
    %c0_i32_1 = arith.constant 0 : i32
    return %c0_i32, %c0_i32_0 : i32, i32
  }
  func.func @transform_4(%arg0: i32, %arg1: i32) -> (i32, i32) {
    %c0_i32 = arith.constant 0 : i32
    %c0_i32_0 = arith.constant 0 : i32
    %c0_i32_1 = arith.constant 0 : i32
    return %c0_i32, %c0_i32_0 : i32, i32
  }
  func.func @transform_5(%arg0: i32, %arg1: i32) -> (i32, i32) {
    %c0_i32 = arith.constant 0 : i32
    %c0_i32_0 = arith.constant 0 : i32
    %c0_i32_1 = arith.constant 0 : i32
    return %c0_i32, %c0_i32_0 : i32, i32
  }
  func.func @transform_6(%arg0: i32, %arg1: i32) -> (i32, i32) {
    %c0_i32 = arith.constant 0 : i32
    %c0_i32_0 = arith.constant 0 : i32
    %c0_i32_1 = arith.constant 0 : i32
    return %c0_i32, %c0_i32_0 : i32, i32
  }
  func.func @transform_7(%arg0: i32, %arg1: i32) -> (i32, i32) {
    %c0_i32 = arith.constant 0 : i32
    %c0_i32_0 = arith.constant 0 : i32
    %c0_i32_1 = arith.constant 0 : i32
    return %c0_i32, %c0_i32_0 : i32, i32
  }
  func.func @transform_8(%arg0: i32, %arg1: i32) -> (i32, i32) {
    %c0_i32 = arith.constant 0 : i32
    %c0_i32_0 = arith.constant 0 : i32
    %c0_i32_1 = arith.constant 0 : i32
    return %c0_i32, %c0_i32_0 : i32, i32
  }
  func.func @transform_9(%arg0: i32, %arg1: i32) -> (i32, i32, i32) {
    %c0_i32 = arith.constant 0 : i32
    %c0_i32_0 = arith.constant 0 : i32
    return %arg0, %arg1, %c0_i32 : i32, i32, i32
  }
  func.func @transform_10(%arg0: i32, %arg1: i32) -> (i32, i32) {
    %c0_i32 = arith.constant 0 : i32
    %c0_i32_0 = arith.constant 0 : i32
    return %arg0, %c0_i32 : i32, i32
  }
  func.func @transform_11(%arg0: i32, %arg1: i32) -> (i32, i32) {
    %c0_i32 = arith.constant 0 : i32
    %c0_i32_0 = arith.constant 0 : i32
    return %arg0, %c0_i32 : i32, i32
  }
}

</mosaic_0001>

<llo_original>
// kernel: tpu_custom_call.1
$region0: #{tpu_custom_call.1}
  #allocation0 [shape = 'u32[]', space=smem, size = 0x4, offset = 0x4, fixed_abs, tag = 'smem constant byte address 0x4 - core index']
  #allocation1 [shape = 'u32[144,128]{1,0:T(1,128)}', space=vmem, size = 0x12000, scoped, tag = 'internal scratch']
  #allocation2 [shape = 'f32[8,128]{1,0:T(8,128)}', space=vmem, size = 0x1000, scoped, tag = 'scratch operand']
  #allocation3 [shape = 'f32[8,128]{1,0:T(8,128)}', space=vmem, size = 0x1000, scoped, tag = 'scratch operand']
  %s0 = inlined_call_operand.vmem [shape: s32[8,1], index: 0, kind: input, shape index: {}]
  %s1 = inlined_call_operand.hbm [shape: bf16[24,8,32], index: 1, kind: input, shape index: {}]
  %s2 = inlined_call_operand.hbm [shape: bf16[32,512], index: 2, kind: input, shape index: {}]
  %s3 = inlined_call_operand.hbm [shape: bf16[128,512], index: 3, kind: input, shape index: {}]
  %s4 = inlined_call_operand.vmem [shape: f32[1,512], index: 4, kind: input, shape index: {}]
  %s5 = inlined_call_operand.hbm [shape: bf16[128,128], index: 5, kind: input, shape index: {}]
  %s6 = inlined_call_operand.vmem [shape: f32[1,128], index: 6, kind: input, shape index: {}]
  %s7 = inlined_call_operand.hbm [shape: bf16[128,128], index: 7, kind: input, shape index: {}]
  %s8 = inlined_call_operand.vmem [shape: f32[1,128], index: 8, kind: input, shape index: {}]
  %s9 = inlined_call_operand.hbm [shape: f32[8,24,128], index: 9, kind: output, shape index: {0}]
  %s10 = inlined_call_operand.hbm [shape: f32[8,128], index: 10, kind: output, shape index: {1}]
  %s11 = inlined_call_operand.hbm [shape: f32[8,128], index: 11, kind: output, shape index: {2}]
  %12 = xla_tuple %s9, %s10, %s11
  %s13 = sld [smem:[#allocation0]]
  $region109: #{tpu_custom_call.1} parent=0
    _
  %s15 = ssub.s32 1, %s13
  %s16 = scalar_select 0, %s15, %s13
  $region1: #{tpu_custom_call.1} parent=0
    #allocation4 [shape = 'u8[32768]{0}', space=vmem, size = 0x8000, scoped, tag = 'input window, operand 1']
    #allocation5 [shape = 's32[2]{0}', space=sflag, size = 0x8, scoped, tag = 'scoped memory for tpu_custom_call.1']
    #allocation6 [shape = 's32[2]{0}', space=sflag, size = 0x8, scoped, tag = 'scoped memory for tpu_custom_call.1']
    #allocation7 [shape = 'u8[32768]{0}', space=vmem, size = 0x8000, scoped, tag = 'input window, operand 2, single buffered']
    #allocation8 [shape = 's32[1]{0}', space=sflag, size = 0x4, scoped, tag = 'scoped memory for tpu_custom_call.1']
    #allocation9 [shape = 'u8[131072]{0}', space=vmem, size = 0x20000, scoped, tag = 'input window, operand 3, single buffered']
    #allocation10 [shape = 'u8[32768]{0}', space=vmem, size = 0x8000, scoped, tag = 'input window, operand 5, single buffered']
    #allocation11 [shape = 's32[1]{0}', space=sflag, size = 0x4, scoped, tag = 'scoped memory for tpu_custom_call.1']
    #allocation12 [shape = 'u8[32768]{0}', space=vmem, size = 0x8000, scoped, tag = 'input window, operand 7, single buffered']
    #allocation13 [shape = 'u8[65536]{0}', space=vmem, size = 0x10000, scoped, tag = 'output window, operand 0']
    #allocation14 [shape = 'u8[4096]{0}', space=vmem, size = 0x1000, scoped, tag = 'output window, operand 1, single buffered']
    #allocation15 [shape = 's32[1]{0}', space=sflag, size = 0x4, scoped, tag = 'scoped memory for tpu_custom_call.1']
    #allocation16 [shape = 'u8[4096]{0}', space=vmem, size = 0x1000, scoped, tag = 'output window, operand 2, single buffered']
    %17 = vsyncpa [#allocation5], 0
    %s18 = scalar_lea.sflag [#allocation5], 1
    %19 = vsyncpa %s18, 0
    %20 = vsyncpa [#allocation8], 0
    %21 = vsyncpa [#allocation11], 0
    %22 = vsyncpa [#allocation6], 0
    %s23 = scalar_lea.sflag [#allocation6], 1
    %24 = vsyncpa %s23, 0
    %25 = vsyncpa [#allocation15], 0
    loop: start=0, step=1, limit=5
    $region2: #{tpu_custom_call.1} parent=1 // loop_pre_header
      _
    $region3: #{tpu_custom_call.1} parent=1 // loop_header
      %s27 = sphi 0, %s31
      %p28 = scmp.ge.s32.totalorder %s27, 5
      %s34 = sphi 0, %s46
      %s35 = sphi 0, %s42
      %s36 = sphi 0, %s34
      %s37 = sphi 0, %s35
      %s38 = sphi 0, %s36
      %s39 = sphi 0, %s37
      %s49 = sphi 0, %s51
      %s52 = sphi 0, %s49
      %s53 = sphi 0, %s52
      %s69 = sphi 0, %s53
      %s77 = sphi 0, %s79
      %s80 = sphi 0, %s77
      %s81 = sphi 0, %s80
      %s97 = sphi 0, %s81
      %s101 = sphi 0, %s101
      %s103 = sphi 0, %s101
      %s104 = sphi 0, %s103
      %s118 = sphi 0, %s104
      %s122 = sphi 0, %s122
      %s124 = sphi 0, %s122
      %s125 = sphi 0, %s124
      %s139 = sphi 0, %s125
      %s143 = sphi 0, %s143
      %s145 = sphi 0, %s143
      %s146 = sphi 0, %s145
      %s160 = sphi 0, %s146
      %s164 = sphi 0, %s164
      %s166 = sphi 0, %s164
      %s167 = sphi 0, %s166
      %s181 = sphi 0, %s167
      %s185 = sphi 0, %s185
      %s187 = sphi 0, %s185
      %s188 = sphi 0, %s187
      %s202 = sphi 0, %s188
      %s206 = sphi 0, %s206
      %s208 = sphi 0, %s206
      %s209 = sphi 0, %s208
      %s223 = sphi 0, %s209
      %s227 = sphi 0, %s227
      %s229 = sphi 0, %s227
      %s230 = sphi 0, %s229
      %s244 = sphi 0, %s230
      %s252 = sphi 0, %s254
      %s255 = sphi 0, %s252
      %s256 = sphi 0, %s255
      %s272 = sphi 0, %s256
      %s278 = sphi 0, %s280
      %s281 = sphi 0, %s278
      %s282 = sphi 0, %s281
      %s298 = sphi 0, %s282
      %s304 = sphi 0, %s306
      %s307 = sphi 0, %s304
      %s308 = sphi 0, %s307
      %s324 = sphi 0, %s308
    $region4: #{tpu_custom_call.1} parent=1 // loop_header_branch
      %30 = sbr.rel (%p28) target = $region8
    $region5: #{tpu_custom_call.1} parent=1 // loop_body
      %s32 = ssub.s32 %s27, 1
      %s33 = ssub.s32 %s27, 2
      %s40 = sadd.s32 1, %s35
      %p41 = scmp.ge.s32.totalorder %s40, 3
      %s42 = scalar_select %p41, 0, %s40
      %s43 = sadd.s32 1, %s34
      %s44 = scalar_select %p41, %s43, %s34
      %p45 = scmp.ge.s32.totalorder %s44, 1
      %s46 = scalar_select %p45, 0, %s44
      %s47 = ssub.s32 %s34, %s46
      %p48 = scmp.eq.s32.totalorder %s47, 0
      %s50 = sadd.s32 %s49, 1
      %s51 = scalar_select %p48, %s49, %s50
      %p54 = pneg %p48
      %p55 = scmp.eq.s32.totalorder %s27, 2
      %p56 = por %p54, %p55
      %p57 = scmp.ne.s32.totalorder %s49, %s52
      %p58 = scmp.eq.s32.totalorder %s27, 0
      %p59 = por %p57, %p58
      %p60 = scmp.ne.s32.totalorder %s49, %s52
      %p61 = scmp.eq.s32.totalorder %s32, 2
      %p62 = por %p60, %p61
      %p63 = scmp.ne.s32.totalorder %s52, %s53
      %p64 = scmp.eq.s32.totalorder %s32, 0
      %p65 = por %p63, %p64
      %p66 = scmp.ne.s32.totalorder %s52, %s53
      %p67 = scmp.eq.s32.totalorder %s33, 2
      %p68 = por %p66, %p67
      %p70 = scmp.ne.s32.totalorder %s53, %s69
      %p71 = scmp.eq.s32.totalorder %s33, 0
      %p72 = por %p70, %p71
      %s73 = ssub.s32 %s35, %s42
      %s74 = ssub.s32 %s34, %s46
      %s75 = sor.u32 %s73, %s74
      %p76 = scmp.eq.s32.totalorder %s75, 0
      %s78 = sadd.s32 %s77, 1
      %s79 = scalar_select %p76, %s77, %s78
      %p82 = pneg %p76
      %p83 = scmp.eq.s32.totalorder %s27, 2
      %p84 = por %p82, %p83
      %p85 = scmp.ne.s32.totalorder %s77, %s80
      %p86 = scmp.eq.s32.totalorder %s27, 0
      %p87 = por %p85, %p86
      %p88 = scmp.ne.s32.totalorder %s77, %s80
      %p89 = scmp.eq.s32.totalorder %s32, 2
      %p90 = por %p88, %p89
      %p91 = scmp.ne.s32.totalorder %s80, %s81
      %p92 = scmp.eq.s32.totalorder %s32, 0
      %p93 = por %p91, %p92
      %p94 = scmp.ne.s32.totalorder %s80, %s81
      %p95 = scmp.eq.s32.totalorder %s33, 2
      %p96 = por %p94, %p95
      %p98 = scmp.ne.s32.totalorder %s81, %s97
      %p99 = scmp.eq.s32.totalorder %s33, 0
      %p100 = por %p98, %p99
      %s102 = sadd.s32 %s101, 1
      %p105 = scmp.eq.s32.totalorder %s27, 2
      %p106 = scmp.ne.s32.totalorder %s101, %s103
      %p107 = scmp.eq.s32.totalorder %s27, 0
      %p108 = por %p106, %p107
      %p109 = scmp.ne.s32.totalorder %s101, %s103
      %p110 = scmp.eq.s32.totalorder %s32, 2
      %p111 = por %p109, %p110
      %p112 = scmp.ne.s32.totalorder %s103, %s104
      %p113 = scmp.eq.s32.totalorder %s32, 0
      %p114 = por %p112, %p113
      %p115 = scmp.ne.s32.totalorder %s103, %s104
      %p116 = scmp.eq.s32.totalorder %s33, 2
      %p117 = por %p115, %p116
      %p119 = scmp.ne.s32.totalorder %s104, %s118
      %p120 = scmp.eq.s32.totalorder %s33, 0
      %p121 = por %p119, %p120
      %s123 = sadd.s32 %s122, 1
      %p126 = scmp.eq.s32.totalorder %s27, 2
      %p127 = scmp.ne.s32.totalorder %s122, %s124
      %p128 = scmp.eq.s32.totalorder %s27, 0
      %p129 = por %p127, %p128
      %p130 = scmp.ne.s32.totalorder %s122, %s124
      %p131 = scmp.eq.s32.totalorder %s32, 2
      %p132 = por %p130, %p131
      %p133 = scmp.ne.s32.totalorder %s124, %s125
      %p134 = scmp.eq.s32.totalorder %s32, 0
      %p135 = por %p133, %p134
      %p136 = scmp.ne.s32.totalorder %s124, %s125
      %p137 = scmp.eq.s32.totalorder %s33, 2
      %p138 = por %p136, %p137
      %p140 = scmp.ne.s32.totalorder %s125, %s139
      %p141 = scmp.eq.s32.totalorder %s33, 0
      %p142 = por %p140, %p141
      %s144 = sadd.s32 %s143, 1
      %p147 = scmp.eq.s32.totalorder %s27, 2
      %p148 = scmp.ne.s32.totalorder %s143, %s145
      %p149 = scmp.eq.s32.totalorder %s27, 0
      %p150 = por %p148, %p149
      %p151 = scmp.ne.s32.totalorder %s143, %s145
      %p152 = scmp.eq.s32.totalorder %s32, 2
      %p153 = por %p151, %p152
      %p154 = scmp.ne.s32.totalorder %s145, %s146
      %p155 = scmp.eq.s32.totalorder %s32, 0
      %p156 = por %p154, %p155
      %p157 = scmp.ne.s32.totalorder %s145, %s146
      %p158 = scmp.eq.s32.totalorder %s33, 2
      %p159 = por %p157, %p158
      %p161 = scmp.ne.s32.totalorder %s146, %s160
      %p162 = scmp.eq.s32.totalorder %s33, 0
      %p163 = por %p161, %p162
      %s165 = sadd.s32 %s164, 1
      %p168 = scmp.eq.s32.totalorder %s27, 2
      %p169 = scmp.ne.s32.totalorder %s164, %s166
      %p170 = scmp.eq.s32.totalorder %s27, 0
      %p171 = por %p169, %p170
      %p172 = scmp.ne.s32.totalorder %s164, %s166
      %p173 = scmp.eq.s32.totalorder %s32, 2
      %p174 = por %p172, %p173
      %p175 = scmp.ne.s32.totalorder %s166, %s167
      %p176 = scmp.eq.s32.totalorder %s32, 0
      %p177 = por %p175, %p176
      %p178 = scmp.ne.s32.totalorder %s166, %s167
      %p179 = scmp.eq.s32.totalorder %s33, 2
      %p180 = por %p178, %p179
      %p182 = scmp.ne.s32.totalorder %s167, %s181
      %p183 = scmp.eq.s32.totalorder %s33, 0
      %p184 = por %p182, %p183
      %s186 = sadd.s32 %s185, 1
      %p189 = scmp.eq.s32.totalorder %s27, 2
      %p190 = scmp.ne.s32.totalorder %s185, %s187
      %p191 = scmp.eq.s32.totalorder %s27, 0
      %p192 = por %p190, %p191
      %p193 = scmp.ne.s32.totalorder %s185, %s187
      %p194 = scmp.eq.s32.totalorder %s32, 2
      %p195 = por %p193, %p194
      %p196 = scmp.ne.s32.totalorder %s187, %s188
      %p197 = scmp.eq.s32.totalorder %s32, 0
      %p198 = por %p196, %p197
      %p199 = scmp.ne.s32.totalorder %s187, %s188
      %p200 = scmp.eq.s32.totalorder %s33, 2
      %p201 = por %p199, %p200
      %p203 = scmp.ne.s32.totalorder %s188, %s202
      %p204 = scmp.eq.s32.totalorder %s33, 0
      %p205 = por %p203, %p204
      %s207 = sadd.s32 %s206, 1
      %p210 = scmp.eq.s32.totalorder %s27, 2
      %p211 = scmp.ne.s32.totalorder %s206, %s208
      %p212 = scmp.eq.s32.totalorder %s27, 0
      %p213 = por %p211, %p212
      %p214 = scmp.ne.s32.totalorder %s206, %s208
      %p215 = scmp.eq.s32.totalorder %s32, 2
      %p216 = por %p214, %p215
      %p217 = scmp.ne.s32.totalorder %s208, %s209
      %p218 = scmp.eq.s32.totalorder %s32, 0
      %p219 = por %p217, %p218
      %p220 = scmp.ne.s32.totalorder %s208, %s209
      %p221 = scmp.eq.s32.totalorder %s33, 2
      %p222 = por %p220, %p221
      %p224 = scmp.ne.s32.totalorder %s209, %s223
      %p225 = scmp.eq.s32.totalorder %s33, 0
      %p226 = por %p224, %p225
      %s228 = sadd.s32 %s227, 1
      %p231 = scmp.eq.s32.totalorder %s27, 2
      %p232 = scmp.ne.s32.totalorder %s227, %s229
      %p233 = scmp.eq.s32.totalorder %s27, 0
      %p234 = por %p232, %p233
      %p235 = scmp.ne.s32.totalorder %s227, %s229
      %p236 = scmp.eq.s32.totalorder %s32, 2
      %p237 = por %p235, %p236
      %p238 = scmp.ne.s32.totalorder %s229, %s230
      %p239 = scmp.eq.s32.totalorder %s32, 0
      %p240 = por %p238, %p239
      %p241 = scmp.ne.s32.totalorder %s229, %s230
      %p242 = scmp.eq.s32.totalorder %s33, 2
      %p243 = por %p241, %p242
      %p245 = scmp.ne.s32.totalorder %s230, %s244
      %p246 = scmp.eq.s32.totalorder %s33, 0
      %p247 = por %p245, %p246
      %s248 = ssub.s32 %s34, %s46
      %s249 = ssub.s32 %s35, %s42
      %s250 = sor.u32 %s248, %s249
      %p251 = scmp.eq.s32.totalorder %s250, 0
      %s253 = sadd.s32 %s252, 1
      %s254 = scalar_select %p251, %s252, %s253
      %p257 = pneg %p251
      %p258 = scmp.eq.s32.totalorder %s27, 2
      %p259 = por %p257, %p258
      %p260 = scmp.ne.s32.totalorder %s252, %s255
      %p261 = scmp.eq.s32.totalorder %s27, 0
      %p262 = por %p260, %p261
      %p263 = scmp.ne.s32.totalorder %s252, %s255
      %p264 = scmp.eq.s32.totalorder %s32, 2
      %p265 = por %p263, %p264
      %p266 = scmp.ne.s32.totalorder %s255, %s256
      %p267 = scmp.eq.s32.totalorder %s32, 0
      %p268 = por %p266, %p267
      %p269 = scmp.ne.s32.totalorder %s255, %s256
      %p270 = scmp.eq.s32.totalorder %s33, 2
      %p271 = por %p269, %p270
      %p273 = scmp.ne.s32.totalorder %s256, %s272
      %p274 = scmp.eq.s32.totalorder %s33, 0
      %p275 = por %p273, %p274
      %s276 = ssub.s32 %s34, %s46
      %p277 = scmp.eq.s32.totalorder %s276, 0
      %s279 = sadd.s32 %s278, 1
      %s280 = scalar_select %p277, %s278, %s279
      %p283 = pneg %p277
      %p284 = scmp.eq.s32.totalorder %s27, 2
      %p285 = por %p283, %p284
      %p286 = scmp.ne.s32.totalorder %s278, %s281
      %p287 = scmp.eq.s32.totalorder %s27, 0
      %p288 = por %p286, %p287
      %p289 = scmp.ne.s32.totalorder %s278, %s281
      %p290 = scmp.eq.s32.totalorder %s32, 2
      %p291 = por %p289, %p290
      %p292 = scmp.ne.s32.totalorder %s281, %s282
      %p293 = scmp.eq.s32.totalorder %s32, 0
      %p294 = por %p292, %p293
      %p295 = scmp.ne.s32.totalorder %s281, %s282
      %p296 = scmp.eq.s32.totalorder %s33, 2
      %p297 = por %p295, %p296
      %p299 = scmp.ne.s32.totalorder %s282, %s298
      %p300 = scmp.eq.s32.totalorder %s33, 0
      %p301 = por %p299, %p300
      %s302 = ssub.s32 %s34, %s46
      %p303 = scmp.eq.s32.totalorder %s302, 0
      %s305 = sadd.s32 %s304, 1
      %s306 = scalar_select %p303, %s304, %s305
      %p309 = pneg %p303
      %p310 = scmp.eq.s32.totalorder %s27, 2
      %p311 = por %p309, %p310
      %p312 = scmp.ne.s32.totalorder %s304, %s307
      %p313 = scmp.eq.s32.totalorder %s27, 0
      %p314 = por %p312, %p313
      %p315 = scmp.ne.s32.totalorder %s304, %s307
      %p316 = scmp.eq.s32.totalorder %s32, 2
      %p317 = por %p315, %p316
      %p318 = scmp.ne.s32.totalorder %s307, %s308
      %p319 = scmp.eq.s32.totalorder %s32, 0
      %p320 = por %p318, %p319
      %p321 = scmp.ne.s32.totalorder %s307, %s308
      %p322 = scmp.eq.s32.totalorder %s33, 2
      %p323 = por %p321, %p322
      %p325 = scmp.ne.s32.totalorder %s308, %s324
      %p326 = scmp.eq.s32.totalorder %s33, 0
      %p327 = por %p325, %p326
      %p328 = scmp.le.s32.totalorder 1, %s27
      %p329 = scmp.lt.s32.totalorder %s27, 4
      %p330 = pnand %p328, %p329
      %p331 = pneg %p330
      // Predicated region
      $region9: #{tpu_custom_call.1} parent=5 // pred_check
        _
      $region10: #{tpu_custom_call.1} parent=5 // pred_check_branch
        %333 = sbr.rel (%p330) target = $region12
      $region11: #{tpu_custom_call.1} parent=5 // pred_region
        %s334 = ssub.s32 %s27, 1
        // Predicated region
        $region13: #{tpu_custom_call.1} parent=11 // pred_check
          %p335 = pneg %p65
        $region14: #{tpu_custom_call.1} parent=11 // pred_check_branch
          %337 = sbr.rel (%p335) target = $region16
        $region15: #{tpu_custom_call.1} parent=11 // pred_region
          %p338 = scmp.lt.s32.totalorder %s36, 0
          %s339 = scalar_select %p338, %s36, 0
          %s340 = smul.addr %s339, 8
          %s341 = scalar_lea.vmem %s0, %s340
        $region16: #{tpu_custom_call.1} parent=11 // pred_fallthru
          _
        // Predicated region
        $region17: #{tpu_custom_call.1} parent=11 // pred_check
          %p342 = pneg %p114
        $region18: #{tpu_custom_call.1} parent=11 // pred_check_branch
          %344 = sbr.rel (%p342) target = $region20
        $region19: #{tpu_custom_call.1} parent=11 // pred_region
          %s346 = ssub.s32 1024, 1024
          %347 = vsyncadd [#allocation8], %s346
          %s348 = sshll.u32 [#allocation7], 4
          %s349 = int_to_ptr.vmem [resolvable:$true] %s348
          %354 = dma.hbm_to_vmem [thread:$0]  %s2, 1024, %s349, [#allocation8], 256, 256, 16
        $region20: #{tpu_custom_call.1} parent=11 // pred_fallthru
          _
        // Predicated region
        $region21: #{tpu_custom_call.1} parent=11 // pred_check
          %p355 = pneg %p135
        $region22: #{tpu_custom_call.1} parent=11 // pred_check_branch
          %357 = sbr.rel (%p355) target = $region24
        $region23: #{tpu_custom_call.1} parent=11 // pred_region
          %s359 = ssub.s32 4096, 4096
          %360 = vsyncadd [#allocation8], %s359
          %s361 = sshll.u32 [#allocation9], 4
          %s362 = int_to_ptr.vmem [resolvable:$true] %s361
          %367 = dma.hbm_to_vmem [thread:$0]  %s3, 4096, %s362, [#allocation8], 256, 256, 16
        $region24: #{tpu_custom_call.1} parent=11 // pred_fallthru
          _
        // Predicated region
        $region25: #{tpu_custom_call.1} parent=11 // pred_check
          %p368 = pneg %p156
        $region26: #{tpu_custom_call.1} parent=11 // pred_check_branch
          %370 = sbr.rel (%p368) target = $region28
        $region27: #{tpu_custom_call.1} parent=11 // pred_region
          _
        $region28: #{tpu_custom_call.1} parent=11 // pred_fallthru
          _
        // Predicated region
        $region29: #{tpu_custom_call.1} parent=11 // pred_check
          %p371 = pneg %p177
        $region30: #{tpu_custom_call.1} parent=11 // pred_check_branch
          %373 = sbr.rel (%p371) target = $region32
        $region31: #{tpu_custom_call.1} parent=11 // pred_region
          %s375 = ssub.s32 1024, 1024
          %376 = vsyncadd [#allocation11], %s375
          %s377 = sshll.u32 [#allocation10], 4
          %s378 = int_to_ptr.vmem [resolvable:$true] %s377
          %383 = dma.hbm_to_vmem [thread:$0]  %s5, 1024, %s378, [#allocation11], 64, 64, 4
        $region32: #{tpu_custom_call.1} parent=11 // pred_fallthru
          _
        // Predicated region
        $region33: #{tpu_custom_call.1} parent=11 // pred_check
          %p384 = pneg %p198
        $region34: #{tpu_custom_call.1} parent=11 // pred_check_branch
          %386 = sbr.rel (%p384) target = $region36
        $region35: #{tpu_custom_call.1} parent=11 // pred_region
          _
        $region36: #{tpu_custom_call.1} parent=11 // pred_fallthru
          _
        // Predicated region
        $region37: #{tpu_custom_call.1} parent=11 // pred_check
          %p387 = pneg %p219
        $region38: #{tpu_custom_call.1} parent=11 // pred_check_branch
          %389 = sbr.rel (%p387) target = $region40
        $region39: #{tpu_custom_call.1} parent=11 // pred_region
          %s391 = ssub.s32 1024, 1024
          %392 = vsyncadd [#allocation11], %s391
          %s393 = sshll.u32 [#allocation12], 4
          %s394 = int_to_ptr.vmem [resolvable:$true] %s393
          %399 = dma.hbm_to_vmem [thread:$0]  %s7, 1024, %s394, [#allocation11], 64, 64, 4
        $region40: #{tpu_custom_call.1} parent=11 // pred_fallthru
          _
        // Predicated region
        $region41: #{tpu_custom_call.1} parent=11 // pred_check
          %p400 = pneg %p240
        $region42: #{tpu_custom_call.1} parent=11 // pred_check_branch
          %402 = sbr.rel (%p400) target = $region44
        $region43: #{tpu_custom_call.1} parent=11 // pred_region
          _
        $region44: #{tpu_custom_call.1} parent=11 // pred_fallthru
          _
      $region12: #{tpu_custom_call.1} parent=5 // pred_fallthru
        _
      %p403 = scmp.lt.s32.totalorder %s27, 3
      // Predicated region
      $region45: #{tpu_custom_call.1} parent=5 // pred_check
        %p404 = pneg %p403
      $region46: #{tpu_custom_call.1} parent=5 // pred_check_branch
        %406 = sbr.rel (%p404) target = $region48
      $region47: #{tpu_custom_call.1} parent=5 // pred_region
        // Predicated region
        $region49: #{tpu_custom_call.1} parent=47 // pred_check
          %p407 = pneg %p87
        $region50: #{tpu_custom_call.1} parent=47 // pred_check_branch
          %409 = sbr.rel (%p407) target = $region52
        $region51: #{tpu_custom_call.1} parent=47 // pred_region
          %s410 = sand.u32 %s77, 1
          %s411 = scalar_lea.sflag [#allocation5], %s410
          %s412 = sand.u32 %s77, 1
          %s413 = smul.addr %s412, 32
          %s414 = scalar_lea.vmem [#allocation4], %s413
          %s415 = smul.u32 8, %s35
          %s417 = ssub.s32 512, 512
          %418 = vsyncadd %s411, %s417
          %s419 = sadd.s32 %s34, %s415
          %s420 = smul.addr %s419, 64
          %s421 = scalar_lea.hbm %s1, %s420
          %s422 = sshll.u32 %s414, 4
          %s423 = int_to_ptr.vmem [resolvable:$true] %s422
          %428 = dma.hbm_to_vmem [thread:$0]  %s421, 512, %s423, %s411, 64, 64, 4
        $region52: #{tpu_custom_call.1} parent=47 // pred_fallthru
          _
      $region48: #{tpu_custom_call.1} parent=5 // pred_fallthru
        _
      %p429 = scmp.le.s32.totalorder 1, %s27
      %p430 = scmp.lt.s32.totalorder %s27, 4
      %p431 = pnand %p429, %p430
      %p432 = pneg %p431
      // Predicated region
      $region53: #{tpu_custom_call.1} parent=5 // pred_check
        _
      $region54: #{tpu_custom_call.1} parent=5 // pred_check_branch
        %434 = sbr.rel (%p431) target = $region56
      $region55: #{tpu_custom_call.1} parent=5 // pred_region
        %s435 = ssub.s32 %s27, 1
        %s436 = sand.u32 %s80, 1
        %s437 = scalar_lea.sflag [#allocation5], %s436
        %s438 = sand.u32 %s80, 1
        %s439 = smul.addr %s438, 32
        %s440 = scalar_lea.vmem [#allocation4], %s439
        // Predicated region
        $region57: #{tpu_custom_call.1} parent=55 // pred_check
          %p441 = pneg %p93
        $region58: #{tpu_custom_call.1} parent=55 // pred_check_branch
          %443 = sbr.rel (%p441) target = $region60
        $region59: #{tpu_custom_call.1} parent=55 // pred_region
          %444 = dma.done %s437, 512
        $region60: #{tpu_custom_call.1} parent=55 // pred_fallthru
          _
        // Predicated region
        $region61: #{tpu_custom_call.1} parent=55 // pred_check
          %p445 = pneg %p114
        $region62: #{tpu_custom_call.1} parent=55 // pred_check_branch
          %447 = sbr.rel (%p445) target = $region64
        $region63: #{tpu_custom_call.1} parent=55 // pred_region
          %448 = dma.done [#allocation8], 1024
        $region64: #{tpu_custom_call.1} parent=55 // pred_fallthru
          _
        // Predicated region
        $region65: #{tpu_custom_call.1} parent=55 // pred_check
          %p449 = pneg %p135
        $region66: #{tpu_custom_call.1} parent=55 // pred_check_branch
          %451 = sbr.rel (%p449) target = $region68
        $region67: #{tpu_custom_call.1} parent=55 // pred_region
          %452 = dma.done [#allocation8], 4096
        $region68: #{tpu_custom_call.1} parent=55 // pred_fallthru
          _
        // Predicated region
        $region69: #{tpu_custom_call.1} parent=55 // pred_check
          %p453 = pneg %p177
        $region70: #{tpu_custom_call.1} parent=55 // pred_check_branch
          %455 = sbr.rel (%p453) target = $region72
        $region71: #{tpu_custom_call.1} parent=55 // pred_region
          %456 = dma.done [#allocation11], 1024
        $region72: #{tpu_custom_call.1} parent=55 // pred_fallthru
          _
        // Predicated region
        $region73: #{tpu_custom_call.1} parent=55 // pred_check
          %p457 = pneg %p219
        $region74: #{tpu_custom_call.1} parent=55 // pred_check_branch
          %459 = sbr.rel (%p457) target = $region76
        $region75: #{tpu_custom_call.1} parent=55 // pred_region
          %460 = dma.done [#allocation11], 1024
        $region76: #{tpu_custom_call.1} parent=55 // pred_fallthru
          _
        %p461 = scmp.lt.s32.totalorder %s36, 0
        %s462 = scalar_select %p461, %s36, 0
        %s463 = smul.addr %s462, 8
        %s464 = scalar_lea.vmem %s0, %s463
        %p465 = pneg %p65
        %p466 = pneg %p62
        %s467 = sand.u32 %s80, 1
        %s468 = scalar_lea.sflag [#allocation5], %s467
        %s469 = sand.u32 %s80, 1
        %s470 = smul.addr %s469, 32
        %s471 = scalar_lea.vmem [#allocation4], %s470
        %p472 = pneg %p93
        %p473 = pneg %p90
        %p474 = pneg %p114
        %p475 = pneg %p111
        %p476 = pneg %p135
        %p477 = pneg %p132
        %p478 = pneg %p156
        %p479 = pneg %p153
        %p480 = pneg %p177
        %p481 = pneg %p174
        %p482 = pneg %p198
        %p483 = pneg %p195
        %p484 = pneg %p219
        %p485 = pneg %p216
        %p486 = pneg %p240
        %p487 = pneg %p237
        %p488 = pneg %p268
        %p489 = pneg %p265
        %s490 = sand.u32 %s255, 1
        %s491 = scalar_lea.sflag [#allocation6], %s490
        %s492 = sand.u32 %s255, 1
        %s493 = smul.addr %s492, 64
        %s494 = scalar_lea.vmem [#allocation13], %s493
        %p495 = pneg %p294
        %p496 = pneg %p291
        %p497 = pneg %p320
        %p498 = pneg %p317
        %p499 = scmp.lt.s32.totalorder %s36, 0
        %s500 = scalar_select %p499, %s36, 0
        %s501 = smul.addr %s500, 8
        %s502 = scalar_lea.vmem %s0, %s501
        %s503 = smul.u32 8, %s37
        %s504 = smul.u32 8, %s36
        %p506 = scmp.eq.s32.totalorder %s37, 0
        // Predicated region
        $region77: #{tpu_custom_call.1} parent=55 // pred_check
          %p507 = pneg %p506
        $region78: #{tpu_custom_call.1} parent=55 // pred_check_branch
          %509 = sbr.rel (%p507) target = $region80
        $region79: #{tpu_custom_call.1} parent=55 // pred_region
          %510 = vst [vmem:[#allocation2] sm:$0xff] 0.0
          %511 = vst [vmem:[#allocation3] sm:$0xff] 0.0
        $region80: #{tpu_custom_call.1} parent=55 // pred_fallthru
          _
        %v512 = vld [vmem:[%s440] sm:$0xf]
        %v513 = vld [vmem:[%s440 + $0x4] sm:$0xf]
        %v514 = vld [vmem:[%s440 + $0x8] sm:$0xf]
        %v515 = vld [vmem:[%s440 + $0xc] sm:$0xf]
        %v516 = vld [vmem:[%s440 + $0x10] sm:$0xf]
        %v517 = vld [vmem:[%s440 + $0x14] sm:$0xf]
        %v518 = vld [vmem:[%s440 + $0x18] sm:$0xf]
        %v519 = vld [vmem:[%s440 + $0x1c] sm:$0xf]
        %v520 = vld [vmem:[#allocation7] sm:$0xff]
        %v521 = vld [vmem:[#allocation7 + $0x8] sm:$0xff]
        %v522 = vld [vmem:[#allocation7 + $0x10] sm:$0xff]
        %v523 = vld [vmem:[#allocation7 + $0x18] sm:$0xff]
        %v524 = vld [vmem:[#allocation7 + $0x20] sm:$0xff]
        %v525 = vld [vmem:[#allocation7 + $0x28] sm:$0xff]
        %v526 = vld [vmem:[#allocation7 + $0x30] sm:$0xff]
        %v527 = vld [vmem:[#allocation7 + $0x38] sm:$0xff]
        %v528 = vld [vmem:[%s4] sm:$0xf]
        %v530 = vlaneseq
        %v531 = vshrl.u32 %v530, 7
        %v532 = vsub.s32 0, %v531
        %v533 = vrot.slane %v528, %v532
        %v534 = vlaneseq
        %v535 = vshrl.u32 %v534, 7
        %v536 = vsub.s32 1, %v535
        %v537 = vrot.slane %v528, %v536
        %v538 = vlaneseq
        %v539 = vshrl.u32 %v538, 7
        %v540 = vsub.s32 2, %v539
        %v541 = vrot.slane %v528, %v540
        %v542 = vlaneseq
        %v543 = vshrl.u32 %v542, 7
        %v544 = vsub.s32 3, %v543
        %v545 = vrot.slane %v528, %v544
        %v558 = vunpack.c.l.b16 %v512
        %v559 = vunpack.c.l.b16 %v513
        %v560 = vunpack.c.l.b16 %v514
        %v561 = vunpack.c.l.b16 %v515
        %v562 = vunpack.c.l.b16 %v516
        %v563 = vunpack.c.l.b16 %v517
        %v564 = vunpack.c.l.b16 %v518
        %v565 = vunpack.c.l.b16 %v519
        %v566 = vpack.c.b16 %v559, %v558
        %v567 = vpack.c.b16 %v561, %v560
        %v568 = vpack.c.b16 %v563, %v562
        %v569 = vpack.c.b16 %v565, %v564
        %v578 = vunpack.c.l.b16 %v520
        %v579 = vunpack.c.h.b16 %v520
        %v580 = vunpack.c.l.b16 %v521
        %v581 = vunpack.c.h.b16 %v521
        %v582 = vunpack.c.l.b16 %v522
        %v583 = vunpack.c.h.b16 %v522
        %v584 = vunpack.c.l.b16 %v523
        %v585 = vunpack.c.h.b16 %v523
        %v586 = vunpack.c.l.b16 %v524
        %v587 = vunpack.c.h.b16 %v524
        %v588 = vunpack.c.l.b16 %v525
        %v589 = vunpack.c.h.b16 %v525
        %v590 = vunpack.c.l.b16 %v526
        %v591 = vunpack.c.h.b16 %v526
        %v592 = vunpack.c.l.b16 %v527
        %v593 = vunpack.c.h.b16 %v527
        %v594 = vpack.c.b16 %v582, %v578
        %v595 = vpack.c.b16 %v583, %v579
        %v596 = vpack.c.b16 %v584, %v580
        %v597 = vpack.c.b16 %v585, %v581
        %v598 = vpack.c.b16 %v590, %v586
        %v599 = vpack.c.b16 %v591, %v587
        %v600 = vpack.c.b16 %v592, %v588
        %v601 = vpack.c.b16 %v593, %v589
        %vm610 = vcmask 261120
        %v612 = vsel %vm610, %v566, 0
        %v615 = vsel %vm610, %v567, 0
        %v618 = vsel %vm610, %v568, 0
        %v621 = vsel %vm610, %v569, 0
        %623 = vmatprep.subr.bf16.mxu0 %v595
        %624 = vmatpush1.bf16.msra.mxu0 %v594
        %625 = vmatprep.subr.bf16.mxu0 %v599
        %626 = vmatpush1.bf16.msra.mxu0 %v598
        %627 = vmatprep.subr.bf16.mxu0 0
        %628 = vmatpush1.bf16.msra.mxu0 0
        %629 = vmatprep.subr.bf16.mxu0 0
        %630 = vmatpush1.bf16.msra.mxu0 0
        %631 = vmatprep.subr.bf16.mxu0 0
        %632 = vmatpush1.bf16.msra.mxu0 0
        %633 = vmatprep.subr.bf16.mxu0 0
        %634 = vmatpush1.bf16.msra.mxu0 0
        %635 = vmatprep.subr.bf16.mxu0 0
        %636 = vmatpush1.bf16.msra.mxu0 0
        %637 = vmatprep.subr.bf16.mxu0 0
        %638 = vmatpush1.bf16.msra.mxu0 0
        %639 = vmatprep.subr.bf16.mxu0 0
        %640 = vmatpush1.bf16.msra.mxu0 0
        %641 = vmatprep.subr.bf16.mxu0 0
        %642 = vmatpush1.bf16.msra.mxu0 0
        %643 = vmatprep.subr.bf16.mxu0 0
        %644 = vmatpush1.bf16.msra.mxu0 0
        %645 = vmatprep.subr.bf16.mxu0 0
        %646 = vmatpush1.bf16.msra.mxu0 0
        %647 = vmatprep.subr.bf16.mxu0 0
        %648 = vmatpush1.bf16.msra.mxu0 0
        %649 = vmatprep.subr.bf16.mxu0 0
        %650 = vmatpush1.bf16.msra.mxu0 0
        %651 = vmatprep.subr.bf16.mxu0 0
        %652 = vmatpush1.bf16.msra.mxu0 0
        %653 = vmatprep.subr.bf16.mxu0 0
        %654 = vmatpush1.bf16.msra.mxu0 0
        %655 = vmatprep.mubr.bf16.mxu0 0
        %656 = vmatmul.mubr.bf16.gmra.mrb[0].mxu0 %v612
        %v657 = vpop.f32.mrb[0].mxu0
        %v658 = vadd.f32 %v533, %v657
        %v659 = vpop.f32.mrb[0].mxu0
        %v660 = vadd.f32 %v537, %v659
        %v661 = vpop.f32.mrb[0].mxu0
        %v662 = vadd.f32 %v533, %v661
        %v663 = vpop.f32.mrb[0].mxu0
        %v664 = vadd.f32 %v537, %v663
        %665 = vmatprep.mubr.bf16.mxu0 0
        %666 = vmatmul.mubr.bf16.gmra.mrb[0].mxu0 %v615
        %v667 = vpop.f32.mrb[0].mxu0
        %v668 = vadd.f32 %v533, %v667
        %v669 = vpop.f32.mrb[0].mxu0
        %v670 = vadd.f32 %v537, %v669
        %v671 = vpop.f32.mrb[0].mxu0
        %v672 = vadd.f32 %v533, %v671
        %v673 = vpop.f32.mrb[0].mxu0
        %v674 = vadd.f32 %v537, %v673
        %675 = vmatprep.mubr.bf16.mxu0 0
        %676 = vmatmul.mubr.bf16.gmra.mrb[0].mxu0 %v618
        %v677 = vpop.f32.mrb[0].mxu0
        %v678 = vadd.f32 %v533, %v677
        %v679 = vpop.f32.mrb[0].mxu0
        %v680 = vadd.f32 %v537, %v679
        %v681 = vpop.f32.mrb[0].mxu0
        %v682 = vadd.f32 %v533, %v681
        %v683 = vpop.f32.mrb[0].mxu0
        %v684 = vadd.f32 %v537, %v683
        %685 = vmatprep.mubr.bf16.mxu0 0
        %686 = vmatmul.mubr.bf16.gmra.mrb[0].mxu0 %v621
        %v687 = vpop.f32.mrb[0].mxu0
        %v688 = vadd.f32 %v533, %v687
        %v689 = vpop.f32.mrb[0].mxu0
        %v690 = vadd.f32 %v537, %v689
        %v691 = vpop.f32.mrb[0].mxu0
        %v692 = vadd.f32 %v533, %v691
        %v693 = vpop.f32.mrb[0].mxu0
        %v694 = vadd.f32 %v537, %v693
        %695 = vdwg.mxu0
        %696 = vmatprep.subr.bf16.mxu0 %v597
        %697 = vmatpush1.bf16.msra.mxu0 %v596
        %698 = vmatprep.subr.bf16.mxu0 %v601
        %699 = vmatpush1.bf16.msra.mxu0 %v600
        %700 = vmatprep.subr.bf16.mxu0 0
        %701 = vmatpush1.bf16.msra.mxu0 0
        %702 = vmatprep.subr.bf16.mxu0 0
        %703 = vmatpush1.bf16.msra.mxu0 0
        %704 = vmatprep.subr.bf16.mxu0 0
        %705 = vmatpush1.bf16.msra.mxu0 0
        %706 = vmatprep.subr.bf16.mxu0 0
        %707 = vmatpush1.bf16.msra.mxu0 0
        %708 = vmatprep.subr.bf16.mxu0 0
        %709 = vmatpush1.bf16.msra.mxu0 0
        %710 = vmatprep.subr.bf16.mxu0 0
        %711 = vmatpush1.bf16.msra.mxu0 0
        %712 = vmatprep.subr.bf16.mxu0 0
        %713 = vmatpush1.bf16.msra.mxu0 0
        %714 = vmatprep.subr.bf16.mxu0 0
        %715 = vmatpush1.bf16.msra.mxu0 0
        %716 = vmatprep.subr.bf16.mxu0 0
        %717 = vmatpush1.bf16.msra.mxu0 0
        %718 = vmatprep.subr.bf16.mxu0 0
        %719 = vmatpush1.bf16.msra.mxu0 0
        %720 = vmatprep.subr.bf16.mxu0 0
        %721 = vmatpush1.bf16.msra.mxu0 0
        %722 = vmatprep.subr.bf16.mxu0 0
        %723 = vmatpush1.bf16.msra.mxu0 0
        %724 = vmatprep.subr.bf16.mxu0 0
        %725 = vmatpush1.bf16.msra.mxu0 0
        %726 = vmatprep.subr.bf16.mxu0 0
        %727 = vmatpush1.bf16.msra.mxu0 0
        %728 = vmatprep.mubr.bf16.mxu0 0
        %729 = vmatmul.mubr.bf16.gmra.mrb[0].mxu0 %v612
        %v730 = vpop.f32.mrb[0].mxu0
        %v731 = vadd.f32 %v541, %v730
        %v732 = vpop.f32.mrb[0].mxu0
        %v733 = vadd.f32 %v545, %v732
        %v734 = vpop.f32.mrb[0].mxu0
        %v735 = vadd.f32 %v541, %v734
        %v736 = vpop.f32.mrb[0].mxu0
        %v737 = vadd.f32 %v545, %v736
        %738 = vmatprep.mubr.bf16.mxu0 0
        %739 = vmatmul.mubr.bf16.gmra.mrb[0].mxu0 %v615
        %v740 = vpop.f32.mrb[0].mxu0
        %v741 = vadd.f32 %v541, %v740
        %v742 = vpop.f32.mrb[0].mxu0
        %v743 = vadd.f32 %v545, %v742
        %v744 = vpop.f32.mrb[0].mxu0
        %v745 = vadd.f32 %v541, %v744
        %v746 = vpop.f32.mrb[0].mxu0
        %v747 = vadd.f32 %v545, %v746
        %748 = vmatprep.mubr.bf16.mxu0 0
        %749 = vmatmul.mubr.bf16.gmra.mrb[0].mxu0 %v618
        %v750 = vpop.f32.mrb[0].mxu0
        %v751 = vadd.f32 %v541, %v750
        %v752 = vpop.f32.mrb[0].mxu0
        %v753 = vadd.f32 %v545, %v752
        %v754 = vpop.f32.mrb[0].mxu0
        %v755 = vadd.f32 %v541, %v754
        %v756 = vpop.f32.mrb[0].mxu0
        %v757 = vadd.f32 %v545, %v756
        %758 = vmatprep.mubr.bf16.mxu0 0
        %759 = vmatmul.mubr.bf16.gmra.mrb[0].mxu0 %v621
        %v760 = vpop.f32.mrb[0].mxu0
        %v761 = vadd.f32 %v541, %v760
        %v762 = vpop.f32.mrb[0].mxu0
        %v763 = vadd.f32 %v545, %v762
        %v764 = vpop.f32.mrb[0].mxu0
        %v765 = vadd.f32 %v541, %v764
        %v766 = vpop.f32.mrb[0].mxu0
        %v767 = vadd.f32 %v545, %v766
        %768 = vdwg.mxu0
        %v769 = vld [vmem:[#allocation9] sm:$0xff]
        %v770 = vld [vmem:[#allocation9 + $0x8] sm:$0xff]
        %v771 = vld [vmem:[#allocation9 + $0x10] sm:$0xff]
        %v772 = vld [vmem:[#allocation9 + $0x18] sm:$0xff]
        %v773 = vld [vmem:[#allocation9 + $0x20] sm:$0xff]
        %v774 = vld [vmem:[#allocation9 + $0x28] sm:$0xff]
        %v775 = vld [vmem:[#allocation9 + $0x30] sm:$0xff]
        %v776 = vld [vmem:[#allocation9 + $0x38] sm:$0xff]
        %v777 = vld [vmem:[#allocation9 + $0x40] sm:$0xff]
        %v778 = vld [vmem:[#allocation9 + $0x48] sm:$0xff]
        %v779 = vld [vmem:[#allocation9 + $0x50] sm:$0xff]
        %v780 = vld [vmem:[#allocation9 + $0x58] sm:$0xff]
        %v781 = vld [vmem:[#allocation9 + $0x60] sm:$0xff]
        %v782 = vld [vmem:[#allocation9 + $0x68] sm:$0xff]
        %v783 = vld [vmem:[#allocation9 + $0x70] sm:$0xff]
        %v784 = vld [vmem:[#allocation9 + $0x78] sm:$0xff]
        %v785 = vld [vmem:[#allocation9 + $0x80] sm:$0xff]
        %v786 = vld [vmem:[#allocation9 + $0x88] sm:$0xff]
        %v787 = vld [vmem:[#allocation9 + $0x90] sm:$0xff]
        %v788 = vld [vmem:[#allocation9 + $0x98] sm:$0xff]
        %v789 = vld [vmem:[#allocation9 + $0xa0] sm:$0xff]
        %v790 = vld [vmem:[#allocation9 + $0xa8] sm:$0xff]
        %v791 = vld [vmem:[#allocation9 + $0xb0] sm:$0xff]
        %v792 = vld [vmem:[#allocation9 + $0xb8] sm:$0xff]
        %v793 = vld [vmem:[#allocation9 + $0xc0] sm:$0xff]
        %v794 = vld [vmem:[#allocation9 + $0xc8] sm:$0xff]
        %v795 = vld [vmem:[#allocation9 + $0xd0] sm:$0xff]
        %v796 = vld [vmem:[#allocation9 + $0xd8] sm:$0xff]
        %v797 = vld [vmem:[#allocation9 + $0xe0] sm:$0xff]
        %v798 = vld [vmem:[#allocation9 + $0xe8] sm:$0xff]
        %v799 = vld [vmem:[#allocation9 + $0xf0] sm:$0xff]
        %v800 = vld [vmem:[#allocation9 + $0xf8] sm:$0xff]
        %v801 = vld [vmem:[%s502] sm:$0xff]
        %s802 = smul.u32 %s37, 8
        %v803 = vld [vmem:[#allocation2] sm:$0xff]
        %v804 = vld [vmem:[#allocation3] sm:$0xff]
        %v805 = vpack.c.bf16 %v803, %v803
        %v838 = vunpack.c.l.b16 %v769
        %v839 = vunpack.c.h.b16 %v769
        %v840 = vunpack.c.l.b16 %v770
        %v841 = vunpack.c.h.b16 %v770
        %v842 = vunpack.c.l.b16 %v771
        %v843 = vunpack.c.h.b16 %v771
        %v844 = vunpack.c.l.b16 %v772
        %v845 = vunpack.c.h.b16 %v772
        %v846 = vunpack.c.l.b16 %v773
        %v847 = vunpack.c.h.b16 %v773
        %v848 = vunpack.c.l.b16 %v774
        %v849 = vunpack.c.h.b16 %v774
        %v850 = vunpack.c.l.b16 %v775
        %v851 = vunpack.c.h.b16 %v775
        %v852 = vunpack.c.l.b16 %v776
        %v853 = vunpack.c.h.b16 %v776
        %v854 = vunpack.c.l.b16 %v777
        %v855 = vunpack.c.h.b16 %v777
        %v856 = vunpack.c.l.b16 %v778
        %v857 = vunpack.c.h.b16 %v778
        %v858 = vunpack.c.l.b16 %v779
        %v859 = vunpack.c.h.b16 %v779
        %v860 = vunpack.c.l.b16 %v780
        %v861 = vunpack.c.h.b16 %v780
        %v862 = vunpack.c.l.b16 %v781
        %v863 = vunpack.c.h.b16 %v781
        %v864 = vunpack.c.l.b16 %v782
        %v865 = vunpack.c.h.b16 %v782
        %v866 = vunpack.c.l.b16 %v783
        %v867 = vunpack.c.h.b16 %v783
        %v868 = vunpack.c.l.b16 %v784
        %v869 = vunpack.c.h.b16 %v784
        %v870 = vunpack.c.l.b16 %v785
        %v871 = vunpack.c.h.b16 %v785
        %v872 = vunpack.c.l.b16 %v786
        %v873 = vunpack.c.h.b16 %v786
        %v874 = vunpack.c.l.b16 %v787
        %v875 = vunpack.c.h.b16 %v787
        %v876 = vunpack.c.l.b16 %v788
        %v877 = vunpack.c.h.b16 %v788
        %v878 = vunpack.c.l.b16 %v789
        %v879 = vunpack.c.h.b16 %v789
        %v880 = vunpack.c.l.b16 %v790
        %v881 = vunpack.c.h.b16 %v790
        %v882 = vunpack.c.l.b16 %v791
        %v883 = vunpack.c.h.b16 %v791
        %v884 = vunpack.c.l.b16 %v792
        %v885 = vunpack.c.h.b16 %v792
        %v886 = vunpack.c.l.b16 %v793
        %v887 = vunpack.c.h.b16 %v793
        %v888 = vunpack.c.l.b16 %v794
        %v889 = vunpack.c.h.b16 %v794
        %v890 = vunpack.c.l.b16 %v795
        %v891 = vunpack.c.h.b16 %v795
        %v892 = vunpack.c.l.b16 %v796
        %v893 = vunpack.c.h.b16 %v796
        %v894 = vunpack.c.l.b16 %v797
        %v895 = vunpack.c.h.b16 %v797
        %v896 = vunpack.c.l.b16 %v798
        %v897 = vunpack.c.h.b16 %v798
        %v898 = vunpack.c.l.b16 %v799
        %v899 = vunpack.c.h.b16 %v799
        %v900 = vunpack.c.l.b16 %v800
        %v901 = vunpack.c.h.b16 %v800
        %v902 = vpack.c.b16 %v842, %v838
        %v903 = vpack.c.b16 %v843, %v839
        %v904 = vpack.c.b16 %v844, %v840
        %v905 = vpack.c.b16 %v845, %v841
        %v906 = vpack.c.b16 %v850, %v846
        %v907 = vpack.c.b16 %v851, %v847
        %v908 = vpack.c.b16 %v852, %v848
        %v909 = vpack.c.b16 %v853, %v849
        %v910 = vpack.c.b16 %v858, %v854
        %v911 = vpack.c.b16 %v859, %v855
        %v912 = vpack.c.b16 %v860, %v856
        %v913 = vpack.c.b16 %v861, %v857
        %v914 = vpack.c.b16 %v866, %v862
        %v915 = vpack.c.b16 %v867, %v863
        %v916 = vpack.c.b16 %v868, %v864
        %v917 = vpack.c.b16 %v869, %v865
        %v918 = vpack.c.b16 %v874, %v870
        %v919 = vpack.c.b16 %v875, %v871
        %v920 = vpack.c.b16 %v876, %v872
        %v921 = vpack.c.b16 %v877, %v873
        %v922 = vpack.c.b16 %v882, %v878
        %v923 = vpack.c.b16 %v883, %v879
        %v924 = vpack.c.b16 %v884, %v880
        %v925 = vpack.c.b16 %v885, %v881
        %v926 = vpack.c.b16 %v890, %v886
        %v927 = vpack.c.b16 %v891, %v887
        %v928 = vpack.c.b16 %v892, %v888
        %v929 = vpack.c.b16 %v893, %v889
        %v930 = vpack.c.b16 %v898, %v894
        %v931 = vpack.c.b16 %v899, %v895
        %v932 = vpack.c.b16 %v900, %v896
        %v933 = vpack.c.b16 %v901, %v897
        %966 = vmatprep.subr.bf16.mxu0 %v903
        %967 = vmatpush1.bf16.msra.mxu0 %v902
        %968 = vmatprep.subr.bf16.mxu0 %v907
        %969 = vmatpush1.bf16.msra.mxu0 %v906
        %970 = vmatprep.subr.bf16.mxu0 %v911
        %971 = vmatpush1.bf16.msra.mxu0 %v910
        %972 = vmatprep.subr.bf16.mxu0 %v915
        %973 = vmatpush1.bf16.msra.mxu0 %v914
        %974 = vmatprep.subr.bf16.mxu0 %v919
        %975 = vmatpush1.bf16.msra.mxu0 %v918
        %976 = vmatprep.subr.bf16.mxu0 %v923
        %977 = vmatpush1.bf16.msra.mxu0 %v922
        %978 = vmatprep.subr.bf16.mxu0 %v927
        %979 = vmatpush1.bf16.msra.mxu0 %v926
        %980 = vmatprep.subr.bf16.mxu0 %v931
        %981 = vmatpush1.bf16.msra.mxu0 %v930
        %982 = vmatprep.subr.bf16.mxu0 0
        %983 = vmatpush1.bf16.msra.mxu0 0
        %984 = vmatprep.subr.bf16.mxu0 0
        %985 = vmatpush1.bf16.msra.mxu0 0
        %986 = vmatprep.subr.bf16.mxu0 0
        %987 = vmatpush1.bf16.msra.mxu0 0
        %988 = vmatprep.subr.bf16.mxu0 0
        %989 = vmatpush1.bf16.msra.mxu0 0
        %990 = vmatprep.subr.bf16.mxu0 0
        %991 = vmatpush1.bf16.msra.mxu0 0
        %992 = vmatprep.subr.bf16.mxu0 0
        %993 = vmatpush1.bf16.msra.mxu0 0
        %994 = vmatprep.subr.bf16.mxu0 0
        %995 = vmatpush1.bf16.msra.mxu0 0
        %996 = vmatprep.subr.bf16.mxu0 0
        %997 = vmatpush1.bf16.msra.mxu0 0
        %998 = vmatprep.mubr.bf16.mxu0 0
        %999 = vmatmul.mubr.bf16.gmra.mrb[0].mxu0 %v805
        %v1000 = vpop.f32.mrb[0].mxu0
        %v1001 = vadd.f32 0.0, %v1000
        %v1002 = vpop.f32.mrb[0].mxu0
        %v1003 = vadd.f32 0.0, %v1002
        %v1004 = vpop.f32.mrb[0].mxu0
        %v1005 = vpop.f32.mrb[0].mxu0
        %1006 = vdwg.mxu0
        %1007 = vmatprep.subr.bf16.mxu0 %v905
        %1008 = vmatpush1.bf16.msra.mxu0 %v904
        %1009 = vmatprep.subr.bf16.mxu0 %v909
        %1010 = vmatpush1.bf16.msra.mxu0 %v908
        %1011 = vmatprep.subr.bf16.mxu0 %v913
        %1012 = vmatpush1.bf16.msra.mxu0 %v912
        %1013 = vmatprep.subr.bf16.mxu0 %v917
        %1014 = vmatpush1.bf16.msra.mxu0 %v916
        %1015 = vmatprep.subr.bf16.mxu0 %v921
        %1016 = vmatpush1.bf16.msra.mxu0 %v920
        %1017 = vmatprep.subr.bf16.mxu0 %v925
        %1018 = vmatpush1.bf16.msra.mxu0 %v924
        %1019 = vmatprep.subr.bf16.mxu0 %v929
        %1020 = vmatpush1.bf16.msra.mxu0 %v928
        %1021 = vmatprep.subr.bf16.mxu0 %v933
        %1022 = vmatpush1.bf16.msra.mxu0 %v932
        %1023 = vmatprep.subr.bf16.mxu0 0
        %1024 = vmatpush1.bf16.msra.mxu0 0
        %1025 = vmatprep.subr.bf16.mxu0 0
        %1026 = vmatpush1.bf16.msra.mxu0 0
        %1027 = vmatprep.subr.bf16.mxu0 0
        %1028 = vmatpush1.bf16.msra.mxu0 0
        %1029 = vmatprep.subr.bf16.mxu0 0
        %1030 = vmatpush1.bf16.msra.mxu0 0
        %1031 = vmatprep.subr.bf16.mxu0 0
        %1032 = vmatpush1.bf16.msra.mxu0 0
        %1033 = vmatprep.subr.bf16.mxu0 0
        %1034 = vmatpush1.bf16.msra.mxu0 0
        %1035 = vmatprep.subr.bf16.mxu0 0
        %1036 = vmatpush1.bf16.msra.mxu0 0
        %1037 = vmatprep.subr.bf16.mxu0 0
        %1038 = vmatpush1.bf16.msra.mxu0 0
        %1039 = vmatprep.mubr.bf16.mxu0 0
        %1040 = vmatmul.mubr.bf16.gmra.mrb[0].mxu0 %v805
        %v1041 = vpop.f32.mrb[0].mxu0
        %v1042 = vadd.f32 0.0, %v1041
        %v1043 = vpop.f32.mrb[0].mxu0
        %v1044 = vadd.f32 0.0, %v1043
        %v1045 = vpop.f32.mrb[0].mxu0
        %v1046 = vpop.f32.mrb[0].mxu0
        %1047 = vdwg.mxu0
        %v1048 = vadd.f32 %v658, %v1001
        %v1049 = vadd.f32 %v660, %v1003
        %v1050 = vadd.f32 %v731, %v1042
        %v1051 = vadd.f32 %v733, %v1044
        %v1052 = vxor.u32 %v1048, 2147483648
        %v1053 = vmul.f32 %v1052, 1.442695
        %v1054 = vpow.pop %v1053
        %v1055 = vadd.f32 %v1054, 1.0
        %v1056 = vrcp.pop %v1055
        %v1057 = vmul.f32 1.0, %v1056
        %v1058 = vxor.u32 %v1049, 2147483648
        %v1059 = vmul.f32 %v1058, 1.442695
        %v1060 = vpow.pop %v1059
        %v1061 = vadd.f32 %v1060, 1.0
        %v1062 = vrcp.pop %v1061
        %v1063 = vmul.f32 1.0, %v1062
        %v1064 = vtanh.pop %v1050
        %v1065 = vxor.u32 %v1051, 2147483648
        %v1066 = vmul.f32 %v1065, 1.442695
        %v1067 = vpow.pop %v1066
        %v1068 = vadd.f32 %v1067, 1.0
        %v1069 = vrcp.pop %v1068
        %v1070 = vmul.f32 1.0, %v1069
        %v1071 = vmul.f32 %v1063, %v804
        %v1072 = vmul.f32 %v1057, %v1064
        %v1073 = vadd.f32 %v1071, %v1072
        %v1074 = vtanh.pop %v1073
        %v1075 = vmul.f32 %v1070, %v1074
        %v1076 = vstv %s802
        %vm1077 = vcmp.lt.s32.totalorder %v1076, %v801
        %v1078 = vsel %vm1077, 1, 0
        %1079 = vset.pattern.permute.xlu0 0
        %1080 = vperm.xlu0 %1079, %v1078
        %v1081 = vpop.permute.xlu0 %1080
        %vm1082 = vcmp.eq.s32.totalorder %v1081, 1
        %v1083 = vsel %vm1082, %v1075, %v803
        %v1084 = vsel %vm1082, %v1073, %v804
        %v1085 = vsel %vm1082, %v1075, 0.0
        %v1087 = vcombine.high %v1085, %v1085
        %v1089 = vunpack.c.l.s4 1966171168
        %v1090 = vunpack.c.0.s8 %v1089
        %v1091 = vlaneseq
        %v1092 = vshrl.u32 %v1091, 7
        %v1093 = vsub.s32 %v1090, %v1092
        %v1094 = vrot.slane %v1085, %v1093
        %v1096 = vunpack.c.l.s4 1966171168
        %v1097 = vunpack.c.0.s8 %v1096
        %v1098 = vlaneseq
        %v1099 = vshrl.u32 %v1098, 7
        %v1100 = vsub.s32 %v1097, %v1099
        %v1101 = vrot.slane %v1087, %v1100
        %v1102 = vcombine.high %v1094, %v1094
        %v1103 = vcombine.high %v1101, %v1101
        %v1105 = vunpack.c.l.s4 1966171168
        %v1106 = vunpack.c.0.s8 %v1105
        %v1107 = vlaneseq
        %v1108 = vshrl.u32 %v1107, 7
        %v1109 = vsub.s32 %v1106, %v1108
        %v1110 = vrot.slane %v1094, %v1109
        %v1112 = vunpack.c.l.s4 1966171168
        %v1113 = vunpack.c.0.s8 %v1112
        %v1114 = vlaneseq
        %v1115 = vshrl.u32 %v1114, 7
        %v1116 = vsub.s32 %v1113, %v1115
        %v1117 = vrot.slane %v1101, %v1116
        %v1119 = vunpack.c.l.s4 1966171168
        %v1120 = vunpack.c.0.s8 %v1119
        %v1121 = vlaneseq
        %v1122 = vshrl.u32 %v1121, 7
        %v1123 = vsub.s32 %v1120, %v1122
        %v1124 = vrot.slane %v1102, %v1123
        %v1126 = vunpack.c.l.s4 1966171168
        %v1127 = vunpack.c.0.s8 %v1126
        %v1128 = vlaneseq
        %v1129 = vshrl.u32 %v1128, 7
        %v1130 = vsub.s32 %v1127, %v1129
        %v1131 = vrot.slane %v1103, %v1130
        %v1132 = vcombine.high %v1110, %v1110
        %v1133 = vcombine.high %v1117, %v1117
        %v1134 = vcombine.high %v1124, %v1124
        %v1135 = vcombine.high %v1131, %v1131
        %1144 = vst [vmem:[%s494] sm:$0x1] %v1110
        %1145 = vst [vmem:[%s494 + $0x8] sm:$0x1] %v1124
        %1146 = vst [vmem:[%s494 + $0x10] sm:$0x1] %v1132
        %1147 = vst [vmem:[%s494 + $0x18] sm:$0x1] %v1134
        %1148 = vst [vmem:[%s494 + $0x20] sm:$0x1] %v1117
        %1149 = vst [vmem:[%s494 + $0x28] sm:$0x1] %v1131
        %1150 = vst [vmem:[%s494 + $0x30] sm:$0x1] %v1133
        %1151 = vst [vmem:[%s494 + $0x38] sm:$0x1] %v1135
        %v1152 = vpack.c.bf16 %v1083, %v1083
        %1153 = vmatprep.subr.bf16.mxu0 %v903
        %1154 = vmatpush1.bf16.msra.mxu0 %v902
        %1155 = vmatprep.subr.bf16.mxu0 %v907
        %1156 = vmatpush1.bf16.msra.mxu0 %v906
        %1157 = vmatprep.subr.bf16.mxu0 %v911
        %1158 = vmatpush1.bf16.msra.mxu0 %v910
        %1159 = vmatprep.subr.bf16.mxu0 %v915
        %1160 = vmatpush1.bf16.msra.mxu0 %v914
        %1161 = vmatprep.subr.bf16.mxu0 %v919
        %1162 = vmatpush1.bf16.msra.mxu0 %v918
        %1163 = vmatprep.subr.bf16.mxu0 %v923
        %1164 = vmatpush1.bf16.msra.mxu0 %v922
        %1165 = vmatprep.subr.bf16.mxu0 %v927
        %1166 = vmatpush1.bf16.msra.mxu0 %v926
        %1167 = vmatprep.subr.bf16.mxu0 %v931
        %1168 = vmatpush1.bf16.msra.mxu0 %v930
        %1169 = vmatprep.subr.bf16.mxu0 0
        %1170 = vmatpush1.bf16.msra.mxu0 0
        %1171 = vmatprep.subr.bf16.mxu0 0
        %1172 = vmatpush1.bf16.msra.mxu0 0
        %1173 = vmatprep.subr.bf16.mxu0 0
        %1174 = vmatpush1.bf16.msra.mxu0 0
        %1175 = vmatprep.subr.bf16.mxu0 0
        %1176 = vmatpush1.bf16.msra.mxu0 0
        %1177 = vmatprep.subr.bf16.mxu0 0
        %1178 = vmatpush1.bf16.msra.mxu0 0
        %1179 = vmatprep.subr.bf16.mxu0 0
        %1180 = vmatpush1.bf16.msra.mxu0 0
        %1181 = vmatprep.subr.bf16.mxu0 0
        %1182 = vmatpush1.bf16.msra.mxu0 0
        %1183 = vmatprep.subr.bf16.mxu0 0
        %1184 = vmatpush1.bf16.msra.mxu0 0
        %1185 = vmatprep.mubr.bf16.mxu0 0
        %1186 = vmatmul.mubr.bf16.gmra.mrb[0].mxu0 %v1152
        %v1187 = vpop.f32.mrb[0].mxu0
        %v1188 = vadd.f32 0.0, %v1187
        %v1189 = vpop.f32.mrb[0].mxu0
        %v1190 = vadd.f32 0.0, %v1189
        %v1191 = vpop.f32.mrb[0].mxu0
        %v1192 = vpop.f32.mrb[0].mxu0
        %1193 = vdwg.mxu0
        %1194 = vmatprep.subr.bf16.mxu0 %v905
        %1195 = vmatpush1.bf16.msra.mxu0 %v904
        %1196 = vmatprep.subr.bf16.mxu0 %v909
        %1197 = vmatpush1.bf16.msra.mxu0 %v908
        %1198 = vmatprep.subr.bf16.mxu0 %v913
        %1199 = vmatpush1.bf16.msra.mxu0 %v912
        %1200 = vmatprep.subr.bf16.mxu0 %v917
        %1201 = vmatpush1.bf16.msra.mxu0 %v916
        %1202 = vmatprep.subr.bf16.mxu0 %v921
        %1203 = vmatpush1.bf16.msra.mxu0 %v920
        %1204 = vmatprep.subr.bf16.mxu0 %v925
        %1205 = vmatpush1.bf16.msra.mxu0 %v924
        %1206 = vmatprep.subr.bf16.mxu0 %v929
        %1207 = vmatpush1.bf16.msra.mxu0 %v928
        %1208 = vmatprep.subr.bf16.mxu0 %v933
        %1209 = vmatpush1.bf16.msra.mxu0 %v932
        %1210 = vmatprep.subr.bf16.mxu0 0
        %1211 = vmatpush1.bf16.msra.mxu0 0
        %1212 = vmatprep.subr.bf16.mxu0 0
        %1213 = vmatpush1.bf16.msra.mxu0 0
        %1214 = vmatprep.subr.bf16.mxu0 0
        %1215 = vmatpush1.bf16.msra.mxu0 0
        %1216 = vmatprep.subr.bf16.mxu0 0
        %1217 = vmatpush1.bf16.msra.mxu0 0
        %1218 = vmatprep.subr.bf16.mxu0 0
        %1219 = vmatpush1.bf16.msra.mxu0 0
        %1220 = vmatprep.subr.bf16.mxu0 0
        %1221 = vmatpush1.bf16.msra.mxu0 0
        %1222 = vmatprep.subr.bf16.mxu0 0
        %1223 = vmatpush1.bf16.msra.mxu0 0
        %1224 = vmatprep.subr.bf16.mxu0 0
        %1225 = vmatpush1.bf16.msra.mxu0 0
        %1226 = vmatprep.mubr.bf16.mxu0 0
        %1227 = vmatmul.mubr.bf16.gmra.mrb[0].mxu0 %v1152
        %v1228 = vpop.f32.mrb[0].mxu0
        %v1229 = vadd.f32 0.0, %v1228
        %v1230 = vpop.f32.mrb[0].mxu0
        %v1231 = vadd.f32 0.0, %v1230
        %v1232 = vpop.f32.mrb[0].mxu0
        %v1233 = vpop.f32.mrb[0].mxu0
        %1234 = vdwg.mxu0
        %v1235 = vadd.f32 %v662, %v1188
        %v1236 = vadd.f32 %v664, %v1190
        %v1237 = vadd.f32 %v735, %v1229
        %v1238 = vadd.f32 %v737, %v1231
        %v1239 = vxor.u32 %v1235, 2147483648
        %v1240 = vmul.f32 %v1239, 1.442695
        %v1241 = vpow.pop %v1240
        %v1242 = vadd.f32 %v1241, 1.0
        %v1243 = vrcp.pop %v1242
        %v1244 = vmul.f32 1.0, %v1243
        %v1245 = vxor.u32 %v1236, 2147483648
        %v1246 = vmul.f32 %v1245, 1.442695
        %v1247 = vpow.pop %v1246
        %v1248 = vadd.f32 %v1247, 1.0
        %v1249 = vrcp.pop %v1248
        %v1250 = vmul.f32 1.0, %v1249
        %v1251 = vtanh.pop %v1237
        %v1252 = vxor.u32 %v1238, 2147483648
        %v1253 = vmul.f32 %v1252, 1.442695
        %v1254 = vpow.pop %v1253
        %v1255 = vadd.f32 %v1254, 1.0
        %v1256 = vrcp.pop %v1255
        %v1257 = vmul.f32 1.0, %v1256
        %v1258 = vmul.f32 %v1250, %v1084
        %v1259 = vmul.f32 %v1244, %v1251
        %v1260 = vadd.f32 %v1258, %v1259
        %v1261 = vtanh.pop %v1260
        %v1262 = vmul.f32 %v1257, %v1261
        %s1263 = sadd.s32 %s802, 1
        %v1264 = vstv %s1263
        %vm1265 = vcmp.lt.s32.totalorder %v1264, %v801
        %v1266 = vsel %vm1265, 1, 0
        %1267 = vset.pattern.permute.xlu0 0
        %1268 = vperm.xlu0 %1267, %v1266
        %v1269 = vpop.permute.xlu0 %1268
        %vm1270 = vcmp.eq.s32.totalorder %v1269, 1
        %v1271 = vsel %vm1270, %v1262, %v1083
        %v1272 = vsel %vm1270, %v1260, %v1084
        %v1273 = vsel %vm1270, %v1262, 0.0
        %v1275 = vcombine.high %v1273, %v1273
        %v1277 = vunpack.c.l.s4 1966171168
        %v1278 = vunpack.c.0.s8 %v1277
        %v1279 = vlaneseq
        %v1280 = vshrl.u32 %v1279, 7
        %v1281 = vsub.s32 %v1278, %v1280
        %v1282 = vrot.slane %v1273, %v1281
        %v1284 = vunpack.c.l.s4 1966171168
        %v1285 = vunpack.c.0.s8 %v1284
        %v1286 = vlaneseq
        %v1287 = vshrl.u32 %v1286, 7
        %v1288 = vsub.s32 %v1285, %v1287
        %v1289 = vrot.slane %v1275, %v1288
        %v1290 = vcombine.high %v1282, %v1282
        %v1291 = vcombine.high %v1289, %v1289
        %v1293 = vunpack.c.l.s4 1966171168
        %v1294 = vunpack.c.0.s8 %v1293
        %v1295 = vlaneseq
        %v1296 = vshrl.u32 %v1295, 7
        %v1297 = vsub.s32 %v1294, %v1296
        %v1298 = vrot.slane %v1282, %v1297
        %v1300 = vunpack.c.l.s4 1966171168
        %v1301 = vunpack.c.0.s8 %v1300
        %v1302 = vlaneseq
        %v1303 = vshrl.u32 %v1302, 7
        %v1304 = vsub.s32 %v1301, %v1303
        %v1305 = vrot.slane %v1289, %v1304
        %v1307 = vunpack.c.l.s4 1966171168
        %v1308 = vunpack.c.0.s8 %v1307
        %v1309 = vlaneseq
        %v1310 = vshrl.u32 %v1309, 7
        %v1311 = vsub.s32 %v1308, %v1310
        %v1312 = vrot.slane %v1290, %v1311
        %v1314 = vunpack.c.l.s4 1966171168
        %v1315 = vunpack.c.0.s8 %v1314
        %v1316 = vlaneseq
        %v1317 = vshrl.u32 %v1316, 7
        %v1318 = vsub.s32 %v1315, %v1317
        %v1319 = vrot.slane %v1291, %v1318
        %v1320 = vcombine.high %v1298, %v1298
        %v1321 = vcombine.high %v1305, %v1305
        %v1322 = vcombine.high %v1312, %v1312
        %v1323 = vcombine.high %v1319, %v1319
        %1332 = vst [vmem:[%s494 + $0x1] sm:$0x1] %v1298
        %1333 = vst [vmem:[%s494 + $0x9] sm:$0x1] %v1312
        %1334 = vst [vmem:[%s494 + $0x11] sm:$0x1] %v1320
        %1335 = vst [vmem:[%s494 + $0x19] sm:$0x1] %v1322
        %1336 = vst [vmem:[%s494 + $0x21] sm:$0x1] %v1305
        %1337 = vst [vmem:[%s494 + $0x29] sm:$0x1] %v1319
        %1338 = vst [vmem:[%s494 + $0x31] sm:$0x1] %v1321
        %1339 = vst [vmem:[%s494 + $0x39] sm:$0x1] %v1323
        %v1340 = vpack.c.bf16 %v1271, %v1271
        %1341 = vmatprep.subr.bf16.mxu0 %v903
        %1342 = vmatpush1.bf16.msra.mxu0 %v902
        %1343 = vmatprep.subr.bf16.mxu0 %v907
        %1344 = vmatpush1.bf16.msra.mxu0 %v906
        %1345 = vmatprep.subr.bf16.mxu0 %v911
        %1346 = vmatpush1.bf16.msra.mxu0 %v910
        %1347 = vmatprep.subr.bf16.mxu0 %v915
        %1348 = vmatpush1.bf16.msra.mxu0 %v914
        %1349 = vmatprep.subr.bf16.mxu0 %v919
        %1350 = vmatpush1.bf16.msra.mxu0 %v918
        %1351 = vmatprep.subr.bf16.mxu0 %v923
        %1352 = vmatpush1.bf16.msra.mxu0 %v922
        %1353 = vmatprep.subr.bf16.mxu0 %v927
        %1354 = vmatpush1.bf16.msra.mxu0 %v926
        %1355 = vmatprep.subr.bf16.mxu0 %v931
        %1356 = vmatpush1.bf16.msra.mxu0 %v930
        %1357 = vmatprep.subr.bf16.mxu0 0
        %1358 = vmatpush1.bf16.msra.mxu0 0
        %1359 = vmatprep.subr.bf16.mxu0 0
        %1360 = vmatpush1.bf16.msra.mxu0 0
        %1361 = vmatprep.subr.bf16.mxu0 0
        %1362 = vmatpush1.bf16.msra.mxu0 0
        %1363 = vmatprep.subr.bf16.mxu0 0
        %1364 = vmatpush1.bf16.msra.mxu0 0
        %1365 = vmatprep.subr.bf16.mxu0 0
        %1366 = vmatpush1.bf16.msra.mxu0 0
        %1367 = vmatprep.subr.bf16.mxu0 0
        %1368 = vmatpush1.bf16.msra.mxu0 0
        %1369 = vmatprep.subr.bf16.mxu0 0
        %1370 = vmatpush1.bf16.msra.mxu0 0
        %1371 = vmatprep.subr.bf16.mxu0 0
        %1372 = vmatpush1.bf16.msra.mxu0 0
        %1373 = vmatprep.mubr.bf16.mxu0 0
        %1374 = vmatmul.mubr.bf16.gmra.mrb[0].mxu0 %v1340
        %v1375 = vpop.f32.mrb[0].mxu0
        %v1376 = vadd.f32 0.0, %v1375
        %v1377 = vpop.f32.mrb[0].mxu0
        %v1378 = vadd.f32 0.0, %v1377
        %v1379 = vpop.f32.mrb[0].mxu0
        %v1380 = vpop.f32.mrb[0].mxu0
        %1381 = vdwg.mxu0
        %1382 = vmatprep.subr.bf16.mxu0 %v905
        %1383 = vmatpush1.bf16.msra.mxu0 %v904
        %1384 = vmatprep.subr.bf16.mxu0 %v909
        %1385 = vmatpush1.bf16.msra.mxu0 %v908
        %1386 = vmatprep.subr.bf16.mxu0 %v913
        %1387 = vmatpush1.bf16.msra.mxu0 %v912
        %1388 = vmatprep.subr.bf16.mxu0 %v917
        %1389 = vmatpush1.bf16.msra.mxu0 %v916
        %1390 = vmatprep.subr.bf16.mxu0 %v921
        %1391 = vmatpush1.bf16.msra.mxu0 %v920
        %1392 = vmatprep.subr.bf16.mxu0 %v925
        %1393 = vmatpush1.bf16.msra.mxu0 %v924
        %1394 = vmatprep.subr.bf16.mxu0 %v929
        %1395 = vmatpush1.bf16.msra.mxu0 %v928
        %1396 = vmatprep.subr.bf16.mxu0 %v933
        %1397 = vmatpush1.bf16.msra.mxu0 %v932
        %1398 = vmatprep.subr.bf16.mxu0 0
        %1399 = vmatpush1.bf16.msra.mxu0 0
        %1400 = vmatprep.subr.bf16.mxu0 0
        %1401 = vmatpush1.bf16.msra.mxu0 0
        %1402 = vmatprep.subr.bf16.mxu0 0
        %1403 = vmatpush1.bf16.msra.mxu0 0
        %1404 = vmatprep.subr.bf16.mxu0 0
        %1405 = vmatpush1.bf16.msra.mxu0 0
        %1406 = vmatprep.subr.bf16.mxu0 0
        %1407 = vmatpush1.bf16.msra.mxu0 0
        %1408 = vmatprep.subr.bf16.mxu0 0
        %1409 = vmatpush1.bf16.msra.mxu0 0
        %1410 = vmatprep.subr.bf16.mxu0 0
        %1411 = vmatpush1.bf16.msra.mxu0 0
        %1412 = vmatprep.subr.bf16.mxu0 0
        %1413 = vmatpush1.bf16.msra.mxu0 0
        %1414 = vmatprep.mubr.bf16.mxu0 0
        %1415 = vmatmul.mubr.bf16.gmra.mrb[0].mxu0 %v1340
        %v1416 = vpop.f32.mrb[0].mxu0
        %v1417 = vadd.f32 0.0, %v1416
        %v1418 = vpop.f32.mrb[0].mxu0
        %v1419 = vadd.f32 0.0, %v1418
        %v1420 = vpop.f32.mrb[0].mxu0
        %v1421 = vpop.f32.mrb[0].mxu0
        %1422 = vdwg.mxu0
        %v1423 = vadd.f32 %v668, %v1376
        %v1424 = vadd.f32 %v670, %v1378
        %v1425 = vadd.f32 %v741, %v1417
        %v1426 = vadd.f32 %v743, %v1419
        %v1427 = vxor.u32 %v1423, 2147483648
        %v1428 = vmul.f32 %v1427, 1.442695
        %v1429 = vpow.pop %v1428
        %v1430 = vadd.f32 %v1429, 1.0
        %v1431 = vrcp.pop %v1430
        %v1432 = vmul.f32 1.0, %v1431
        %v1433 = vxor.u32 %v1424, 2147483648
        %v1434 = vmul.f32 %v1433, 1.442695
        %v1435 = vpow.pop %v1434
        %v1436 = vadd.f32 %v1435, 1.0
        %v1437 = vrcp.pop %v1436
        %v1438 = vmul.f32 1.0, %v1437
        %v1439 = vtanh.pop %v1425
        %v1440 = vxor.u32 %v1426, 2147483648
        %v1441 = vmul.f32 %v1440, 1.442695
        %v1442 = vpow.pop %v1441
        %v1443 = vadd.f32 %v1442, 1.0
        %v1444 = vrcp.pop %v1443
        %v1445 = vmul.f32 1.0, %v1444
        %v1446 = vmul.f32 %v1438, %v1272
        %v1447 = vmul.f32 %v1432, %v1439
        %v1448 = vadd.f32 %v1446, %v1447
        %v1449 = vtanh.pop %v1448
        %v1450 = vmul.f32 %v1445, %v1449
        %s1451 = sadd.s32 %s802, 2
        %v1452 = vstv %s1451
        %vm1453 = vcmp.lt.s32.totalorder %v1452, %v801
        %v1454 = vsel %vm1453, 1, 0
        %1455 = vset.pattern.permute.xlu0 0
        %1456 = vperm.xlu0 %1455, %v1454
        %v1457 = vpop.permute.xlu0 %1456
        %vm1458 = vcmp.eq.s32.totalorder %v1457, 1
        %v1459 = vsel %vm1458, %v1450, %v1271
        %v1460 = vsel %vm1458, %v1448, %v1272
        %v1461 = vsel %vm1458, %v1450, 0.0
        %v1463 = vcombine.high %v1461, %v1461
        %v1465 = vunpack.c.l.s4 1966171168
        %v1466 = vunpack.c.0.s8 %v1465
        %v1467 = vlaneseq
        %v1468 = vshrl.u32 %v1467, 7
        %v1469 = vsub.s32 %v1466, %v1468
        %v1470 = vrot.slane %v1461, %v1469
        %v1472 = vunpack.c.l.s4 1966171168
        %v1473 = vunpack.c.0.s8 %v1472
        %v1474 = vlaneseq
        %v1475 = vshrl.u32 %v1474, 7
        %v1476 = vsub.s32 %v1473, %v1475
        %v1477 = vrot.slane %v1463, %v1476
        %v1478 = vcombine.high %v1470, %v1470
        %v1479 = vcombine.high %v1477, %v1477
        %v1481 = vunpack.c.l.s4 1966171168
        %v1482 = vunpack.c.0.s8 %v1481
        %v1483 = vlaneseq
        %v1484 = vshrl.u32 %v1483, 7
        %v1485 = vsub.s32 %v1482, %v1484
        %v1486 = vrot.slane %v1470, %v1485
        %v1488 = vunpack.c.l.s4 1966171168
        %v1489 = vunpack.c.0.s8 %v1488
        %v1490 = vlaneseq
        %v1491 = vshrl.u32 %v1490, 7
        %v1492 = vsub.s32 %v1489, %v1491
        %v1493 = vrot.slane %v1477, %v1492
        %v1495 = vunpack.c.l.s4 1966171168
        %v1496 = vunpack.c.0.s8 %v1495
        %v1497 = vlaneseq
        %v1498 = vshrl.u32 %v1497, 7
        %v1499 = vsub.s32 %v1496, %v1498
        %v1500 = vrot.slane %v1478, %v1499
        %v1502 = vunpack.c.l.s4 1966171168
        %v1503 = vunpack.c.0.s8 %v1502
        %v1504 = vlaneseq
        %v1505 = vshrl.u32 %v1504, 7
        %v1506 = vsub.s32 %v1503, %v1505
        %v1507 = vrot.slane %v1479, %v1506
        %v1508 = vcombine.high %v1486, %v1486
        %v1509 = vcombine.high %v1493, %v1493
        %v1510 = vcombine.high %v1500, %v1500
        %v1511 = vcombine.high %v1507, %v1507
        %1520 = vst [vmem:[%s494 + $0x2] sm:$0x1] %v1486
        %1521 = vst [vmem:[%s494 + $0xa] sm:$0x1] %v1500
        %1522 = vst [vmem:[%s494 + $0x12] sm:$0x1] %v1508
        %1523 = vst [vmem:[%s494 + $0x1a] sm:$0x1] %v1510
        %1524 = vst [vmem:[%s494 + $0x22] sm:$0x1] %v1493
        %1525 = vst [vmem:[%s494 + $0x2a] sm:$0x1] %v1507
        %1526 = vst [vmem:[%s494 + $0x32] sm:$0x1] %v1509
        %1527 = vst [vmem:[%s494 + $0x3a] sm:$0x1] %v1511
        %v1528 = vpack.c.bf16 %v1459, %v1459
        %1529 = vmatprep.subr.bf16.mxu0 %v903
        %1530 = vmatpush1.bf16.msra.mxu0 %v902
        %1531 = vmatprep.subr.bf16.mxu0 %v907
        %1532 = vmatpush1.bf16.msra.mxu0 %v906
        %1533 = vmatprep.subr.bf16.mxu0 %v911
        %1534 = vmatpush1.bf16.msra.mxu0 %v910
        %1535 = vmatprep.subr.bf16.mxu0 %v915
        %1536 = vmatpush1.bf16.msra.mxu0 %v914
        %1537 = vmatprep.subr.bf16.mxu0 %v919
        %1538 = vmatpush1.bf16.msra.mxu0 %v918
        %1539 = vmatprep.subr.bf16.mxu0 %v923
        %1540 = vmatpush1.bf16.msra.mxu0 %v922
        %1541 = vmatprep.subr.bf16.mxu0 %v927
        %1542 = vmatpush1.bf16.msra.mxu0 %v926
        %1543 = vmatprep.subr.bf16.mxu0 %v931
        %1544 = vmatpush1.bf16.msra.mxu0 %v930
        %1545 = vmatprep.subr.bf16.mxu0 0
        %1546 = vmatpush1.bf16.msra.mxu0 0
        %1547 = vmatprep.subr.bf16.mxu0 0
        %1548 = vmatpush1.bf16.msra.mxu0 0
        %1549 = vmatprep.subr.bf16.mxu0 0
        %1550 = vmatpush1.bf16.msra.mxu0 0
        %1551 = vmatprep.subr.bf16.mxu0 0
        %1552 = vmatpush1.bf16.msra.mxu0 0
        %1553 = vmatprep.subr.bf16.mxu0 0
        %1554 = vmatpush1.bf16.msra.mxu0 0
        %1555 = vmatprep.subr.bf16.mxu0 0
        %1556 = vmatpush1.bf16.msra.mxu0 0
        %1557 = vmatprep.subr.bf16.mxu0 0
        %1558 = vmatpush1.bf16.msra.mxu0 0
        %1559 = vmatprep.subr.bf16.mxu0 0
        %1560 = vmatpush1.bf16.msra.mxu0 0
        %1561 = vmatprep.mubr.bf16.mxu0 0
        %1562 = vmatmul.mubr.bf16.gmra.mrb[0].mxu0 %v1528
        %v1563 = vpop.f32.mrb[0].mxu0
        %v1564 = vadd.f32 0.0, %v1563
        %v1565 = vpop.f32.mrb[0].mxu0
        %v1566 = vadd.f32 0.0, %v1565
        %v1567 = vpop.f32.mrb[0].mxu0
        %v1568 = vpop.f32.mrb[0].mxu0
        %1569 = vdwg.mxu0
        %1570 = vmatprep.subr.bf16.mxu0 %v905
        %1571 = vmatpush1.bf16.msra.mxu0 %v904
        %1572 = vmatprep.subr.bf16.mxu0 %v909
        %1573 = vmatpush1.bf16.msra.mxu0 %v908
        %1574 = vmatprep.subr.bf16.mxu0 %v913
        %1575 = vmatpush1.bf16.msra.mxu0 %v912
        %1576 = vmatprep.subr.bf16.mxu0 %v917
        %1577 = vmatpush1.bf16.msra.mxu0 %v916
        %1578 = vmatprep.subr.bf16.mxu0 %v921
        %1579 = vmatpush1.bf16.msra.mxu0 %v920
        %1580 = vmatprep.subr.bf16.mxu0 %v925
        %1581 = vmatpush1.bf16.msra.mxu0 %v924
        %1582 = vmatprep.subr.bf16.mxu0 %v929
        %1583 = vmatpush1.bf16.msra.mxu0 %v928
        %1584 = vmatprep.subr.bf16.mxu0 %v933
        %1585 = vmatpush1.bf16.msra.mxu0 %v932
        %1586 = vmatprep.subr.bf16.mxu0 0
        %1587 = vmatpush1.bf16.msra.mxu0 0
        %1588 = vmatprep.subr.bf16.mxu0 0
        %1589 = vmatpush1.bf16.msra.mxu0 0
        %1590 = vmatprep.subr.bf16.mxu0 0
        %1591 = vmatpush1.bf16.msra.mxu0 0
        %1592 = vmatprep.subr.bf16.mxu0 0
        %1593 = vmatpush1.bf16.msra.mxu0 0
        %1594 = vmatprep.subr.bf16.mxu0 0
        %1595 = vmatpush1.bf16.msra.mxu0 0
        %1596 = vmatprep.subr.bf16.mxu0 0
        %1597 = vmatpush1.bf16.msra.mxu0 0
        %1598 = vmatprep.subr.bf16.mxu0 0
        %1599 = vmatpush1.bf16.msra.mxu0 0
        %1600 = vmatprep.subr.bf16.mxu0 0
        %1601 = vmatpush1.bf16.msra.mxu0 0
        %1602 = vmatprep.mubr.bf16.mxu0 0
        %1603 = vmatmul.mubr.bf16.gmra.mrb[0].mxu0 %v1528
        %v1604 = vpop.f32.mrb[0].mxu0
        %v1605 = vadd.f32 0.0, %v1604
        %v1606 = vpop.f32.mrb[0].mxu0
        %v1607 = vadd.f32 0.0, %v1606
        %v1608 = vpop.f32.mrb[0].mxu0
        %v1609 = vpop.f32.mrb[0].mxu0
        %1610 = vdwg.mxu0
        %v1611 = vadd.f32 %v672, %v1564
        %v1612 = vadd.f32 %v674, %v1566
        %v1613 = vadd.f32 %v745, %v1605
        %v1614 = vadd.f32 %v747, %v1607
        %v1615 = vxor.u32 %v1611, 2147483648
        %v1616 = vmul.f32 %v1615, 1.442695
        %v1617 = vpow.pop %v1616
        %v1618 = vadd.f32 %v1617, 1.0
        %v1619 = vrcp.pop %v1618
        %v1620 = vmul.f32 1.0, %v1619
        %v1621 = vxor.u32 %v1612, 2147483648
        %v1622 = vmul.f32 %v1621, 1.442695
        %v1623 = vpow.pop %v1622
        %v1624 = vadd.f32 %v1623, 1.0
        %v1625 = vrcp.pop %v1624
        %v1626 = vmul.f32 1.0, %v1625
        %v1627 = vtanh.pop %v1613
        %v1628 = vxor.u32 %v1614, 2147483648
        %v1629 = vmul.f32 %v1628, 1.442695
        %v1630 = vpow.pop %v1629
        %v1631 = vadd.f32 %v1630, 1.0
        %v1632 = vrcp.pop %v1631
        %v1633 = vmul.f32 1.0, %v1632
        %v1634 = vmul.f32 %v1626, %v1460
        %v1635 = vmul.f32 %v1620, %v1627
        %v1636 = vadd.f32 %v1634, %v1635
        %v1637 = vtanh.pop %v1636
        %v1638 = vmul.f32 %v1633, %v1637
        %s1639 = sadd.s32 %s802, 3
        %v1640 = vstv %s1639
        %vm1641 = vcmp.lt.s32.totalorder %v1640, %v801
        %v1642 = vsel %vm1641, 1, 0
        %1643 = vset.pattern.permute.xlu0 0
        %1644 = vperm.xlu0 %1643, %v1642
        %v1645 = vpop.permute.xlu0 %1644
        %vm1646 = vcmp.eq.s32.totalorder %v1645, 1
        %v1647 = vsel %vm1646, %v1638, %v1459
        %v1648 = vsel %vm1646, %v1636, %v1460
        %v1649 = vsel %vm1646, %v1638, 0.0
        %v1651 = vcombine.high %v1649, %v1649
        %v1653 = vunpack.c.l.s4 1966171168
        %v1654 = vunpack.c.0.s8 %v1653
        %v1655 = vlaneseq
        %v1656 = vshrl.u32 %v1655, 7
        %v1657 = vsub.s32 %v1654, %v1656
        %v1658 = vrot.slane %v1649, %v1657
        %v1660 = vunpack.c.l.s4 1966171168
        %v1661 = vunpack.c.0.s8 %v1660
        %v1662 = vlaneseq
        %v1663 = vshrl.u32 %v1662, 7
        %v1664 = vsub.s32 %v1661, %v1663
        %v1665 = vrot.slane %v1651, %v1664
        %v1666 = vcombine.high %v1658, %v1658
        %v1667 = vcombine.high %v1665, %v1665
        %v1669 = vunpack.c.l.s4 1966171168
        %v1670 = vunpack.c.0.s8 %v1669
        %v1671 = vlaneseq
        %v1672 = vshrl.u32 %v1671, 7
        %v1673 = vsub.s32 %v1670, %v1672
        %v1674 = vrot.slane %v1658, %v1673
        %v1676 = vunpack.c.l.s4 1966171168
        %v1677 = vunpack.c.0.s8 %v1676
        %v1678 = vlaneseq
        %v1679 = vshrl.u32 %v1678, 7
        %v1680 = vsub.s32 %v1677, %v1679
        %v1681 = vrot.slane %v1665, %v1680
        %v1683 = vunpack.c.l.s4 1966171168
        %v1684 = vunpack.c.0.s8 %v1683
        %v1685 = vlaneseq
        %v1686 = vshrl.u32 %v1685, 7
        %v1687 = vsub.s32 %v1684, %v1686
        %v1688 = vrot.slane %v1666, %v1687
        %v1690 = vunpack.c.l.s4 1966171168
        %v1691 = vunpack.c.0.s8 %v1690
        %v1692 = vlaneseq
        %v1693 = vshrl.u32 %v1692, 7
        %v1694 = vsub.s32 %v1691, %v1693
        %v1695 = vrot.slane %v1667, %v1694
        %v1696 = vcombine.high %v1674, %v1674
        %v1697 = vcombine.high %v1681, %v1681
        %v1698 = vcombine.high %v1688, %v1688
        %v1699 = vcombine.high %v1695, %v1695
        %1708 = vst [vmem:[%s494 + $0x3] sm:$0x1] %v1674
        %1709 = vst [vmem:[%s494 + $0xb] sm:$0x1] %v1688
        %1710 = vst [vmem:[%s494 + $0x13] sm:$0x1] %v1696
        %1711 = vst [vmem:[%s494 + $0x1b] sm:$0x1] %v1698
        %1712 = vst [vmem:[%s494 + $0x23] sm:$0x1] %v1681
        %1713 = vst [vmem:[%s494 + $0x2b] sm:$0x1] %v1695
        %1714 = vst [vmem:[%s494 + $0x33] sm:$0x1] %v1697
        %1715 = vst [vmem:[%s494 + $0x3b] sm:$0x1] %v1699
        %v1716 = vpack.c.bf16 %v1647, %v1647
        %1717 = vmatprep.subr.bf16.mxu0 %v903
        %1718 = vmatpush1.bf16.msra.mxu0 %v902
        %1719 = vmatprep.subr.bf16.mxu0 %v907
        %1720 = vmatpush1.bf16.msra.mxu0 %v906
        %1721 = vmatprep.subr.bf16.mxu0 %v911
        %1722 = vmatpush1.bf16.msra.mxu0 %v910
        %1723 = vmatprep.subr.bf16.mxu0 %v915
        %1724 = vmatpush1.bf16.msra.mxu0 %v914
        %1725 = vmatprep.subr.bf16.mxu0 %v919
        %1726 = vmatpush1.bf16.msra.mxu0 %v918
        %1727 = vmatprep.subr.bf16.mxu0 %v923
        %1728 = vmatpush1.bf16.msra.mxu0 %v922
        %1729 = vmatprep.subr.bf16.mxu0 %v927
        %1730 = vmatpush1.bf16.msra.mxu0 %v926
        %1731 = vmatprep.subr.bf16.mxu0 %v931
        %1732 = vmatpush1.bf16.msra.mxu0 %v930
        %1733 = vmatprep.subr.bf16.mxu0 0
        %1734 = vmatpush1.bf16.msra.mxu0 0
        %1735 = vmatprep.subr.bf16.mxu0 0
        %1736 = vmatpush1.bf16.msra.mxu0 0
        %1737 = vmatprep.subr.bf16.mxu0 0
        %1738 = vmatpush1.bf16.msra.mxu0 0
        %1739 = vmatprep.subr.bf16.mxu0 0
        %1740 = vmatpush1.bf16.msra.mxu0 0
        %1741 = vmatprep.subr.bf16.mxu0 0
        %1742 = vmatpush1.bf16.msra.mxu0 0
        %1743 = vmatprep.subr.bf16.mxu0 0
        %1744 = vmatpush1.bf16.msra.mxu0 0
        %1745 = vmatprep.subr.bf16.mxu0 0
        %1746 = vmatpush1.bf16.msra.mxu0 0
        %1747 = vmatprep.subr.bf16.mxu0 0
        %1748 = vmatpush1.bf16.msra.mxu0 0
        %1749 = vmatprep.mubr.bf16.mxu0 0
        %1750 = vmatmul.mubr.bf16.gmra.mrb[0].mxu0 %v1716
        %v1751 = vpop.f32.mrb[0].mxu0
        %v1752 = vadd.f32 0.0, %v1751
        %v1753 = vpop.f32.mrb[0].mxu0
        %v1754 = vadd.f32 0.0, %v1753
        %v1755 = vpop.f32.mrb[0].mxu0
        %v1756 = vpop.f32.mrb[0].mxu0
        %1757 = vdwg.mxu0
        %1758 = vmatprep.subr.bf16.mxu0 %v905
        %1759 = vmatpush1.bf16.msra.mxu0 %v904
        %1760 = vmatprep.subr.bf16.mxu0 %v909
        %1761 = vmatpush1.bf16.msra.mxu0 %v908
        %1762 = vmatprep.subr.bf16.mxu0 %v913
        %1763 = vmatpush1.bf16.msra.mxu0 %v912
        %1764 = vmatprep.subr.bf16.mxu0 %v917
        %1765 = vmatpush1.bf16.msra.mxu0 %v916
        %1766 = vmatprep.subr.bf16.mxu0 %v921
        %1767 = vmatpush1.bf16.msra.mxu0 %v920
        %1768 = vmatprep.subr.bf16.mxu0 %v925
        %1769 = vmatpush1.bf16.msra.mxu0 %v924
        %1770 = vmatprep.subr.bf16.mxu0 %v929
        %1771 = vmatpush1.bf16.msra.mxu0 %v928
        %1772 = vmatprep.subr.bf16.mxu0 %v933
        %1773 = vmatpush1.bf16.msra.mxu0 %v932
        %1774 = vmatprep.subr.bf16.mxu0 0
        %1775 = vmatpush1.bf16.msra.mxu0 0
        %1776 = vmatprep.subr.bf16.mxu0 0
        %1777 = vmatpush1.bf16.msra.mxu0 0
        %1778 = vmatprep.subr.bf16.mxu0 0
        %1779 = vmatpush1.bf16.msra.mxu0 0
        %1780 = vmatprep.subr.bf16.mxu0 0
        %1781 = vmatpush1.bf16.msra.mxu0 0
        %1782 = vmatprep.subr.bf16.mxu0 0
        %1783 = vmatpush1.bf16.msra.mxu0 0
        %1784 = vmatprep.subr.bf16.mxu0 0
        %1785 = vmatpush1.bf16.msra.mxu0 0
        %1786 = vmatprep.subr.bf16.mxu0 0
        %1787 = vmatpush1.bf16.msra.mxu0 0
        %1788 = vmatprep.subr.bf16.mxu0 0
        %1789 = vmatpush1.bf16.msra.mxu0 0
        %1790 = vmatprep.mubr.bf16.mxu0 0
        %1791 = vmatmul.mubr.bf16.gmra.mrb[0].mxu0 %v1716
        %v1792 = vpop.f32.mrb[0].mxu0
        %v1793 = vadd.f32 0.0, %v1792
        %v1794 = vpop.f32.mrb[0].mxu0
        %v1795 = vadd.f32 0.0, %v1794
        %v1796 = vpop.f32.mrb[0].mxu0
        %v1797 = vpop.f32.mrb[0].mxu0
        %1798 = vdwg.mxu0
        %v1799 = vadd.f32 %v678, %v1752
        %v1800 = vadd.f32 %v680, %v1754
        %v1801 = vadd.f32 %v751, %v1793
        %v1802 = vadd.f32 %v753, %v1795
        %v1803 = vxor.u32 %v1799, 2147483648
        %v1804 = vmul.f32 %v1803, 1.442695
        %v1805 = vpow.pop %v1804
        %v1806 = vadd.f32 %v1805, 1.0
        %v1807 = vrcp.pop %v1806
        %v1808 = vmul.f32 1.0, %v1807
        %v1809 = vxor.u32 %v1800, 2147483648
        %v1810 = vmul.f32 %v1809, 1.442695
        %v1811 = vpow.pop %v1810
        %v1812 = vadd.f32 %v1811, 1.0
        %v1813 = vrcp.pop %v1812
        %v1814 = vmul.f32 1.0, %v1813
        %v1815 = vtanh.pop %v1801
        %v1816 = vxor.u32 %v1802, 2147483648
        %v1817 = vmul.f32 %v1816, 1.442695
        %v1818 = vpow.pop %v1817
        %v1819 = vadd.f32 %v1818, 1.0
        %v1820 = vrcp.pop %v1819
        %v1821 = vmul.f32 1.0, %v1820
        %v1822 = vmul.f32 %v1814, %v1648
        %v1823 = vmul.f32 %v1808, %v1815
        %v1824 = vadd.f32 %v1822, %v1823
        %v1825 = vtanh.pop %v1824
        %v1826 = vmul.f32 %v1821, %v1825
        %s1827 = sadd.s32 %s802, 4
        %v1828 = vstv %s1827
        %vm1829 = vcmp.lt.s32.totalorder %v1828, %v801
        %v1830 = vsel %vm1829, 1, 0
        %1831 = vset.pattern.permute.xlu0 0
        %1832 = vperm.xlu0 %1831, %v1830
        %v1833 = vpop.permute.xlu0 %1832
        %vm1834 = vcmp.eq.s32.totalorder %v1833, 1
        %v1835 = vsel %vm1834, %v1826, %v1647
        %v1836 = vsel %vm1834, %v1824, %v1648
        %v1837 = vsel %vm1834, %v1826, 0.0
        %v1839 = vcombine.high %v1837, %v1837
        %v1841 = vunpack.c.l.s4 1966171168
        %v1842 = vunpack.c.0.s8 %v1841
        %v1843 = vlaneseq
        %v1844 = vshrl.u32 %v1843, 7
        %v1845 = vsub.s32 %v1842, %v1844
        %v1846 = vrot.slane %v1837, %v1845
        %v1848 = vunpack.c.l.s4 1966171168
        %v1849 = vunpack.c.0.s8 %v1848
        %v1850 = vlaneseq
        %v1851 = vshrl.u32 %v1850, 7
        %v1852 = vsub.s32 %v1849, %v1851
        %v1853 = vrot.slane %v1839, %v1852
        %v1854 = vcombine.high %v1846, %v1846
        %v1855 = vcombine.high %v1853, %v1853
        %v1857 = vunpack.c.l.s4 1966171168
        %v1858 = vunpack.c.0.s8 %v1857
        %v1859 = vlaneseq
        %v1860 = vshrl.u32 %v1859, 7
        %v1861 = vsub.s32 %v1858, %v1860
        %v1862 = vrot.slane %v1846, %v1861
        %v1864 = vunpack.c.l.s4 1966171168
        %v1865 = vunpack.c.0.s8 %v1864
        %v1866 = vlaneseq
        %v1867 = vshrl.u32 %v1866, 7
        %v1868 = vsub.s32 %v1865, %v1867
        %v1869 = vrot.slane %v1853, %v1868
        %v1871 = vunpack.c.l.s4 1966171168
        %v1872 = vunpack.c.0.s8 %v1871
        %v1873 = vlaneseq
        %v1874 = vshrl.u32 %v1873, 7
        %v1875 = vsub.s32 %v1872, %v1874
        %v1876 = vrot.slane %v1854, %v1875
        %v1878 = vunpack.c.l.s4 1966171168
        %v1879 = vunpack.c.0.s8 %v1878
        %v1880 = vlaneseq
        %v1881 = vshrl.u32 %v1880, 7
        %v1882 = vsub.s32 %v1879, %v1881
        %v1883 = vrot.slane %v1855, %v1882
        %v1884 = vcombine.high %v1862, %v1862
        %v1885 = vcombine.high %v1869, %v1869
        %v1886 = vcombine.high %v1876, %v1876
        %v1887 = vcombine.high %v1883, %v1883
        %1896 = vst [vmem:[%s494 + $0x4] sm:$0x1] %v1862
        %1897 = vst [vmem:[%s494 + $0xc] sm:$0x1] %v1876
        %1898 = vst [vmem:[%s494 + $0x14] sm:$0x1] %v1884
        %1899 = vst [vmem:[%s494 + $0x1c] sm:$0x1] %v1886
        %1900 = vst [vmem:[%s494 + $0x24] sm:$0x1] %v1869
        %1901 = vst [vmem:[%s494 + $0x2c] sm:$0x1] %v1883
        %1902 = vst [vmem:[%s494 + $0x34] sm:$0x1] %v1885
        %1903 = vst [vmem:[%s494 + $0x3c] sm:$0x1] %v1887
        %v1904 = vpack.c.bf16 %v1835, %v1835
        %1905 = vmatprep.subr.bf16.mxu0 %v903
        %1906 = vmatpush1.bf16.msra.mxu0 %v902
        %1907 = vmatprep.subr.bf16.mxu0 %v907
        %1908 = vmatpush1.bf16.msra.mxu0 %v906
        %1909 = vmatprep.subr.bf16.mxu0 %v911
        %1910 = vmatpush1.bf16.msra.mxu0 %v910
        %1911 = vmatprep.subr.bf16.mxu0 %v915
        %1912 = vmatpush1.bf16.msra.mxu0 %v914
        %1913 = vmatprep.subr.bf16.mxu0 %v919
        %1914 = vmatpush1.bf16.msra.mxu0 %v918
        %1915 = vmatprep.subr.bf16.mxu0 %v923
        %1916 = vmatpush1.bf16.msra.mxu0 %v922
        %1917 = vmatprep.subr.bf16.mxu0 %v927
        %1918 = vmatpush1.bf16.msra.mxu0 %v926
        %1919 = vmatprep.subr.bf16.mxu0 %v931
        %1920 = vmatpush1.bf16.msra.mxu0 %v930
        %1921 = vmatprep.subr.bf16.mxu0 0
        %1922 = vmatpush1.bf16.msra.mxu0 0
        %1923 = vmatprep.subr.bf16.mxu0 0
        %1924 = vmatpush1.bf16.msra.mxu0 0
        %1925 = vmatprep.subr.bf16.mxu0 0
        %1926 = vmatpush1.bf16.msra.mxu0 0
        %1927 = vmatprep.subr.bf16.mxu0 0
        %1928 = vmatpush1.bf16.msra.mxu0 0
        %1929 = vmatprep.subr.bf16.mxu0 0
        %1930 = vmatpush1.bf16.msra.mxu0 0
        %1931 = vmatprep.subr.bf16.mxu0 0
        %1932 = vmatpush1.bf16.msra.mxu0 0
        %1933 = vmatprep.subr.bf16.mxu0 0
        %1934 = vmatpush1.bf16.msra.mxu0 0
        %1935 = vmatprep.subr.bf16.mxu0 0
        %1936 = vmatpush1.bf16.msra.mxu0 0
        %1937 = vmatprep.mubr.bf16.mxu0 0
        %1938 = vmatmul.mubr.bf16.gmra.mrb[0].mxu0 %v1904
        %v1939 = vpop.f32.mrb[0].mxu0
        %v1940 = vadd.f32 0.0, %v1939
        %v1941 = vpop.f32.mrb[0].mxu0
        %v1942 = vadd.f32 0.0, %v1941
        %v1943 = vpop.f32.mrb[0].mxu0
        %v1944 = vpop.f32.mrb[0].mxu0
        %1945 = vdwg.mxu0
        %1946 = vmatprep.subr.bf16.mxu0 %v905
        %1947 = vmatpush1.bf16.msra.mxu0 %v904
        %1948 = vmatprep.subr.bf16.mxu0 %v909
        %1949 = vmatpush1.bf16.msra.mxu0 %v908
        %1950 = vmatprep.subr.bf16.mxu0 %v913
        %1951 = vmatpush1.bf16.msra.mxu0 %v912
        %1952 = vmatprep.subr.bf16.mxu0 %v917
        %1953 = vmatpush1.bf16.msra.mxu0 %v916
        %1954 = vmatprep.subr.bf16.mxu0 %v921
        %1955 = vmatpush1.bf16.msra.mxu0 %v920
        %1956 = vmatprep.subr.bf16.mxu0 %v925
        %1957 = vmatpush1.bf16.msra.mxu0 %v924
        %1958 = vmatprep.subr.bf16.mxu0 %v929
        %1959 = vmatpush1.bf16.msra.mxu0 %v928
        %1960 = vmatprep.subr.bf16.mxu0 %v933
        %1961 = vmatpush1.bf16.msra.mxu0 %v932
        %1962 = vmatprep.subr.bf16.mxu0 0
        %1963 = vmatpush1.bf16.msra.mxu0 0
        %1964 = vmatprep.subr.bf16.mxu0 0
        %1965 = vmatpush1.bf16.msra.mxu0 0
        %1966 = vmatprep.subr.bf16.mxu0 0
        %1967 = vmatpush1.bf16.msra.mxu0 0
        %1968 = vmatprep.subr.bf16.mxu0 0
        %1969 = vmatpush1.bf16.msra.mxu0 0
        %1970 = vmatprep.subr.bf16.mxu0 0
        %1971 = vmatpush1.bf16.msra.mxu0 0
        %1972 = vmatprep.subr.bf16.mxu0 0
        %1973 = vmatpush1.bf16.msra.mxu0 0
        %1974 = vmatprep.subr.bf16.mxu0 0
        %1975 = vmatpush1.bf16.msra.mxu0 0
        %1976 = vmatprep.subr.bf16.mxu0 0
        %1977 = vmatpush1.bf16.msra.mxu0 0
        %1978 = vmatprep.mubr.bf16.mxu0 0
        %1979 = vmatmul.mubr.bf16.gmra.mrb[0].mxu0 %v1904
        %v1980 = vpop.f32.mrb[0].mxu0
        %v1981 = vadd.f32 0.0, %v1980
        %v1982 = vpop.f32.mrb[0].mxu0
        %v1983 = vadd.f32 0.0, %v1982
        %v1984 = vpop.f32.mrb[0].mxu0
        %v1985 = vpop.f32.mrb[0].mxu0
        %1986 = vdwg.mxu0
        %v1987 = vadd.f32 %v682, %v1940
        %v1988 = vadd.f32 %v684, %v1942
        %v1989 = vadd.f32 %v755, %v1981
        %v1990 = vadd.f32 %v757, %v1983
        %v1991 = vxor.u32 %v1987, 2147483648
        %v1992 = vmul.f32 %v1991, 1.442695
        %v1993 = vpow.pop %v1992
        %v1994 = vadd.f32 %v1993, 1.0
        %v1995 = vrcp.pop %v1994
        %v1996 = vmul.f32 1.0, %v1995
        %v1997 = vxor.u32 %v1988, 2147483648
        %v1998 = vmul.f32 %v1997, 1.442695
        %v1999 = vpow.pop %v1998
        %v2000 = vadd.f32 %v1999, 1.0
        %v2001 = vrcp.pop %v2000
        %v2002 = vmul.f32 1.0, %v2001
        %v2003 = vtanh.pop %v1989
        %v2004 = vxor.u32 %v1990, 2147483648
        %v2005 = vmul.f32 %v2004, 1.442695
        %v2006 = vpow.pop %v2005
        %v2007 = vadd.f32 %v2006, 1.0
        %v2008 = vrcp.pop %v2007
        %v2009 = vmul.f32 1.0, %v2008
        %v2010 = vmul.f32 %v2002, %v1836
        %v2011 = vmul.f32 %v1996, %v2003
        %v2012 = vadd.f32 %v2010, %v2011
        %v2013 = vtanh.pop %v2012
        %v2014 = vmul.f32 %v2009, %v2013
        %s2015 = sadd.s32 %s802, 5
        %v2016 = vstv %s2015
        %vm2017 = vcmp.lt.s32.totalorder %v2016, %v801
        %v2018 = vsel %vm2017, 1, 0
        %2019 = vset.pattern.permute.xlu0 0
        %2020 = vperm.xlu0 %2019, %v2018
        %v2021 = vpop.permute.xlu0 %2020
        %vm2022 = vcmp.eq.s32.totalorder %v2021, 1
        %v2023 = vsel %vm2022, %v2014, %v1835
        %v2024 = vsel %vm2022, %v2012, %v1836
        %v2025 = vsel %vm2022, %v2014, 0.0
        %v2027 = vcombine.high %v2025, %v2025
        %v2029 = vunpack.c.l.s4 1966171168
        %v2030 = vunpack.c.0.s8 %v2029
        %v2031 = vlaneseq
        %v2032 = vshrl.u32 %v2031, 7
        %v2033 = vsub.s32 %v2030, %v2032
        %v2034 = vrot.slane %v2025, %v2033
        %v2036 = vunpack.c.l.s4 1966171168
        %v2037 = vunpack.c.0.s8 %v2036
        %v2038 = vlaneseq
        %v2039 = vshrl.u32 %v2038, 7
        %v2040 = vsub.s32 %v2037, %v2039
        %v2041 = vrot.slane %v2027, %v2040
        %v2042 = vcombine.high %v2034, %v2034
        %v2043 = vcombine.high %v2041, %v2041
        %v2045 = vunpack.c.l.s4 1966171168
        %v2046 = vunpack.c.0.s8 %v2045
        %v2047 = vlaneseq
        %v2048 = vshrl.u32 %v2047, 7
        %v2049 = vsub.s32 %v2046, %v2048
        %v2050 = vrot.slane %v2034, %v2049
        %v2052 = vunpack.c.l.s4 1966171168
        %v2053 = vunpack.c.0.s8 %v2052
        %v2054 = vlaneseq
        %v2055 = vshrl.u32 %v2054, 7
        %v2056 = vsub.s32 %v2053, %v2055
        %v2057 = vrot.slane %v2041, %v2056
        %v2059 = vunpack.c.l.s4 1966171168
        %v2060 = vunpack.c.0.s8 %v2059
        %v2061 = vlaneseq
        %v2062 = vshrl.u32 %v2061, 7
        %v2063 = vsub.s32 %v2060, %v2062
        %v2064 = vrot.slane %v2042, %v2063
        %v2066 = vunpack.c.l.s4 1966171168
        %v2067 = vunpack.c.0.s8 %v2066
        %v2068 = vlaneseq
        %v2069 = vshrl.u32 %v2068, 7
        %v2070 = vsub.s32 %v2067, %v2069
        %v2071 = vrot.slane %v2043, %v2070
        %v2072 = vcombine.high %v2050, %v2050
        %v2073 = vcombine.high %v2057, %v2057
        %v2074 = vcombine.high %v2064, %v2064
        %v2075 = vcombine.high %v2071, %v2071
        %2084 = vst [vmem:[%s494 + $0x5] sm:$0x1] %v2050
        %2085 = vst [vmem:[%s494 + $0xd] sm:$0x1] %v2064
        %2086 = vst [vmem:[%s494 + $0x15] sm:$0x1] %v2072
        %2087 = vst [vmem:[%s494 + $0x1d] sm:$0x1] %v2074
        %2088 = vst [vmem:[%s494 + $0x25] sm:$0x1] %v2057
        %2089 = vst [vmem:[%s494 + $0x2d] sm:$0x1] %v2071
        %2090 = vst [vmem:[%s494 + $0x35] sm:$0x1] %v2073
        %2091 = vst [vmem:[%s494 + $0x3d] sm:$0x1] %v2075
        %v2092 = vpack.c.bf16 %v2023, %v2023
        %2093 = vmatprep.subr.bf16.mxu0 %v903
        %2094 = vmatpush1.bf16.msra.mxu0 %v902
        %2095 = vmatprep.subr.bf16.mxu0 %v907
        %2096 = vmatpush1.bf16.msra.mxu0 %v906
        %2097 = vmatprep.subr.bf16.mxu0 %v911
        %2098 = vmatpush1.bf16.msra.mxu0 %v910
        %2099 = vmatprep.subr.bf16.mxu0 %v915
        %2100 = vmatpush1.bf16.msra.mxu0 %v914
        %2101 = vmatprep.subr.bf16.mxu0 %v919
        %2102 = vmatpush1.bf16.msra.mxu0 %v918
        %2103 = vmatprep.subr.bf16.mxu0 %v923
        %2104 = vmatpush1.bf16.msra.mxu0 %v922
        %2105 = vmatprep.subr.bf16.mxu0 %v927
        %2106 = vmatpush1.bf16.msra.mxu0 %v926
        %2107 = vmatprep.subr.bf16.mxu0 %v931
        %2108 = vmatpush1.bf16.msra.mxu0 %v930
        %2109 = vmatprep.subr.bf16.mxu0 0
        %2110 = vmatpush1.bf16.msra.mxu0 0
        %2111 = vmatprep.subr.bf16.mxu0 0
        %2112 = vmatpush1.bf16.msra.mxu0 0
        %2113 = vmatprep.subr.bf16.mxu0 0
        %2114 = vmatpush1.bf16.msra.mxu0 0
        %2115 = vmatprep.subr.bf16.mxu0 0
        %2116 = vmatpush1.bf16.msra.mxu0 0
        %2117 = vmatprep.subr.bf16.mxu0 0
        %2118 = vmatpush1.bf16.msra.mxu0 0
        %2119 = vmatprep.subr.bf16.mxu0 0
        %2120 = vmatpush1.bf16.msra.mxu0 0
        %2121 = vmatprep.subr.bf16.mxu0 0
        %2122 = vmatpush1.bf16.msra.mxu0 0
        %2123 = vmatprep.subr.bf16.mxu0 0
        %2124 = vmatpush1.bf16.msra.mxu0 0
        %2125 = vmatprep.mubr.bf16.mxu0 0
        %2126 = vmatmul.mubr.bf16.gmra.mrb[0].mxu0 %v2092
        %v2127 = vpop.f32.mrb[0].mxu0
        %v2128 = vadd.f32 0.0, %v2127
        %v2129 = vpop.f32.mrb[0].mxu0
        %v2130 = vadd.f32 0.0, %v2129
        %v2131 = vpop.f32.mrb[0].mxu0
        %v2132 = vpop.f32.mrb[0].mxu0
        %2133 = vdwg.mxu0
        %2134 = vmatprep.subr.bf16.mxu0 %v905
        %2135 = vmatpush1.bf16.msra.mxu0 %v904
        %2136 = vmatprep.subr.bf16.mxu0 %v909
        %2137 = vmatpush1.bf16.msra.mxu0 %v908
        %2138 = vmatprep.subr.bf16.mxu0 %v913
        %2139 = vmatpush1.bf16.msra.mxu0 %v912
        %2140 = vmatprep.subr.bf16.mxu0 %v917
        %2141 = vmatpush1.bf16.msra.mxu0 %v916
        %2142 = vmatprep.subr.bf16.mxu0 %v921
        %2143 = vmatpush1.bf16.msra.mxu0 %v920
        %2144 = vmatprep.subr.bf16.mxu0 %v925
        %2145 = vmatpush1.bf16.msra.mxu0 %v924
        %2146 = vmatprep.subr.bf16.mxu0 %v929
        %2147 = vmatpush1.bf16.msra.mxu0 %v928
        %2148 = vmatprep.subr.bf16.mxu0 %v933
        %2149 = vmatpush1.bf16.msra.mxu0 %v932
        %2150 = vmatprep.subr.bf16.mxu0 0
        %2151 = vmatpush1.bf16.msra.mxu0 0
        %2152 = vmatprep.subr.bf16.mxu0 0
        %2153 = vmatpush1.bf16.msra.mxu0 0
        %2154 = vmatprep.subr.bf16.mxu0 0
        %2155 = vmatpush1.bf16.msra.mxu0 0
        %2156 = vmatprep.subr.bf16.mxu0 0
        %2157 = vmatpush1.bf16.msra.mxu0 0
        %2158 = vmatprep.subr.bf16.mxu0 0
        %2159 = vmatpush1.bf16.msra.mxu0 0
        %2160 = vmatprep.subr.bf16.mxu0 0
        %2161 = vmatpush1.bf16.msra.mxu0 0
        %2162 = vmatprep.subr.bf16.mxu0 0
        %2163 = vmatpush1.bf16.msra.mxu0 0
        %2164 = vmatprep.subr.bf16.mxu0 0
        %2165 = vmatpush1.bf16.msra.mxu0 0
        %2166 = vmatprep.mubr.bf16.mxu0 0
        %2167 = vmatmul.mubr.bf16.gmra.mrb[0].mxu0 %v2092
        %v2168 = vpop.f32.mrb[0].mxu0
        %v2169 = vadd.f32 0.0, %v2168
        %v2170 = vpop.f32.mrb[0].mxu0
        %v2171 = vadd.f32 0.0, %v2170
        %v2172 = vpop.f32.mrb[0].mxu0
        %v2173 = vpop.f32.mrb[0].mxu0
        %2174 = vdwg.mxu0
        %v2175 = vadd.f32 %v688, %v2128
        %v2176 = vadd.f32 %v690, %v2130
        %v2177 = vadd.f32 %v761, %v2169
        %v2178 = vadd.f32 %v763, %v2171
        %v2179 = vxor.u32 %v2175, 2147483648
        %v2180 = vmul.f32 %v2179, 1.442695
        %v2181 = vpow.pop %v2180
        %v2182 = vadd.f32 %v2181, 1.0
        %v2183 = vrcp.pop %v2182
        %v2184 = vmul.f32 1.0, %v2183
        %v2185 = vxor.u32 %v2176, 2147483648
        %v2186 = vmul.f32 %v2185, 1.442695
        %v2187 = vpow.pop %v2186
        %v2188 = vadd.f32 %v2187, 1.0
        %v2189 = vrcp.pop %v2188
        %v2190 = vmul.f32 1.0, %v2189
        %v2191 = vtanh.pop %v2177
        %v2192 = vxor.u32 %v2178, 2147483648
        %v2193 = vmul.f32 %v2192, 1.442695
        %v2194 = vpow.pop %v2193
        %v2195 = vadd.f32 %v2194, 1.0
        %v2196 = vrcp.pop %v2195
        %v2197 = vmul.f32 1.0, %v2196
        %v2198 = vmul.f32 %v2190, %v2024
        %v2199 = vmul.f32 %v2184, %v2191
        %v2200 = vadd.f32 %v2198, %v2199
        %v2201 = vtanh.pop %v2200
        %v2202 = vmul.f32 %v2197, %v2201
        %s2203 = sadd.s32 %s802, 6
        %v2204 = vstv %s2203
        %vm2205 = vcmp.lt.s32.totalorder %v2204, %v801
        %v2206 = vsel %vm2205, 1, 0
        %2207 = vset.pattern.permute.xlu0 0
        %2208 = vperm.xlu0 %2207, %v2206
        %v2209 = vpop.permute.xlu0 %2208
        %vm2210 = vcmp.eq.s32.totalorder %v2209, 1
        %v2211 = vsel %vm2210, %v2202, %v2023
        %v2212 = vsel %vm2210, %v2200, %v2024
        %v2213 = vsel %vm2210, %v2202, 0.0
        %v2215 = vcombine.high %v2213, %v2213
        %v2217 = vunpack.c.l.s4 1966171168
        %v2218 = vunpack.c.0.s8 %v2217
        %v2219 = vlaneseq
        %v2220 = vshrl.u32 %v2219, 7
        %v2221 = vsub.s32 %v2218, %v2220
        %v2222 = vrot.slane %v2213, %v2221
        %v2224 = vunpack.c.l.s4 1966171168
        %v2225 = vunpack.c.0.s8 %v2224
        %v2226 = vlaneseq
        %v2227 = vshrl.u32 %v2226, 7
        %v2228 = vsub.s32 %v2225, %v2227
        %v2229 = vrot.slane %v2215, %v2228
        %v2230 = vcombine.high %v2222, %v2222
        %v2231 = vcombine.high %v2229, %v2229
        %v2233 = vunpack.c.l.s4 1966171168
        %v2234 = vunpack.c.0.s8 %v2233
        %v2235 = vlaneseq
        %v2236 = vshrl.u32 %v2235, 7
        %v2237 = vsub.s32 %v2234, %v2236
        %v2238 = vrot.slane %v2222, %v2237
        %v2240 = vunpack.c.l.s4 1966171168
        %v2241 = vunpack.c.0.s8 %v2240
        %v2242 = vlaneseq
        %v2243 = vshrl.u32 %v2242, 7
        %v2244 = vsub.s32 %v2241, %v2243
        %v2245 = vrot.slane %v2229, %v2244
        %v2247 = vunpack.c.l.s4 1966171168
        %v2248 = vunpack.c.0.s8 %v2247
        %v2249 = vlaneseq
        %v2250 = vshrl.u32 %v2249, 7
        %v2251 = vsub.s32 %v2248, %v2250
        %v2252 = vrot.slane %v2230, %v2251
        %v2254 = vunpack.c.l.s4 1966171168
        %v2255 = vunpack.c.0.s8 %v2254
        %v2256 = vlaneseq
        %v2257 = vshrl.u32 %v2256, 7
        %v2258 = vsub.s32 %v2255, %v2257
        %v2259 = vrot.slane %v2231, %v2258
        %v2260 = vcombine.high %v2238, %v2238
        %v2261 = vcombine.high %v2245, %v2245
        %v2262 = vcombine.high %v2252, %v2252
        %v2263 = vcombine.high %v2259, %v2259
        %2272 = vst [vmem:[%s494 + $0x6] sm:$0x1] %v2238
        %2273 = vst [vmem:[%s494 + $0xe] sm:$0x1] %v2252
        %2274 = vst [vmem:[%s494 + $0x16] sm:$0x1] %v2260
        %2275 = vst [vmem:[%s494 + $0x1e] sm:$0x1] %v2262
        %2276 = vst [vmem:[%s494 + $0x26] sm:$0x1] %v2245
        %2277 = vst [vmem:[%s494 + $0x2e] sm:$0x1] %v2259
        %2278 = vst [vmem:[%s494 + $0x36] sm:$0x1] %v2261
        %2279 = vst [vmem:[%s494 + $0x3e] sm:$0x1] %v2263
        %v2280 = vpack.c.bf16 %v2211, %v2211
        %2281 = vmatprep.subr.bf16.mxu0 %v903
        %2282 = vmatpush1.bf16.msra.mxu0 %v902
        %2283 = vmatprep.subr.bf16.mxu0 %v907
        %2284 = vmatpush1.bf16.msra.mxu0 %v906
        %2285 = vmatprep.subr.bf16.mxu0 %v911
        %2286 = vmatpush1.bf16.msra.mxu0 %v910
        %2287 = vmatprep.subr.bf16.mxu0 %v915
        %2288 = vmatpush1.bf16.msra.mxu0 %v914
        %2289 = vmatprep.subr.bf16.mxu0 %v919
        %2290 = vmatpush1.bf16.msra.mxu0 %v918
        %2291 = vmatprep.subr.bf16.mxu0 %v923
        %2292 = vmatpush1.bf16.msra.mxu0 %v922
        %2293 = vmatprep.subr.bf16.mxu0 %v927
        %2294 = vmatpush1.bf16.msra.mxu0 %v926
        %2295 = vmatprep.subr.bf16.mxu0 %v931
        %2296 = vmatpush1.bf16.msra.mxu0 %v930
        %2297 = vmatprep.subr.bf16.mxu0 0
        %2298 = vmatpush1.bf16.msra.mxu0 0
        %2299 = vmatprep.subr.bf16.mxu0 0
        %2300 = vmatpush1.bf16.msra.mxu0 0
        %2301 = vmatprep.subr.bf16.mxu0 0
        %2302 = vmatpush1.bf16.msra.mxu0 0
        %2303 = vmatprep.subr.bf16.mxu0 0
        %2304 = vmatpush1.bf16.msra.mxu0 0
        %2305 = vmatprep.subr.bf16.mxu0 0
        %2306 = vmatpush1.bf16.msra.mxu0 0
        %2307 = vmatprep.subr.bf16.mxu0 0
        %2308 = vmatpush1.bf16.msra.mxu0 0
        %2309 = vmatprep.subr.bf16.mxu0 0
        %2310 = vmatpush1.bf16.msra.mxu0 0
        %2311 = vmatprep.subr.bf16.mxu0 0
        %2312 = vmatpush1.bf16.msra.mxu0 0
        %2313 = vmatprep.mubr.bf16.mxu0 0
        %2314 = vmatmul.mubr.bf16.gmra.mrb[0].mxu0 %v2280
        %v2315 = vpop.f32.mrb[0].mxu0
        %v2316 = vadd.f32 0.0, %v2315
        %v2317 = vpop.f32.mrb[0].mxu0
        %v2318 = vadd.f32 0.0, %v2317
        %v2319 = vpop.f32.mrb[0].mxu0
        %v2320 = vpop.f32.mrb[0].mxu0
        %2321 = vdwg.mxu0
        %2322 = vmatprep.subr.bf16.mxu0 %v905
        %2323 = vmatpush1.bf16.msra.mxu0 %v904
        %2324 = vmatprep.subr.bf16.mxu0 %v909
        %2325 = vmatpush1.bf16.msra.mxu0 %v908
        %2326 = vmatprep.subr.bf16.mxu0 %v913
        %2327 = vmatpush1.bf16.msra.mxu0 %v912
        %2328 = vmatprep.subr.bf16.mxu0 %v917
        %2329 = vmatpush1.bf16.msra.mxu0 %v916
        %2330 = vmatprep.subr.bf16.mxu0 %v921
        %2331 = vmatpush1.bf16.msra.mxu0 %v920
        %2332 = vmatprep.subr.bf16.mxu0 %v925
        %2333 = vmatpush1.bf16.msra.mxu0 %v924
        %2334 = vmatprep.subr.bf16.mxu0 %v929
        %2335 = vmatpush1.bf16.msra.mxu0 %v928
        %2336 = vmatprep.subr.bf16.mxu0 %v933
        %2337 = vmatpush1.bf16.msra.mxu0 %v932
        %2338 = vmatprep.subr.bf16.mxu0 0
        %2339 = vmatpush1.bf16.msra.mxu0 0
        %2340 = vmatprep.subr.bf16.mxu0 0
        %2341 = vmatpush1.bf16.msra.mxu0 0
        %2342 = vmatprep.subr.bf16.mxu0 0
        %2343 = vmatpush1.bf16.msra.mxu0 0
        %2344 = vmatprep.subr.bf16.mxu0 0
        %2345 = vmatpush1.bf16.msra.mxu0 0
        %2346 = vmatprep.subr.bf16.mxu0 0
        %2347 = vmatpush1.bf16.msra.mxu0 0
        %2348 = vmatprep.subr.bf16.mxu0 0
        %2349 = vmatpush1.bf16.msra.mxu0 0
        %2350 = vmatprep.subr.bf16.mxu0 0
        %2351 = vmatpush1.bf16.msra.mxu0 0
        %2352 = vmatprep.subr.bf16.mxu0 0
        %2353 = vmatpush1.bf16.msra.mxu0 0
        %2354 = vmatprep.mubr.bf16.mxu0 0
        %2355 = vmatmul.mubr.bf16.gmra.mrb[0].mxu0 %v2280
        %v2356 = vpop.f32.mrb[0].mxu0
        %v2357 = vadd.f32 0.0, %v2356
        %v2358 = vpop.f32.mrb[0].mxu0
        %v2359 = vadd.f32 0.0, %v2358
        %v2360 = vpop.f32.mrb[0].mxu0
        %v2361 = vpop.f32.mrb[0].mxu0
        %2362 = vdwg.mxu0
        %v2363 = vadd.f32 %v692, %v2316
        %v2364 = vadd.f32 %v694, %v2318
        %v2365 = vadd.f32 %v765, %v2357
        %v2366 = vadd.f32 %v767, %v2359
        %v2367 = vxor.u32 %v2363, 2147483648
        %v2368 = vmul.f32 %v2367, 1.442695
        %v2369 = vpow.pop %v2368
        %v2370 = vadd.f32 %v2369, 1.0
        %v2371 = vrcp.pop %v2370
        %v2372 = vmul.f32 1.0, %v2371
        %v2373 = vxor.u32 %v2364, 2147483648
        %v2374 = vmul.f32 %v2373, 1.442695
        %v2375 = vpow.pop %v2374
        %v2376 = vadd.f32 %v2375, 1.0
        %v2377 = vrcp.pop %v2376
        %v2378 = vmul.f32 1.0, %v2377
        %v2379 = vtanh.pop %v2365
        %v2380 = vxor.u32 %v2366, 2147483648
        %v2381 = vmul.f32 %v2380, 1.442695
        %v2382 = vpow.pop %v2381
        %v2383 = vadd.f32 %v2382, 1.0
        %v2384 = vrcp.pop %v2383
        %v2385 = vmul.f32 1.0, %v2384
        %v2386 = vmul.f32 %v2378, %v2212
        %v2387 = vmul.f32 %v2372, %v2379
        %v2388 = vadd.f32 %v2386, %v2387
        %v2389 = vtanh.pop %v2388
        %v2390 = vmul.f32 %v2385, %v2389
        %s2391 = sadd.s32 %s802, 7
        %v2392 = vstv %s2391
        %vm2393 = vcmp.lt.s32.totalorder %v2392, %v801
        %v2394 = vsel %vm2393, 1, 0
        %2395 = vset.pattern.permute.xlu0 0
        %2396 = vperm.xlu0 %2395, %v2394
        %v2397 = vpop.permute.xlu0 %2396
        %vm2398 = vcmp.eq.s32.totalorder %v2397, 1
        %v2399 = vsel %vm2398, %v2390, %v2211
        %v2400 = vsel %vm2398, %v2388, %v2212
        %v2401 = vsel %vm2398, %v2390, 0.0
        %v2403 = vcombine.high %v2401, %v2401
        %v2405 = vunpack.c.l.s4 1966171168
        %v2406 = vunpack.c.0.s8 %v2405
        %v2407 = vlaneseq
        %v2408 = vshrl.u32 %v2407, 7
        %v2409 = vsub.s32 %v2406, %v2408
        %v2410 = vrot.slane %v2401, %v2409
        %v2412 = vunpack.c.l.s4 1966171168
        %v2413 = vunpack.c.0.s8 %v2412
        %v2414 = vlaneseq
        %v2415 = vshrl.u32 %v2414, 7
        %v2416 = vsub.s32 %v2413, %v2415
        %v2417 = vrot.slane %v2403, %v2416
        %v2418 = vcombine.high %v2410, %v2410
        %v2419 = vcombine.high %v2417, %v2417
        %v2421 = vunpack.c.l.s4 1966171168
        %v2422 = vunpack.c.0.s8 %v2421
        %v2423 = vlaneseq
        %v2424 = vshrl.u32 %v2423, 7
        %v2425 = vsub.s32 %v2422, %v2424
        %v2426 = vrot.slane %v2410, %v2425
        %v2428 = vunpack.c.l.s4 1966171168
        %v2429 = vunpack.c.0.s8 %v2428
        %v2430 = vlaneseq
        %v2431 = vshrl.u32 %v2430, 7
        %v2432 = vsub.s32 %v2429, %v2431
        %v2433 = vrot.slane %v2417, %v2432
        %v2435 = vunpack.c.l.s4 1966171168
        %v2436 = vunpack.c.0.s8 %v2435
        %v2437 = vlaneseq
        %v2438 = vshrl.u32 %v2437, 7
        %v2439 = vsub.s32 %v2436, %v2438
        %v2440 = vrot.slane %v2418, %v2439
        %v2442 = vunpack.c.l.s4 1966171168
        %v2443 = vunpack.c.0.s8 %v2442
        %v2444 = vlaneseq
        %v2445 = vshrl.u32 %v2444, 7
        %v2446 = vsub.s32 %v2443, %v2445
        %v2447 = vrot.slane %v2419, %v2446
        %v2448 = vcombine.high %v2426, %v2426
        %v2449 = vcombine.high %v2433, %v2433
        %v2450 = vcombine.high %v2440, %v2440
        %v2451 = vcombine.high %v2447, %v2447
        %2460 = vst [vmem:[%s494 + $0x7] sm:$0x1] %v2426
        %2461 = vst [vmem:[%s494 + $0xf] sm:$0x1] %v2440
        %2462 = vst [vmem:[%s494 + $0x17] sm:$0x1] %v2448
        %2463 = vst [vmem:[%s494 + $0x1f] sm:$0x1] %v2450
        %2464 = vst [vmem:[%s494 + $0x27] sm:$0x1] %v2433
        %2465 = vst [vmem:[%s494 + $0x2f] sm:$0x1] %v2447
        %2466 = vst [vmem:[%s494 + $0x37] sm:$0x1] %v2449
        %2467 = vst [vmem:[%s494 + $0x3f] sm:$0x1] %v2451
        %2468 = vst [vmem:[#allocation2] sm:$0xff] %v2399
        %2469 = vst [vmem:[#allocation3] sm:$0xff] %v2400
        %v2470 = vpack.c.bf16 %v2399, %v2399
        %v2471 = vpack.c.bf16 %v2400, %v2400
        %v2472 = vld [vmem:[#allocation10] sm:$0xf]
        %v2473 = vld [vmem:[#allocation10 + $0x4] sm:$0xf]
        %v2474 = vld [vmem:[#allocation10 + $0x8] sm:$0xf]
        %v2475 = vld [vmem:[#allocation10 + $0xc] sm:$0xf]
        %v2476 = vld [vmem:[#allocation10 + $0x10] sm:$0xf]
        %v2477 = vld [vmem:[#allocation10 + $0x14] sm:$0xf]
        %v2478 = vld [vmem:[#allocation10 + $0x18] sm:$0xf]
        %v2479 = vld [vmem:[#allocation10 + $0x1c] sm:$0xf]
        %v2480 = vld [vmem:[#allocation10 + $0x20] sm:$0xf]
        %v2481 = vld [vmem:[#allocation10 + $0x24] sm:$0xf]
        %v2482 = vld [vmem:[#allocation10 + $0x28] sm:$0xf]
        %v2483 = vld [vmem:[#allocation10 + $0x2c] sm:$0xf]
        %v2484 = vld [vmem:[#allocation10 + $0x30] sm:$0xf]
        %v2485 = vld [vmem:[#allocation10 + $0x34] sm:$0xf]
        %v2486 = vld [vmem:[#allocation10 + $0x38] sm:$0xf]
        %v2487 = vld [vmem:[#allocation10 + $0x3c] sm:$0xf]
        %v2488 = vld [vmem:[%s6] sm:$0x1]
        %v2490 = vlaneseq
        %v2491 = vshrl.u32 %v2490, 7
        %v2492 = vsub.s32 0, %v2491
        %v2493 = vrot.slane %v2488, %v2492
        %v2511 = vunpack.c.l.b16 %v2472
        %v2512 = vunpack.c.l.b16 %v2473
        %v2513 = vunpack.c.l.b16 %v2474
        %v2514 = vunpack.c.l.b16 %v2475
        %v2515 = vunpack.c.l.b16 %v2476
        %v2516 = vunpack.c.l.b16 %v2477
        %v2517 = vunpack.c.l.b16 %v2478
        %v2518 = vunpack.c.l.b16 %v2479
        %v2519 = vunpack.c.l.b16 %v2480
        %v2520 = vunpack.c.l.b16 %v2481
        %v2521 = vunpack.c.l.b16 %v2482
        %v2522 = vunpack.c.l.b16 %v2483
        %v2523 = vunpack.c.l.b16 %v2484
        %v2524 = vunpack.c.l.b16 %v2485
        %v2525 = vunpack.c.l.b16 %v2486
        %v2526 = vunpack.c.l.b16 %v2487
        %v2527 = vpack.c.b16 %v2512, %v2511
        %v2528 = vpack.c.b16 %v2514, %v2513
        %v2529 = vpack.c.b16 %v2516, %v2515
        %v2530 = vpack.c.b16 %v2518, %v2517
        %v2531 = vpack.c.b16 %v2520, %v2519
        %v2532 = vpack.c.b16 %v2522, %v2521
        %v2533 = vpack.c.b16 %v2524, %v2523
        %v2534 = vpack.c.b16 %v2526, %v2525
        %2543 = vmatprep.subr.bf16.mxu0 0
        %2544 = vmatpush1.bf16.msra.mxu0 %v2527
        %2545 = vmatprep.subr.bf16.mxu0 0
        %2546 = vmatpush1.bf16.msra.mxu0 %v2528
        %2547 = vmatprep.subr.bf16.mxu0 0
        %2548 = vmatpush1.bf16.msra.mxu0 %v2529
        %2549 = vmatprep.subr.bf16.mxu0 0
        %2550 = vmatpush1.bf16.msra.mxu0 %v2530
        %2551 = vmatprep.subr.bf16.mxu0 0
        %2552 = vmatpush1.bf16.msra.mxu0 %v2531
        %2553 = vmatprep.subr.bf16.mxu0 0
        %2554 = vmatpush1.bf16.msra.mxu0 %v2532
        %2555 = vmatprep.subr.bf16.mxu0 0
        %2556 = vmatpush1.bf16.msra.mxu0 %v2533
        %2557 = vmatprep.subr.bf16.mxu0 0
        %2558 = vmatpush1.bf16.msra.mxu0 %v2534
        %2559 = vmatprep.subr.bf16.mxu0 0
        %2560 = vmatpush1.bf16.msra.mxu0 0
        %2561 = vmatprep.subr.bf16.mxu0 0
        %2562 = vmatpush1.bf16.msra.mxu0 0
        %2563 = vmatprep.subr.bf16.mxu0 0
        %2564 = vmatpush1.bf16.msra.mxu0 0
        %2565 = vmatprep.subr.bf16.mxu0 0
        %2566 = vmatpush1.bf16.msra.mxu0 0
        %2567 = vmatprep.subr.bf16.mxu0 0
        %2568 = vmatpush1.bf16.msra.mxu0 0
        %2569 = vmatprep.subr.bf16.mxu0 0
        %2570 = vmatpush1.bf16.msra.mxu0 0
        %2571 = vmatprep.subr.bf16.mxu0 0
        %2572 = vmatpush1.bf16.msra.mxu0 0
        %2573 = vmatprep.subr.bf16.mxu0 0
        %2574 = vmatpush1.bf16.msra.mxu0 0
        %2575 = vmatprep.mubr.bf16.mxu0 0
        %2576 = vmatmul.mubr.bf16.gmra.mrb[0].mxu0 %v2470
        %v2577 = vpop.f32.mrb[0].mxu0
        %v2578 = vadd.f32 %v2493, %v2577
        %v2579 = vpop.f32.mrb[0].mxu0
        %v2580 = vpop.f32.mrb[0].mxu0
        %v2581 = vpop.f32.mrb[0].mxu0
        %2582 = vdwg.mxu0
        %v2583 = vtanh.pop %v2578
        %2584 = vst [vmem:[#allocation14] sm:$0xff] %v2583
        %v2585 = vld [vmem:[#allocation12] sm:$0xf]
        %v2586 = vld [vmem:[#allocation12 + $0x4] sm:$0xf]
        %v2587 = vld [vmem:[#allocation12 + $0x8] sm:$0xf]
        %v2588 = vld [vmem:[#allocation12 + $0xc] sm:$0xf]
        %v2589 = vld [vmem:[#allocation12 + $0x10] sm:$0xf]
        %v2590 = vld [vmem:[#allocation12 + $0x14] sm:$0xf]
        %v2591 = vld [vmem:[#allocation12 + $0x18] sm:$0xf]
        %v2592 = vld [vmem:[#allocation12 + $0x1c] sm:$0xf]
        %v2593 = vld [vmem:[#allocation12 + $0x20] sm:$0xf]
        %v2594 = vld [vmem:[#allocation12 + $0x24] sm:$0xf]
        %v2595 = vld [vmem:[#allocation12 + $0x28] sm:$0xf]
        %v2596 = vld [vmem:[#allocation12 + $0x2c] sm:$0xf]
        %v2597 = vld [vmem:[#allocation12 + $0x30] sm:$0xf]
        %v2598 = vld [vmem:[#allocation12 + $0x34] sm:$0xf]
        %v2599 = vld [vmem:[#allocation12 + $0x38] sm:$0xf]
        %v2600 = vld [vmem:[#allocation12 + $0x3c] sm:$0xf]
        %v2601 = vld [vmem:[%s8] sm:$0x1]
        %v2603 = vlaneseq
        %v2604 = vshrl.u32 %v2603, 7
        %v2605 = vsub.s32 0, %v2604
        %v2606 = vrot.slane %v2601, %v2605
        %v2624 = vunpack.c.l.b16 %v2585
        %v2625 = vunpack.c.l.b16 %v2586
        %v2626 = vunpack.c.l.b16 %v2587
        %v2627 = vunpack.c.l.b16 %v2588
        %v2628 = vunpack.c.l.b16 %v2589
        %v2629 = vunpack.c.l.b16 %v2590
        %v2630 = vunpack.c.l.b16 %v2591
        %v2631 = vunpack.c.l.b16 %v2592
        %v2632 = vunpack.c.l.b16 %v2593
        %v2633 = vunpack.c.l.b16 %v2594
        %v2634 = vunpack.c.l.b16 %v2595
        %v2635 = vunpack.c.l.b16 %v2596
        %v2636 = vunpack.c.l.b16 %v2597
        %v2637 = vunpack.c.l.b16 %v2598
        %v2638 = vunpack.c.l.b16 %v2599
        %v2639 = vunpack.c.l.b16 %v2600
        %v2640 = vpack.c.b16 %v2625, %v2624
        %v2641 = vpack.c.b16 %v2627, %v2626
        %v2642 = vpack.c.b16 %v2629, %v2628
        %v2643 = vpack.c.b16 %v2631, %v2630
        %v2644 = vpack.c.b16 %v2633, %v2632
        %v2645 = vpack.c.b16 %v2635, %v2634
        %v2646 = vpack.c.b16 %v2637, %v2636
        %v2647 = vpack.c.b16 %v2639, %v2638
        %2656 = vmatprep.subr.bf16.mxu0 0
        %2657 = vmatpush1.bf16.msra.mxu0 %v2640
        %2658 = vmatprep.subr.bf16.mxu0 0
        %2659 = vmatpush1.bf16.msra.mxu0 %v2641
        %2660 = vmatprep.subr.bf16.mxu0 0
        %2661 = vmatpush1.bf16.msra.mxu0 %v2642
        %2662 = vmatprep.subr.bf16.mxu0 0
        %2663 = vmatpush1.bf16.msra.mxu0 %v2643
        %2664 = vmatprep.subr.bf16.mxu0 0
        %2665 = vmatpush1.bf16.msra.mxu0 %v2644
        %2666 = vmatprep.subr.bf16.mxu0 0
        %2667 = vmatpush1.bf16.msra.mxu0 %v2645
        %2668 = vmatprep.subr.bf16.mxu0 0
        %2669 = vmatpush1.bf16.msra.mxu0 %v2646
        %2670 = vmatprep.subr.bf16.mxu0 0
        %2671 = vmatpush1.bf16.msra.mxu0 %v2647
        %2672 = vmatprep.subr.bf16.mxu0 0
        %2673 = vmatpush1.bf16.msra.mxu0 0
        %2674 = vmatprep.subr.bf16.mxu0 0
        %2675 = vmatpush1.bf16.msra.mxu0 0
        %2676 = vmatprep.subr.bf16.mxu0 0
        %2677 = vmatpush1.bf16.msra.mxu0 0
        %2678 = vmatprep.subr.bf16.mxu0 0
        %2679 = vmatpush1.bf16.msra.mxu0 0
        %2680 = vmatprep.subr.bf16.mxu0 0
        %2681 = vmatpush1.bf16.msra.mxu0 0
        %2682 = vmatprep.subr.bf16.mxu0 0
        %2683 = vmatpush1.bf16.msra.mxu0 0
        %2684 = vmatprep.subr.bf16.mxu0 0
        %2685 = vmatpush1.bf16.msra.mxu0 0
        %2686 = vmatprep.subr.bf16.mxu0 0
        %2687 = vmatpush1.bf16.msra.mxu0 0
        %2688 = vmatprep.mubr.bf16.mxu0 0
        %2689 = vmatmul.mubr.bf16.gmra.mrb[0].mxu0 %v2471
        %v2690 = vpop.f32.mrb[0].mxu0
        %v2691 = vadd.f32 %v2606, %v2690
        %v2692 = vpop.f32.mrb[0].mxu0
        %v2693 = vpop.f32.mrb[0].mxu0
        %v2694 = vpop.f32.mrb[0].mxu0
        %2695 = vdwg.mxu0
        %2696 = vst [vmem:[#allocation16] sm:$0xff] %v2691
        %s2697 = sand.u32 %s255, 1
        %s2698 = scalar_lea.sflag [#allocation6], %s2697
        %s2699 = sand.u32 %s255, 1
        %s2700 = smul.addr %s2699, 64
        %s2701 = scalar_lea.vmem [#allocation13], %s2700
        // Predicated region
        $region81: #{tpu_custom_call.1} parent=55 // pred_check
          %p2702 = pneg %p265
        $region82: #{tpu_custom_call.1} parent=55 // pred_check_branch
          %2704 = sbr.rel (%p2702) target = $region84
        $region83: #{tpu_custom_call.1} parent=55 // pred_region
          %s2705 = smul.u32 8, %s36
          %s2707 = ssub.s32 1024, 1024
          %2708 = vsyncadd %s2698, %s2707
          %s2709 = smul.addr %s2705, 3
          %s2710 = sadd.s32 %s37, %s2709
          %s2711 = smul.addr %s2710, 128
          %s2712 = scalar_lea.hbm %s9, %s2711
          %s2713 = sshll.u32 %s2701, 4
          %s2714 = int_to_ptr.vmem [resolvable:$true] %s2713
          %2719 = dma.vmem_to_hbm [thread:$0]  %s2714, 1024, %s2712, %s2698, 128, 384, 8
        $region84: #{tpu_custom_call.1} parent=55 // pred_fallthru
          _
        // Predicated region
        $region85: #{tpu_custom_call.1} parent=55 // pred_check
          %p2720 = pneg %p291
        $region86: #{tpu_custom_call.1} parent=55 // pred_check_branch
          %2722 = sbr.rel (%p2720) target = $region88
        $region87: #{tpu_custom_call.1} parent=55 // pred_region
          %s2724 = ssub.s32 128, 128
          %2725 = vsyncadd [#allocation15], %s2724
          %s2726 = smul.addr %s36, 128
          %s2727 = scalar_lea.hbm %s10, %s2726
          %s2729 = sshll.u32 [#allocation14], 4
          %s2730 = int_to_ptr.vmem [resolvable:$true] %s2729
          %2732 = dma.vmem_to_hbm [thread:$0]  %s2730, 128, %s2727, [#allocation15]
        $region88: #{tpu_custom_call.1} parent=55 // pred_fallthru
          _
        // Predicated region
        $region89: #{tpu_custom_call.1} parent=55 // pred_check
          %p2733 = pneg %p317
        $region90: #{tpu_custom_call.1} parent=55 // pred_check_branch
          %2735 = sbr.rel (%p2733) target = $region92
        $region91: #{tpu_custom_call.1} parent=55 // pred_region
          %s2737 = ssub.s32 128, 128
          %2738 = vsyncadd [#allocation15], %s2737
          %s2739 = smul.addr %s36, 128
          %s2740 = scalar_lea.hbm %s11, %s2739
          %s2742 = sshll.u32 [#allocation16], 4
          %s2743 = int_to_ptr.vmem [resolvable:$true] %s2742
          %2745 = dma.vmem_to_hbm [thread:$0]  %s2743, 128, %s2740, [#allocation15]
        $region92: #{tpu_custom_call.1} parent=55 // pred_fallthru
          _
        // Predicated region
        $region93: #{tpu_custom_call.1} parent=55 // pred_check
          %p2746 = pneg %p291
        $region94: #{tpu_custom_call.1} parent=55 // pred_check_branch
          %2748 = sbr.rel (%p2746) target = $region96
        $region95: #{tpu_custom_call.1} parent=55 // pred_region
          %2749 = dma.done [#allocation15], 128
        $region96: #{tpu_custom_call.1} parent=55 // pred_fallthru
          _
        // Predicated region
        $region97: #{tpu_custom_call.1} parent=55 // pred_check
          %p2750 = pneg %p317
        $region98: #{tpu_custom_call.1} parent=55 // pred_check_branch
          %2752 = sbr.rel (%p2750) target = $region100
        $region99: #{tpu_custom_call.1} parent=55 // pred_region
          %2753 = dma.done [#allocation15], 128
        $region100: #{tpu_custom_call.1} parent=55 // pred_fallthru
          _
      $region56: #{tpu_custom_call.1} parent=5 // pred_fallthru
        _
      %p2754 = scmp.le.s32.totalorder 2, %s27
      // Predicated region
      $region101: #{tpu_custom_call.1} parent=5 // pred_check
        %p2755 = pneg %p2754
      $region102: #{tpu_custom_call.1} parent=5 // pred_check_branch
        %2757 = sbr.rel (%p2755) target = $region104
      $region103: #{tpu_custom_call.1} parent=5 // pred_region
        %s2758 = ssub.s32 %s27, 2
        // Predicated region
        $region105: #{tpu_custom_call.1} parent=103 // pred_check
          %p2759 = pneg %p271
        $region106: #{tpu_custom_call.1} parent=103 // pred_check_branch
          %2761 = sbr.rel (%p2759) target = $region108
        $region107: #{tpu_custom_call.1} parent=103 // pred_region
          %s2762 = sand.u32 %s256, 1
          %s2763 = scalar_lea.sflag [#allocation6], %s2762
          %s2764 = sand.u32 %s256, 1
          %s2765 = smul.addr %s2764, 64
          %s2766 = scalar_lea.vmem [#allocation13], %s2765
          %2767 = dma.done %s2763, 1024
        $region108: #{tpu_custom_call.1} parent=103 // pred_fallthru
          _
      $region104: #{tpu_custom_call.1} parent=5 // pred_fallthru
        _
    $region6: #{tpu_custom_call.1} parent=1 // loop_footer
      %s31 = sadd.s32 1, %s27
    $region7: #{tpu_custom_call.1} parent=1 // loop_footer_branch
      %26 = sbr.rel target = $region3
    $region8: #{tpu_custom_call.1} parent=1 // loop_exit
      _
    %2768 = vsyncpa [#allocation5], 1
    %s2769 = scalar_lea.sflag [#allocation5], 1
    %2770 = vsyncpa %s2769, 1
    %2771 = vsyncpa [#allocation8], 1
    %2772 = vsyncpa [#allocation11], 1
    %2773 = vsyncpa [#allocation6], 1
    %s2774 = scalar_lea.sflag [#allocation6], 1
    %2775 = vsyncpa %s2774, 1
    %2776 = vsyncpa [#allocation15], 1

</llo_original>
